<compile_context>
chip_gen: v7x
topology: tpu7x:2x2x1
jax: 0.10.0
libtpu: 0.0.40
codegen_flags: <defaults>
</compile_context>

<pallas_src>
import numpy as np
import jax
import jax.numpy as jnp
from jax import lax
from jax.experimental import pallas as pl
from jax.experimental.pallas import tpu as pltpu


DEC_PAD = 128  # lane-dense width for the decoder output (true output dim = 3)


def _silu(x):
    # silu(x) = x*sigmoid(x) = 0.5*x*(1 + tanh(x/2)) -> single EUP op on the chain.
    return 0.5 * x * (1.0 + jnp.tanh(0.5 * x))


# ---------------------------------------------------------------------------
# Fused kernel (one graph per grid step): embedding + n_layers GCL + decoder,
# h resident in VMEM/vregs for the whole forward.
# ---------------------------------------------------------------------------
def _gnn_fused_kernel(
    row_e1_ref, col_e1_ref, row_1e_ref,   # (E,1),(E,1),(1,E) int32 edge endpoints
    nodes_ref, ea_ref,                    # (N,D_in), (E,1)       per-batch blocks
    emb_w_ref, emb_b_ref,                 # embedding Linear
    w1st_ref, w1e_ref, b1_ref,            # edge_mlp L1: (L,H,2H),(L,1,H),(L,1,H)
    w2_ref, b2_ref,                       # edge_mlp L2: (L,H,H),(L,1,H)
    wn1_ref, bn1_ref,                     # node_mlp L1: (L,2H,H),(L,1,H)
    wn2_ref, bn2_ref,                     # node_mlp L2: (L,H,H),(L,1,H)
    dec_w1_ref, dec_b1_ref,               # decoder L1
    dec_w2_ref, dec_b2_ref,               # decoder L2 (lane-padded to DEC_PAD)
    o_ref,                                # (N, DEC_PAD)
):
    n_edges = row_e1_ref.shape[0]
    n_nodes = nodes_ref.shape[0]
    n_layers = w1st_ref.shape[0]
    hidden = emb_w_ref.shape[1]

    # Loop-invariant one-hot gather/scatter masks built in-kernel (iota + compare).
    e_iota = lax.broadcasted_iota(jnp.int32, (n_edges, n_nodes), 1)
    rowoh = (e_iota == row_e1_ref[...]).astype(jnp.float32)            # (E, N)
    coloh = (e_iota == col_e1_ref[...]).astype(jnp.float32)            # (E, N)
    n_iota = lax.broadcasted_iota(jnp.int32, (n_nodes, n_edges), 0)
    rowoh_t = (n_iota == row_1e_ref[...]).astype(jnp.float32)          # (N, E)  scatter, pre-transposed

    ea = ea_ref[...]                                                    # (E, 1)
    # Combined gather + edge-attr matrix, built ONCE: G = [rowoh | coloh | ea]  (E, 2N+1)
    g = jnp.concatenate([rowoh, coloh, ea], axis=1)

    # embedding
    h = (
        jnp.dot(nodes_ref[...], emb_w_ref[...], preferred_element_type=jnp.float32)
        + emb_b_ref[...]
    )                                                                    # (N, H)

    # GCL layers (recurrent=False, attention=False). Static unroll.
    for l in range(n_layers):
        # edge_mlp L1 fused with the gathers:
        #   cat[h[row], h[col], ea] @ [w1s; w1t; w1e]  ==  G @ [ h@w1s ; h@w1t ; w1e ]
        hw = jnp.dot(h, w1st_ref[l], preferred_element_type=jnp.float32)         # (N, 2H)
        m_stack = jnp.concatenate(
            [hw[:, :hidden], hw[:, hidden:], w1e_ref[l]], axis=0)                # (2N+1, H)
        pre1 = jnp.dot(g, m_stack, preferred_element_type=jnp.float32) + b1_ref[l]
        m = _silu(pre1)
        edge_feat = _silu(
            jnp.dot(m, w2_ref[l], preferred_element_type=jnp.float32) + b2_ref[l]
        )                                                                          # (E, H)

        # unsorted_segment_sum(edge_feat, row, N) with the pre-transposed one-hot.
        agg = jnp.dot(rowoh_t, edge_feat, preferred_element_type=jnp.float32)     # (N, H)

        # node_mlp: single (N,2H)@(2H,H) matmul on cat[h, agg].
        nh = _silu(
            jnp.dot(jnp.concatenate([h, agg], axis=1), wn1_ref[l],
                    preferred_element_type=jnp.float32)
            + bn1_ref[l]
        )
        h = jnp.dot(nh, wn2_ref[l], preferred_element_type=jnp.float32) + bn2_ref[l]

    # decoder; final layer lane-padded -> one lane-dense full-block store.
    d = _silu(
        jnp.dot(h, dec_w1_ref[...], preferred_element_type=jnp.float32) + dec_b1_ref[...]
    )
    o_ref[...] = (
        jnp.dot(d, dec_w2_ref[...], preferred_element_type=jnp.float32) + dec_b2_ref[...]
    )


# ---------------------------------------------------------------------------
# Wrapper: single pallas_call, batch grid axis (parallel), whole-array blocks.
# ---------------------------------------------------------------------------
def gnn_forward_pallas(params, nodes, edges, edge_attr):
    single = nodes.ndim == 2
    if single:
        nodes = nodes[None]
        edge_attr = edge_attr[None]
    B, N, Din = nodes.shape
    E = edge_attr.shape[1]

    row = edges[0].astype(jnp.int32)
    col = edges[1].astype(jnp.int32)
    row_e1 = row.reshape(E, 1)
    col_e1 = col.reshape(E, 1)
    row_1e = row.reshape(1, E)

    def bspec(shape):
        # Shared (batch-invariant) array: constant block index -> DMA'd once, reused.
        nd = len(shape)
        return pl.BlockSpec(shape, lambda b, _nd=nd: (0,) * _nd)

    def dspec(inner_shape):
        # Per-batch block; leading batch dim squeezed out of the kernel Ref.
        nd = len(inner_shape)
        return pl.BlockSpec((None,) + inner_shape, lambda b, _nd=nd: (b,) + (0,) * _nd)

    shared = (
        params["emb_w"], params["emb_b"],
        params["w1st"], params["w1e"], params["b1"],
        params["w2"], params["b2"],
        params["wn1"], params["bn1"],
        params["wn2"], params["bn2"],
        params["dec_w1"], params["dec_b1"],
        params["dec_w2p"], params["dec_b2p"],
    )
    args = (row_e1, col_e1, row_1e, nodes, edge_attr) + shared
    in_specs = (
        [bspec(row_e1.shape), bspec(col_e1.shape), bspec(row_1e.shape),
         dspec((N, Din)), dspec((E, 1))]
        + [bspec(np.shape(w)) for w in shared]
    )
    out_shape = jax.ShapeDtypeStruct((B, N, DEC_PAD), jnp.float32)

    out = pl.pallas_call(
        _gnn_fused_kernel,
        grid=(B,),
        in_specs=in_specs,
        out_specs=dspec((N, DEC_PAD)),
        out_shape=out_shape,
        compiler_params=pltpu.CompilerParams(
            dimension_semantics=("parallel",),     # shards batch across TCs on v7x
            vmem_limit_bytes=32 * 1024 * 1024,     # tiny footprint; safe on v5e/v6e/v7x
        ),
    )(*args)

    out = out[:, :, :3]
    return out[0] if single else out


# ---------------------------------------------------------------------------
# Parameter init (deterministic, PyTorch nn.Linear-style uniform bounds).
# Per-layer GCL weights stacked along a leading layer axis; decoder L2 pre-padded.
# ---------------------------------------------------------------------------
def init_linear(key, fan_in, fan_out):
    k1, k2 = jax.random.split(key)
    bound = 1.0 / np.sqrt(fan_in)
    w = jax.random.uniform(k1, (fan_in, fan_out), jnp.float32, -bound, bound)
    b = jax.random.uniform(k2, (1, fan_out), jnp.float32, -bound, bound)
    return w, b


def init_gnn_params(key, input_dim, hidden, n_layers):
    keys = jax.random.split(key, 3 + n_layers)
    params = {}
    params["emb_w"], params["emb_b"] = init_linear(keys[0], input_dim, hidden)

    per = {k: [] for k in ("w1st", "w1e", "b1", "w2", "b2", "wn1", "bn1", "wn2", "bn2")}
    for i in range(n_layers):
        lk = jax.random.split(keys[1 + i], 4)
        # edge_mlp layer 1: in = 2*hidden + 1 (edges_in_nf=1)
        w1, b1 = init_linear(lk[0], 2 * hidden + 1, hidden)
        w2, b2 = init_linear(lk[1], hidden, hidden)
        # node_mlp layer 1: in = 2*hidden (h ++ agg)
        wn1, bn1 = init_linear(lk[2], 2 * hidden, hidden)
        wn2, bn2 = init_linear(lk[3], hidden, hidden)
        per["w1st"].append(jnp.concatenate([w1[:hidden], w1[hidden:2 * hidden]], axis=1))  # (H, 2H)
        per["w1e"].append(w1[2 * hidden:])                                                  # (1, H)
        per["b1"].append(b1)
        per["w2"].append(w2); per["b2"].append(b2)
        per["wn1"].append(wn1); per["bn1"].append(bn1)
        per["wn2"].append(wn2); per["bn2"].append(bn2)
    for k, v in per.items():
        params[k] = jnp.stack(v, axis=0)                                                    # (L, ...)

    params["dec_w1"], params["dec_b1"] = init_linear(keys[1 + n_layers], hidden, hidden)
    dec_w2, dec_b2 = init_linear(keys[2 + n_layers], hidden, 3)
    params["dec_w2"], params["dec_b2"] = dec_w2, dec_b2
    # Lane-pad the final decoder layer ONCE at init (not per forward call).
    params["dec_w2p"] = jnp.zeros((hidden, DEC_PAD), jnp.float32).at[:, :3].set(dec_w2)
    params["dec_b2p"] = jnp.zeros((1, DEC_PAD), jnp.float32).at[:, :3].set(dec_b2)
    return params


# ---------------------------------------------------------------------------
# Pure-JAX reference mirroring the PyTorch forward exactly (single graph).
# ---------------------------------------------------------------------------
def gnn_forward_reference(params, nodes, edges, edge_attr):
    def silu(x):
        return x * jax.nn.sigmoid(x)

    hidden = params["emb_w"].shape[1]
    row, col = edges[0], edges[1]
    n_nodes = nodes.shape[0]
    n_layers = params["w1st"].shape[0]

    h = nodes @ params["emb_w"] + params["emb_b"]
    for l in range(n_layers):
        src, tgt = h[row], h[col]
        w1s = params["w1st"][l][:, :hidden]
        w1t = params["w1st"][l][:, hidden:]
        w1 = jnp.concatenate([w1s, w1t, params["w1e"][l]], axis=0)        # (2H+1, H)
        edge_in = jnp.concatenate([src, tgt, edge_attr], axis=1)
        m = silu(edge_in @ w1 + params["b1"][l])
        ef = silu(m @ params["w2"][l] + params["b2"][l])
        agg = jax.ops.segment_sum(ef, row, num_segments=n_nodes)
        out = jnp.concatenate([h, agg], axis=1) @ params["wn1"][l] + params["bn1"][l]
        h = silu(out) @ params["wn2"][l] + params["bn2"][l]               # recurrent=False
    d = silu(h @ params["dec_w1"] + params["dec_b1"])
    return d @ params["dec_w2"] + params["dec_b2"]


# ---------------------------------------------------------------------------
if __name__ == "__main__":
    batch, n_nodes, input_dim, hidden, n_layers = 2, 8, 4, 32, 4

    key = jax.random.PRNGKey(0)
    kp, kn, ke = jax.random.split(key, 3)
    params = init_gnn_params(kp, input_dim, hidden, n_layers)

    # Fully connected directed graph without self-loops (n_body convention).
    rows, cols = [], []
    for i in range(n_nodes):
        for j in range(n_nodes):
            if i != j:
                rows.append(i)
                cols.append(j)
    edges = jnp.array([rows, cols], dtype=jnp.int32)                      # (2, E), E = 56
    n_edges = edges.shape[1]

    nodes = jax.random.normal(kn, (batch, n_nodes, input_dim), jnp.float32)
    edge_attr = jax.random.normal(ke, (batch, n_edges, 1), jnp.float32)

    out = gnn_forward_pallas(params, nodes, edges, edge_attr)
    out = jax.block_until_ready(out)
    assert out.shape == (batch, n_nodes, 3)

    for b in range(batch):
        ref = gnn_forward_reference(params, nodes[b], edges, edge_attr[b])
        assert np.allclose(np.asarray(out[b]), np.asarray(ref), rtol=1e-4, atol=1e-4), (
            f"mismatch in batch {b}")

    print("KERNEL_OK")
</pallas_src>

<mosaic_0001>
module attributes {stable_mosaic.version = 11 : i64} {
  func.func @_gnn_fused_kernel(%arg0: i32, %arg1: memref<56x1xi32, #tpu.memory_space<vmem>>, %arg2: memref<56x1xi32, #tpu.memory_space<vmem>>, %arg3: memref<1x56xi32, #tpu.memory_space<vmem>>, %arg4: memref<1x8x4xf32, #tpu.memory_space<vmem>>, %arg5: memref<1x56x1xf32, #tpu.memory_space<vmem>>, %arg6: memref<4x32xf32, #tpu.memory_space<vmem>>, %arg7: memref<1x32xf32, #tpu.memory_space<vmem>>, %arg8: memref<4x32x64xf32, #tpu.memory_space<vmem>>, %arg9: memref<4x1x32xf32, #tpu.memory_space<vmem>>, %arg10: memref<4x1x32xf32, #tpu.memory_space<vmem>>, %arg11: memref<4x32x32xf32, #tpu.memory_space<vmem>>, %arg12: memref<4x1x32xf32, #tpu.memory_space<vmem>>, %arg13: memref<4x64x32xf32, #tpu.memory_space<vmem>>, %arg14: memref<4x1x32xf32, #tpu.memory_space<vmem>>, %arg15: memref<4x32x32xf32, #tpu.memory_space<vmem>>, %arg16: memref<4x1x32xf32, #tpu.memory_space<vmem>>, %arg17: memref<32x32xf32, #tpu.memory_space<vmem>>, %arg18: memref<1x32xf32, #tpu.memory_space<vmem>>, %arg19: memref<32x128xf32, #tpu.memory_space<vmem>>, %arg20: memref<1x128xf32, #tpu.memory_space<vmem>>, %arg21: memref<1x8x128xf32, #tpu.memory_space<vmem>>) attributes {dimension_semantics = [#tpu.dimension_semantics<parallel>], iteration_bounds = array<i64: 2>, scalar_prefetch = 0 : i64, scratch_operands = 0 : i64, tpu.core_type = #tpu.core_type<tc>, window_params = [{pipeline_mode = #tpu.pipeline_mode<synchronous>, transform_indices = @transform_0, window_bounds = array<i64: 56, 1>}, {pipeline_mode = #tpu.pipeline_mode<synchronous>, transform_indices = @transform_1, window_bounds = array<i64: 56, 1>}, {pipeline_mode = #tpu.pipeline_mode<synchronous>, transform_indices = @transform_2, window_bounds = array<i64: 1, 56>}, {transform_indices = @transform_3, window_bounds = array<i64: 1, 8, 4>}, {transform_indices = @transform_4, window_bounds = array<i64: 1, 56, 1>}, {pipeline_mode = #tpu.pipeline_mode<synchronous>, transform_indices = @transform_5, window_bounds = array<i64: 4, 32>}, {pipeline_mode = #tpu.pipeline_mode<synchronous>, transform_indices = @transform_6, window_bounds = array<i64: 1, 32>}, {pipeline_mode = #tpu.pipeline_mode<synchronous>, transform_indices = @transform_7, window_bounds = array<i64: 4, 32, 64>}, {pipeline_mode = #tpu.pipeline_mode<synchronous>, transform_indices = @transform_8, window_bounds = array<i64: 4, 1, 32>}, {pipeline_mode = #tpu.pipeline_mode<synchronous>, transform_indices = @transform_9, window_bounds = array<i64: 4, 1, 32>}, {pipeline_mode = #tpu.pipeline_mode<synchronous>, transform_indices = @transform_10, window_bounds = array<i64: 4, 32, 32>}, {pipeline_mode = #tpu.pipeline_mode<synchronous>, transform_indices = @transform_11, window_bounds = array<i64: 4, 1, 32>}, {pipeline_mode = #tpu.pipeline_mode<synchronous>, transform_indices = @transform_12, window_bounds = array<i64: 4, 64, 32>}, {pipeline_mode = #tpu.pipeline_mode<synchronous>, transform_indices = @transform_13, window_bounds = array<i64: 4, 1, 32>}, {pipeline_mode = #tpu.pipeline_mode<synchronous>, transform_indices = @transform_14, window_bounds = array<i64: 4, 32, 32>}, {pipeline_mode = #tpu.pipeline_mode<synchronous>, transform_indices = @transform_15, window_bounds = array<i64: 4, 1, 32>}, {pipeline_mode = #tpu.pipeline_mode<synchronous>, transform_indices = @transform_16, window_bounds = array<i64: 32, 32>}, {pipeline_mode = #tpu.pipeline_mode<synchronous>, transform_indices = @transform_17, window_bounds = array<i64: 1, 32>}, {pipeline_mode = #tpu.pipeline_mode<synchronous>, transform_indices = @transform_18, window_bounds = array<i64: 32, 128>}, {pipeline_mode = #tpu.pipeline_mode<synchronous>, transform_indices = @transform_19, window_bounds = array<i64: 1, 128>}, {transform_indices = @transform_20, window_bounds = array<i64: 1, 8, 128>}]} {
    %0 = tpu.iota {dimensions = array<i32: 1>} : vector<56x8xi32>
    %c0 = arith.constant 0 : index
    %c0_0 = arith.constant 0 : index
    %1 = vector.load %arg1[%c0, %c0_0] : memref<56x1xi32, #tpu.memory_space<vmem>>, vector<56x1xi32>
    %2 = vector.broadcast %1 : vector<56x1xi32> to vector<56x8xi32>
    %3 = arith.cmpi eq, %0, %2 : vector<56x8xi32>
    %4 = arith.extui %3 : vector<56x8xi1> to vector<56x8xi32>
    %5 = arith.sitofp %4 : vector<56x8xi32> to vector<56x8xf32>
    %c0_1 = arith.constant 0 : index
    %c0_2 = arith.constant 0 : index
    %6 = vector.load %arg2[%c0_1, %c0_2] : memref<56x1xi32, #tpu.memory_space<vmem>>, vector<56x1xi32>
    %7 = vector.broadcast %6 : vector<56x1xi32> to vector<56x8xi32>
    %8 = arith.cmpi eq, %0, %7 : vector<56x8xi32>
    %9 = arith.extui %8 : vector<56x8xi1> to vector<56x8xi32>
    %10 = arith.sitofp %9 : vector<56x8xi32> to vector<56x8xf32>
    %11 = tpu.iota {dimensions = array<i32: 0>} : vector<8x56xi32>
    %c0_3 = arith.constant 0 : index
    %c0_4 = arith.constant 0 : index
    %12 = vector.load %arg3[%c0_3, %c0_4] : memref<1x56xi32, #tpu.memory_space<vmem>>, vector<1x56xi32>
    %13 = vector.broadcast %12 : vector<1x56xi32> to vector<8x56xi32>
    %14 = arith.cmpi eq, %11, %13 : vector<8x56xi32>
    %15 = arith.extui %14 : vector<8x56xi1> to vector<8x56xi32>
    %16 = arith.sitofp %15 : vector<8x56xi32> to vector<8x56xf32>
    %c0_5 = arith.constant 0 : index
    %c0_6 = arith.constant 0 : index
    %c0_7 = arith.constant 0 : index
    %17 = vector.load %arg5[%c0_5, %c0_6, %c0_7] : memref<1x56x1xf32, #tpu.memory_space<vmem>>, vector<1x56x1xf32>
    %18 = vector.shape_cast %17 : vector<1x56x1xf32> to vector<56x1xf32>
    %19 = tpu.concatenate %5, %10, %18 in 1 : vector<56x8xf32>, vector<56x8xf32>, vector<56x1xf32> -> vector<56x17xf32>
    %c0_8 = arith.constant 0 : index
    %c0_9 = arith.constant 0 : index
    %c0_10 = arith.constant 0 : index
    %20 = vector.load %arg4[%c0_8, %c0_9, %c0_10] : memref<1x8x4xf32, #tpu.memory_space<vmem>>, vector<1x8x4xf32>
    %21 = vector.shape_cast %20 : vector<1x8x4xf32> to vector<8x4xf32>
    %c0_11 = arith.constant 0 : index
    %c0_12 = arith.constant 0 : index
    %22 = vector.load %arg6[%c0_11, %c0_12] : memref<4x32xf32, #tpu.memory_space<vmem>>, vector<4x32xf32>
    %cst = arith.constant dense<0.000000e+00> : vector<8x32xf32>
    %23 = tpu.matmul %21, %22, %cst {dimension_numbers = #tpu.dot_dimension_numbers<[1], [0], [0], [1], [0, 0, 1, 1], [], []>} : vector<8x4xf32>, vector<4x32xf32>, vector<8x32xf32> -> vector<8x32xf32>
    %c0_13 = arith.constant 0 : index
    %c0_14 = arith.constant 0 : index
    %24 = vector.load %arg7[%c0_13, %c0_14] : memref<1x32xf32, #tpu.memory_space<vmem>>, vector<1x32xf32>
    %25 = vector.broadcast %24 : vector<1x32xf32> to vector<8x32xf32>
    %26 = arith.addf %23, %25 : vector<8x32xf32>
    %c0_15 = arith.constant 0 : index
    %c0_16 = arith.constant 0 : index
    %c0_17 = arith.constant 0 : index
    %27 = vector.load %arg8[%c0_15, %c0_16, %c0_17] : memref<4x32x64xf32, #tpu.memory_space<vmem>>, vector<1x32x64xf32>
    %28 = vector.shape_cast %27 : vector<1x32x64xf32> to vector<32x64xf32>
    %cst_18 = arith.constant dense<0.000000e+00> : vector<8x64xf32>
    %29 = tpu.matmul %26, %28, %cst_18 {dimension_numbers = #tpu.dot_dimension_numbers<[1], [0], [0], [1], [0, 0, 1, 1], [], []>} : vector<8x32xf32>, vector<32x64xf32>, vector<8x64xf32> -> vector<8x64xf32>
    %30 = vector.extract_strided_slice %29 {offsets = [0, 0], sizes = [8, 32], strides = [1, 1]} : vector<8x64xf32> to vector<8x32xf32>
    %31 = vector.extract_strided_slice %29 {offsets = [0, 32], sizes = [8, 32], strides = [1, 1]} : vector<8x64xf32> to vector<8x32xf32>
    %c0_19 = arith.constant 0 : index
    %c0_20 = arith.constant 0 : index
    %c0_21 = arith.constant 0 : index
    %32 = vector.load %arg9[%c0_19, %c0_20, %c0_21] : memref<4x1x32xf32, #tpu.memory_space<vmem>>, vector<1x1x32xf32>
    %33 = vector.shape_cast %32 : vector<1x1x32xf32> to vector<1x32xf32>
    %34 = tpu.concatenate %30, %31, %33 in 0 : vector<8x32xf32>, vector<8x32xf32>, vector<1x32xf32> -> vector<17x32xf32>
    %cst_22 = arith.constant dense<0.000000e+00> : vector<56x32xf32>
    %35 = tpu.matmul %19, %34, %cst_22 {dimension_numbers = #tpu.dot_dimension_numbers<[1], [0], [0], [1], [0, 0, 1, 1], [], []>} : vector<56x17xf32>, vector<17x32xf32>, vector<56x32xf32> -> vector<56x32xf32>
    %c0_23 = arith.constant 0 : index
    %c0_24 = arith.constant 0 : index
    %c0_25 = arith.constant 0 : index
    %36 = vector.load %arg10[%c0_23, %c0_24, %c0_25] : memref<4x1x32xf32, #tpu.memory_space<vmem>>, vector<1x1x32xf32>
    %37 = vector.shape_cast %36 : vector<1x1x32xf32> to vector<1x32xf32>
    %38 = vector.broadcast %37 : vector<1x32xf32> to vector<56x32xf32>
    %39 = arith.addf %35, %38 : vector<56x32xf32>
    %cst_26 = arith.constant 5.000000e-01 : f32
    %40 = vector.broadcast %cst_26 : f32 to vector<56x32xf32>
    %41 = arith.mulf %40, %39 : vector<56x32xf32>
    %cst_27 = arith.constant 5.000000e-01 : f32
    %42 = vector.broadcast %cst_27 : f32 to vector<56x32xf32>
    %43 = arith.mulf %42, %39 : vector<56x32xf32>
    %44 = math.tanh %43 : vector<56x32xf32>
    %cst_28 = arith.constant 1.000000e+00 : f32
    %45 = vector.broadcast %cst_28 : f32 to vector<56x32xf32>
    %46 = arith.addf %45, %44 : vector<56x32xf32>
    %47 = arith.mulf %41, %46 : vector<56x32xf32>
    %c0_29 = arith.constant 0 : index
    %c0_30 = arith.constant 0 : index
    %c0_31 = arith.constant 0 : index
    %48 = vector.load %arg11[%c0_29, %c0_30, %c0_31] : memref<4x32x32xf32, #tpu.memory_space<vmem>>, vector<1x32x32xf32>
    %49 = vector.shape_cast %48 : vector<1x32x32xf32> to vector<32x32xf32>
    %cst_32 = arith.constant dense<0.000000e+00> : vector<56x32xf32>
    %50 = tpu.matmul %47, %49, %cst_32 {dimension_numbers = #tpu.dot_dimension_numbers<[1], [0], [0], [1], [0, 0, 1, 1], [], []>} : vector<56x32xf32>, vector<32x32xf32>, vector<56x32xf32> -> vector<56x32xf32>
    %c0_33 = arith.constant 0 : index
    %c0_34 = arith.constant 0 : index
    %c0_35 = arith.constant 0 : index
    %51 = vector.load %arg12[%c0_33, %c0_34, %c0_35] : memref<4x1x32xf32, #tpu.memory_space<vmem>>, vector<1x1x32xf32>
    %52 = vector.shape_cast %51 : vector<1x1x32xf32> to vector<1x32xf32>
    %53 = vector.broadcast %52 : vector<1x32xf32> to vector<56x32xf32>
    %54 = arith.addf %50, %53 : vector<56x32xf32>
    %cst_36 = arith.constant 5.000000e-01 : f32
    %55 = vector.broadcast %cst_36 : f32 to vector<56x32xf32>
    %56 = arith.mulf %55, %54 : vector<56x32xf32>
    %cst_37 = arith.constant 5.000000e-01 : f32
    %57 = vector.broadcast %cst_37 : f32 to vector<56x32xf32>
    %58 = arith.mulf %57, %54 : vector<56x32xf32>
    %59 = math.tanh %58 : vector<56x32xf32>
    %cst_38 = arith.constant 1.000000e+00 : f32
    %60 = vector.broadcast %cst_38 : f32 to vector<56x32xf32>
    %61 = arith.addf %60, %59 : vector<56x32xf32>
    %62 = arith.mulf %56, %61 : vector<56x32xf32>
    %cst_39 = arith.constant dense<0.000000e+00> : vector<8x32xf32>
    %63 = tpu.matmul %16, %62, %cst_39 {dimension_numbers = #tpu.dot_dimension_numbers<[1], [0], [0], [1], [0, 0, 1, 1], [], []>} : vector<8x56xf32>, vector<56x32xf32>, vector<8x32xf32> -> vector<8x32xf32>
    %64 = tpu.concatenate %26, %63 in 1 : vector<8x32xf32>, vector<8x32xf32> -> vector<8x64xf32>
    %c0_40 = arith.constant 0 : index
    %c0_41 = arith.constant 0 : index
    %c0_42 = arith.constant 0 : index
    %65 = vector.load %arg13[%c0_40, %c0_41, %c0_42] : memref<4x64x32xf32, #tpu.memory_space<vmem>>, vector<1x64x32xf32>
    %66 = vector.shape_cast %65 : vector<1x64x32xf32> to vector<64x32xf32>
    %cst_43 = arith.constant dense<0.000000e+00> : vector<8x32xf32>
    %67 = tpu.matmul %64, %66, %cst_43 {dimension_numbers = #tpu.dot_dimension_numbers<[1], [0], [0], [1], [0, 0, 1, 1], [], []>} : vector<8x64xf32>, vector<64x32xf32>, vector<8x32xf32> -> vector<8x32xf32>
    %c0_44 = arith.constant 0 : index
    %c0_45 = arith.constant 0 : index
    %c0_46 = arith.constant 0 : index
    %68 = vector.load %arg14[%c0_44, %c0_45, %c0_46] : memref<4x1x32xf32, #tpu.memory_space<vmem>>, vector<1x1x32xf32>
    %69 = vector.shape_cast %68 : vector<1x1x32xf32> to vector<1x32xf32>
    %70 = vector.broadcast %69 : vector<1x32xf32> to vector<8x32xf32>
    %71 = arith.addf %67, %70 : vector<8x32xf32>
    %cst_47 = arith.constant 5.000000e-01 : f32
    %72 = vector.broadcast %cst_47 : f32 to vector<8x32xf32>
    %73 = arith.mulf %72, %71 : vector<8x32xf32>
    %cst_48 = arith.constant 5.000000e-01 : f32
    %74 = vector.broadcast %cst_48 : f32 to vector<8x32xf32>
    %75 = arith.mulf %74, %71 : vector<8x32xf32>
    %76 = math.tanh %75 : vector<8x32xf32>
    %cst_49 = arith.constant 1.000000e+00 : f32
    %77 = vector.broadcast %cst_49 : f32 to vector<8x32xf32>
    %78 = arith.addf %77, %76 : vector<8x32xf32>
    %79 = arith.mulf %73, %78 : vector<8x32xf32>
    %c0_50 = arith.constant 0 : index
    %c0_51 = arith.constant 0 : index
    %c0_52 = arith.constant 0 : index
    %80 = vector.load %arg15[%c0_50, %c0_51, %c0_52] : memref<4x32x32xf32, #tpu.memory_space<vmem>>, vector<1x32x32xf32>
    %81 = vector.shape_cast %80 : vector<1x32x32xf32> to vector<32x32xf32>
    %cst_53 = arith.constant dense<0.000000e+00> : vector<8x32xf32>
    %82 = tpu.matmul %79, %81, %cst_53 {dimension_numbers = #tpu.dot_dimension_numbers<[1], [0], [0], [1], [0, 0, 1, 1], [], []>} : vector<8x32xf32>, vector<32x32xf32>, vector<8x32xf32> -> vector<8x32xf32>
    %c0_54 = arith.constant 0 : index
    %c0_55 = arith.constant 0 : index
    %c0_56 = arith.constant 0 : index
    %83 = vector.load %arg16[%c0_54, %c0_55, %c0_56] : memref<4x1x32xf32, #tpu.memory_space<vmem>>, vector<1x1x32xf32>
    %84 = vector.shape_cast %83 : vector<1x1x32xf32> to vector<1x32xf32>
    %85 = vector.broadcast %84 : vector<1x32xf32> to vector<8x32xf32>
    %86 = arith.addf %82, %85 : vector<8x32xf32>
    %c1 = arith.constant 1 : index
    %c0_57 = arith.constant 0 : index
    %c0_58 = arith.constant 0 : index
    %87 = vector.load %arg8[%c1, %c0_57, %c0_58] : memref<4x32x64xf32, #tpu.memory_space<vmem>>, vector<1x32x64xf32>
    %88 = vector.shape_cast %87 : vector<1x32x64xf32> to vector<32x64xf32>
    %cst_59 = arith.constant dense<0.000000e+00> : vector<8x64xf32>
    %89 = tpu.matmul %86, %88, %cst_59 {dimension_numbers = #tpu.dot_dimension_numbers<[1], [0], [0], [1], [0, 0, 1, 1], [], []>} : vector<8x32xf32>, vector<32x64xf32>, vector<8x64xf32> -> vector<8x64xf32>
    %90 = vector.extract_strided_slice %89 {offsets = [0, 0], sizes = [8, 32], strides = [1, 1]} : vector<8x64xf32> to vector<8x32xf32>
    %91 = vector.extract_strided_slice %89 {offsets = [0, 32], sizes = [8, 32], strides = [1, 1]} : vector<8x64xf32> to vector<8x32xf32>
    %c1_60 = arith.constant 1 : index
    %c0_61 = arith.constant 0 : index
    %c0_62 = arith.constant 0 : index
    %92 = vector.load %arg9[%c1_60, %c0_61, %c0_62] : memref<4x1x32xf32, #tpu.memory_space<vmem>>, vector<1x1x32xf32>
    %93 = vector.shape_cast %92 : vector<1x1x32xf32> to vector<1x32xf32>
    %94 = tpu.concatenate %90, %91, %93 in 0 : vector<8x32xf32>, vector<8x32xf32>, vector<1x32xf32> -> vector<17x32xf32>
    %cst_63 = arith.constant dense<0.000000e+00> : vector<56x32xf32>
    %95 = tpu.matmul %19, %94, %cst_63 {dimension_numbers = #tpu.dot_dimension_numbers<[1], [0], [0], [1], [0, 0, 1, 1], [], []>} : vector<56x17xf32>, vector<17x32xf32>, vector<56x32xf32> -> vector<56x32xf32>
    %c1_64 = arith.constant 1 : index
    %c0_65 = arith.constant 0 : index
    %c0_66 = arith.constant 0 : index
    %96 = vector.load %arg10[%c1_64, %c0_65, %c0_66] : memref<4x1x32xf32, #tpu.memory_space<vmem>>, vector<1x1x32xf32>
    %97 = vector.shape_cast %96 : vector<1x1x32xf32> to vector<1x32xf32>
    %98 = vector.broadcast %97 : vector<1x32xf32> to vector<56x32xf32>
    %99 = arith.addf %95, %98 : vector<56x32xf32>
    %cst_67 = arith.constant 5.000000e-01 : f32
    %100 = vector.broadcast %cst_67 : f32 to vector<56x32xf32>
    %101 = arith.mulf %100, %99 : vector<56x32xf32>
    %cst_68 = arith.constant 5.000000e-01 : f32
    %102 = vector.broadcast %cst_68 : f32 to vector<56x32xf32>
    %103 = arith.mulf %102, %99 : vector<56x32xf32>
    %104 = math.tanh %103 : vector<56x32xf32>
    %cst_69 = arith.constant 1.000000e+00 : f32
    %105 = vector.broadcast %cst_69 : f32 to vector<56x32xf32>
    %106 = arith.addf %105, %104 : vector<56x32xf32>
    %107 = arith.mulf %101, %106 : vector<56x32xf32>
    %c1_70 = arith.constant 1 : index
    %c0_71 = arith.constant 0 : index
    %c0_72 = arith.constant 0 : index
    %108 = vector.load %arg11[%c1_70, %c0_71, %c0_72] : memref<4x32x32xf32, #tpu.memory_space<vmem>>, vector<1x32x32xf32>
    %109 = vector.shape_cast %108 : vector<1x32x32xf32> to vector<32x32xf32>
    %cst_73 = arith.constant dense<0.000000e+00> : vector<56x32xf32>
    %110 = tpu.matmul %107, %109, %cst_73 {dimension_numbers = #tpu.dot_dimension_numbers<[1], [0], [0], [1], [0, 0, 1, 1], [], []>} : vector<56x32xf32>, vector<32x32xf32>, vector<56x32xf32> -> vector<56x32xf32>
    %c1_74 = arith.constant 1 : index
    %c0_75 = arith.constant 0 : index
    %c0_76 = arith.constant 0 : index
    %111 = vector.load %arg12[%c1_74, %c0_75, %c0_76] : memref<4x1x32xf32, #tpu.memory_space<vmem>>, vector<1x1x32xf32>
    %112 = vector.shape_cast %111 : vector<1x1x32xf32> to vector<1x32xf32>
    %113 = vector.broadcast %112 : vector<1x32xf32> to vector<56x32xf32>
    %114 = arith.addf %110, %113 : vector<56x32xf32>
    %cst_77 = arith.constant 5.000000e-01 : f32
    %115 = vector.broadcast %cst_77 : f32 to vector<56x32xf32>
    %116 = arith.mulf %115, %114 : vector<56x32xf32>
    %cst_78 = arith.constant 5.000000e-01 : f32
    %117 = vector.broadcast %cst_78 : f32 to vector<56x32xf32>
    %118 = arith.mulf %117, %114 : vector<56x32xf32>
    %119 = math.tanh %118 : vector<56x32xf32>
    %cst_79 = arith.constant 1.000000e+00 : f32
    %120 = vector.broadcast %cst_79 : f32 to vector<56x32xf32>
    %121 = arith.addf %120, %119 : vector<56x32xf32>
    %122 = arith.mulf %116, %121 : vector<56x32xf32>
    %cst_80 = arith.constant dense<0.000000e+00> : vector<8x32xf32>
    %123 = tpu.matmul %16, %122, %cst_80 {dimension_numbers = #tpu.dot_dimension_numbers<[1], [0], [0], [1], [0, 0, 1, 1], [], []>} : vector<8x56xf32>, vector<56x32xf32>, vector<8x32xf32> -> vector<8x32xf32>
    %124 = tpu.concatenate %86, %123 in 1 : vector<8x32xf32>, vector<8x32xf32> -> vector<8x64xf32>
    %c1_81 = arith.constant 1 : index
    %c0_82 = arith.constant 0 : index
    %c0_83 = arith.constant 0 : index
    %125 = vector.load %arg13[%c1_81, %c0_82, %c0_83] : memref<4x64x32xf32, #tpu.memory_space<vmem>>, vector<1x64x32xf32>
    %126 = vector.shape_cast %125 : vector<1x64x32xf32> to vector<64x32xf32>
    %cst_84 = arith.constant dense<0.000000e+00> : vector<8x32xf32>
    %127 = tpu.matmul %124, %126, %cst_84 {dimension_numbers = #tpu.dot_dimension_numbers<[1], [0], [0], [1], [0, 0, 1, 1], [], []>} : vector<8x64xf32>, vector<64x32xf32>, vector<8x32xf32> -> vector<8x32xf32>
    %c1_85 = arith.constant 1 : index
    %c0_86 = arith.constant 0 : index
    %c0_87 = arith.constant 0 : index
    %128 = vector.load %arg14[%c1_85, %c0_86, %c0_87] : memref<4x1x32xf32, #tpu.memory_space<vmem>>, vector<1x1x32xf32>
    %129 = vector.shape_cast %128 : vector<1x1x32xf32> to vector<1x32xf32>
    %130 = vector.broadcast %129 : vector<1x32xf32> to vector<8x32xf32>
    %131 = arith.addf %127, %130 : vector<8x32xf32>
    %cst_88 = arith.constant 5.000000e-01 : f32
    %132 = vector.broadcast %cst_88 : f32 to vector<8x32xf32>
    %133 = arith.mulf %132, %131 : vector<8x32xf32>
    %cst_89 = arith.constant 5.000000e-01 : f32
    %134 = vector.broadcast %cst_89 : f32 to vector<8x32xf32>
    %135 = arith.mulf %134, %131 : vector<8x32xf32>
    %136 = math.tanh %135 : vector<8x32xf32>
    %cst_90 = arith.constant 1.000000e+00 : f32
    %137 = vector.broadcast %cst_90 : f32 to vector<8x32xf32>
    %138 = arith.addf %137, %136 : vector<8x32xf32>
    %139 = arith.mulf %133, %138 : vector<8x32xf32>
    %c1_91 = arith.constant 1 : index
    %c0_92 = arith.constant 0 : index
    %c0_93 = arith.constant 0 : index
    %140 = vector.load %arg15[%c1_91, %c0_92, %c0_93] : memref<4x32x32xf32, #tpu.memory_space<vmem>>, vector<1x32x32xf32>
    %141 = vector.shape_cast %140 : vector<1x32x32xf32> to vector<32x32xf32>
    %cst_94 = arith.constant dense<0.000000e+00> : vector<8x32xf32>
    %142 = tpu.matmul %139, %141, %cst_94 {dimension_numbers = #tpu.dot_dimension_numbers<[1], [0], [0], [1], [0, 0, 1, 1], [], []>} : vector<8x32xf32>, vector<32x32xf32>, vector<8x32xf32> -> vector<8x32xf32>
    %c1_95 = arith.constant 1 : index
    %c0_96 = arith.constant 0 : index
    %c0_97 = arith.constant 0 : index
    %143 = vector.load %arg16[%c1_95, %c0_96, %c0_97] : memref<4x1x32xf32, #tpu.memory_space<vmem>>, vector<1x1x32xf32>
    %144 = vector.shape_cast %143 : vector<1x1x32xf32> to vector<1x32xf32>
    %145 = vector.broadcast %144 : vector<1x32xf32> to vector<8x32xf32>
    %146 = arith.addf %142, %145 : vector<8x32xf32>
    %c2 = arith.constant 2 : index
    %c0_98 = arith.constant 0 : index
    %c0_99 = arith.constant 0 : index
    %147 = vector.load %arg8[%c2, %c0_98, %c0_99] : memref<4x32x64xf32, #tpu.memory_space<vmem>>, vector<1x32x64xf32>
    %148 = vector.shape_cast %147 : vector<1x32x64xf32> to vector<32x64xf32>
    %cst_100 = arith.constant dense<0.000000e+00> : vector<8x64xf32>
    %149 = tpu.matmul %146, %148, %cst_100 {dimension_numbers = #tpu.dot_dimension_numbers<[1], [0], [0], [1], [0, 0, 1, 1], [], []>} : vector<8x32xf32>, vector<32x64xf32>, vector<8x64xf32> -> vector<8x64xf32>
    %150 = vector.extract_strided_slice %149 {offsets = [0, 0], sizes = [8, 32], strides = [1, 1]} : vector<8x64xf32> to vector<8x32xf32>
    %151 = vector.extract_strided_slice %149 {offsets = [0, 32], sizes = [8, 32], strides = [1, 1]} : vector<8x64xf32> to vector<8x32xf32>
    %c2_101 = arith.constant 2 : index
    %c0_102 = arith.constant 0 : index
    %c0_103 = arith.constant 0 : index
    %152 = vector.load %arg9[%c2_101, %c0_102, %c0_103] : memref<4x1x32xf32, #tpu.memory_space<vmem>>, vector<1x1x32xf32>
    %153 = vector.shape_cast %152 : vector<1x1x32xf32> to vector<1x32xf32>
    %154 = tpu.concatenate %150, %151, %153 in 0 : vector<8x32xf32>, vector<8x32xf32>, vector<1x32xf32> -> vector<17x32xf32>
    %cst_104 = arith.constant dense<0.000000e+00> : vector<56x32xf32>
    %155 = tpu.matmul %19, %154, %cst_104 {dimension_numbers = #tpu.dot_dimension_numbers<[1], [0], [0], [1], [0, 0, 1, 1], [], []>} : vector<56x17xf32>, vector<17x32xf32>, vector<56x32xf32> -> vector<56x32xf32>
    %c2_105 = arith.constant 2 : index
    %c0_106 = arith.constant 0 : index
    %c0_107 = arith.constant 0 : index
    %156 = vector.load %arg10[%c2_105, %c0_106, %c0_107] : memref<4x1x32xf32, #tpu.memory_space<vmem>>, vector<1x1x32xf32>
    %157 = vector.shape_cast %156 : vector<1x1x32xf32> to vector<1x32xf32>
    %158 = vector.broadcast %157 : vector<1x32xf32> to vector<56x32xf32>
    %159 = arith.addf %155, %158 : vector<56x32xf32>
    %cst_108 = arith.constant 5.000000e-01 : f32
    %160 = vector.broadcast %cst_108 : f32 to vector<56x32xf32>
    %161 = arith.mulf %160, %159 : vector<56x32xf32>
    %cst_109 = arith.constant 5.000000e-01 : f32
    %162 = vector.broadcast %cst_109 : f32 to vector<56x32xf32>
    %163 = arith.mulf %162, %159 : vector<56x32xf32>
    %164 = math.tanh %163 : vector<56x32xf32>
    %cst_110 = arith.constant 1.000000e+00 : f32
    %165 = vector.broadcast %cst_110 : f32 to vector<56x32xf32>
    %166 = arith.addf %165, %164 : vector<56x32xf32>
    %167 = arith.mulf %161, %166 : vector<56x32xf32>
    %c2_111 = arith.constant 2 : index
    %c0_112 = arith.constant 0 : index
    %c0_113 = arith.constant 0 : index
    %168 = vector.load %arg11[%c2_111, %c0_112, %c0_113] : memref<4x32x32xf32, #tpu.memory_space<vmem>>, vector<1x32x32xf32>
    %169 = vector.shape_cast %168 : vector<1x32x32xf32> to vector<32x32xf32>
    %cst_114 = arith.constant dense<0.000000e+00> : vector<56x32xf32>
    %170 = tpu.matmul %167, %169, %cst_114 {dimension_numbers = #tpu.dot_dimension_numbers<[1], [0], [0], [1], [0, 0, 1, 1], [], []>} : vector<56x32xf32>, vector<32x32xf32>, vector<56x32xf32> -> vector<56x32xf32>
    %c2_115 = arith.constant 2 : index
    %c0_116 = arith.constant 0 : index
    %c0_117 = arith.constant 0 : index
    %171 = vector.load %arg12[%c2_115, %c0_116, %c0_117] : memref<4x1x32xf32, #tpu.memory_space<vmem>>, vector<1x1x32xf32>
    %172 = vector.shape_cast %171 : vector<1x1x32xf32> to vector<1x32xf32>
    %173 = vector.broadcast %172 : vector<1x32xf32> to vector<56x32xf32>
    %174 = arith.addf %170, %173 : vector<56x32xf32>
    %cst_118 = arith.constant 5.000000e-01 : f32
    %175 = vector.broadcast %cst_118 : f32 to vector<56x32xf32>
    %176 = arith.mulf %175, %174 : vector<56x32xf32>
    %cst_119 = arith.constant 5.000000e-01 : f32
    %177 = vector.broadcast %cst_119 : f32 to vector<56x32xf32>
    %178 = arith.mulf %177, %174 : vector<56x32xf32>
    %179 = math.tanh %178 : vector<56x32xf32>
    %cst_120 = arith.constant 1.000000e+00 : f32
    %180 = vector.broadcast %cst_120 : f32 to vector<56x32xf32>
    %181 = arith.addf %180, %179 : vector<56x32xf32>
    %182 = arith.mulf %176, %181 : vector<56x32xf32>
    %cst_121 = arith.constant dense<0.000000e+00> : vector<8x32xf32>
    %183 = tpu.matmul %16, %182, %cst_121 {dimension_numbers = #tpu.dot_dimension_numbers<[1], [0], [0], [1], [0, 0, 1, 1], [], []>} : vector<8x56xf32>, vector<56x32xf32>, vector<8x32xf32> -> vector<8x32xf32>
    %184 = tpu.concatenate %146, %183 in 1 : vector<8x32xf32>, vector<8x32xf32> -> vector<8x64xf32>
    %c2_122 = arith.constant 2 : index
    %c0_123 = arith.constant 0 : index
    %c0_124 = arith.constant 0 : index
    %185 = vector.load %arg13[%c2_122, %c0_123, %c0_124] : memref<4x64x32xf32, #tpu.memory_space<vmem>>, vector<1x64x32xf32>
    %186 = vector.shape_cast %185 : vector<1x64x32xf32> to vector<64x32xf32>
    %cst_125 = arith.constant dense<0.000000e+00> : vector<8x32xf32>
    %187 = tpu.matmul %184, %186, %cst_125 {dimension_numbers = #tpu.dot_dimension_numbers<[1], [0], [0], [1], [0, 0, 1, 1], [], []>} : vector<8x64xf32>, vector<64x32xf32>, vector<8x32xf32> -> vector<8x32xf32>
    %c2_126 = arith.constant 2 : index
    %c0_127 = arith.constant 0 : index
    %c0_128 = arith.constant 0 : index
    %188 = vector.load %arg14[%c2_126, %c0_127, %c0_128] : memref<4x1x32xf32, #tpu.memory_space<vmem>>, vector<1x1x32xf32>
    %189 = vector.shape_cast %188 : vector<1x1x32xf32> to vector<1x32xf32>
    %190 = vector.broadcast %189 : vector<1x32xf32> to vector<8x32xf32>
    %191 = arith.addf %187, %190 : vector<8x32xf32>
    %cst_129 = arith.constant 5.000000e-01 : f32
    %192 = vector.broadcast %cst_129 : f32 to vector<8x32xf32>
    %193 = arith.mulf %192, %191 : vector<8x32xf32>
    %cst_130 = arith.constant 5.000000e-01 : f32
    %194 = vector.broadcast %cst_130 : f32 to vector<8x32xf32>
    %195 = arith.mulf %194, %191 : vector<8x32xf32>
    %196 = math.tanh %195 : vector<8x32xf32>
    %cst_131 = arith.constant 1.000000e+00 : f32
    %197 = vector.broadcast %cst_131 : f32 to vector<8x32xf32>
    %198 = arith.addf %197, %196 : vector<8x32xf32>
    %199 = arith.mulf %193, %198 : vector<8x32xf32>
    %c2_132 = arith.constant 2 : index
    %c0_133 = arith.constant 0 : index
    %c0_134 = arith.constant 0 : index
    %200 = vector.load %arg15[%c2_132, %c0_133, %c0_134] : memref<4x32x32xf32, #tpu.memory_space<vmem>>, vector<1x32x32xf32>
    %201 = vector.shape_cast %200 : vector<1x32x32xf32> to vector<32x32xf32>
    %cst_135 = arith.constant dense<0.000000e+00> : vector<8x32xf32>
    %202 = tpu.matmul %199, %201, %cst_135 {dimension_numbers = #tpu.dot_dimension_numbers<[1], [0], [0], [1], [0, 0, 1, 1], [], []>} : vector<8x32xf32>, vector<32x32xf32>, vector<8x32xf32> -> vector<8x32xf32>
    %c2_136 = arith.constant 2 : index
    %c0_137 = arith.constant 0 : index
    %c0_138 = arith.constant 0 : index
    %203 = vector.load %arg16[%c2_136, %c0_137, %c0_138] : memref<4x1x32xf32, #tpu.memory_space<vmem>>, vector<1x1x32xf32>
    %204 = vector.shape_cast %203 : vector<1x1x32xf32> to vector<1x32xf32>
    %205 = vector.broadcast %204 : vector<1x32xf32> to vector<8x32xf32>
    %206 = arith.addf %202, %205 : vector<8x32xf32>
    %c3 = arith.constant 3 : index
    %c0_139 = arith.constant 0 : index
    %c0_140 = arith.constant 0 : index
    %207 = vector.load %arg8[%c3, %c0_139, %c0_140] : memref<4x32x64xf32, #tpu.memory_space<vmem>>, vector<1x32x64xf32>
    %208 = vector.shape_cast %207 : vector<1x32x64xf32> to vector<32x64xf32>
    %cst_141 = arith.constant dense<0.000000e+00> : vector<8x64xf32>
    %209 = tpu.matmul %206, %208, %cst_141 {dimension_numbers = #tpu.dot_dimension_numbers<[1], [0], [0], [1], [0, 0, 1, 1], [], []>} : vector<8x32xf32>, vector<32x64xf32>, vector<8x64xf32> -> vector<8x64xf32>
    %210 = vector.extract_strided_slice %209 {offsets = [0, 0], sizes = [8, 32], strides = [1, 1]} : vector<8x64xf32> to vector<8x32xf32>
    %211 = vector.extract_strided_slice %209 {offsets = [0, 32], sizes = [8, 32], strides = [1, 1]} : vector<8x64xf32> to vector<8x32xf32>
    %c3_142 = arith.constant 3 : index
    %c0_143 = arith.constant 0 : index
    %c0_144 = arith.constant 0 : index
    %212 = vector.load %arg9[%c3_142, %c0_143, %c0_144] : memref<4x1x32xf32, #tpu.memory_space<vmem>>, vector<1x1x32xf32>
    %213 = vector.shape_cast %212 : vector<1x1x32xf32> to vector<1x32xf32>
    %214 = tpu.concatenate %210, %211, %213 in 0 : vector<8x32xf32>, vector<8x32xf32>, vector<1x32xf32> -> vector<17x32xf32>
    %cst_145 = arith.constant dense<0.000000e+00> : vector<56x32xf32>
    %215 = tpu.matmul %19, %214, %cst_145 {dimension_numbers = #tpu.dot_dimension_numbers<[1], [0], [0], [1], [0, 0, 1, 1], [], []>} : vector<56x17xf32>, vector<17x32xf32>, vector<56x32xf32> -> vector<56x32xf32>
    %c3_146 = arith.constant 3 : index
    %c0_147 = arith.constant 0 : index
    %c0_148 = arith.constant 0 : index
    %216 = vector.load %arg10[%c3_146, %c0_147, %c0_148] : memref<4x1x32xf32, #tpu.memory_space<vmem>>, vector<1x1x32xf32>
    %217 = vector.shape_cast %216 : vector<1x1x32xf32> to vector<1x32xf32>
    %218 = vector.broadcast %217 : vector<1x32xf32> to vector<56x32xf32>
    %219 = arith.addf %215, %218 : vector<56x32xf32>
    %cst_149 = arith.constant 5.000000e-01 : f32
    %220 = vector.broadcast %cst_149 : f32 to vector<56x32xf32>
    %221 = arith.mulf %220, %219 : vector<56x32xf32>
    %cst_150 = arith.constant 5.000000e-01 : f32
    %222 = vector.broadcast %cst_150 : f32 to vector<56x32xf32>
    %223 = arith.mulf %222, %219 : vector<56x32xf32>
    %224 = math.tanh %223 : vector<56x32xf32>
    %cst_151 = arith.constant 1.000000e+00 : f32
    %225 = vector.broadcast %cst_151 : f32 to vector<56x32xf32>
    %226 = arith.addf %225, %224 : vector<56x32xf32>
    %227 = arith.mulf %221, %226 : vector<56x32xf32>
    %c3_152 = arith.constant 3 : index
    %c0_153 = arith.constant 0 : index
    %c0_154 = arith.constant 0 : index
    %228 = vector.load %arg11[%c3_152, %c0_153, %c0_154] : memref<4x32x32xf32, #tpu.memory_space<vmem>>, vector<1x32x32xf32>
    %229 = vector.shape_cast %228 : vector<1x32x32xf32> to vector<32x32xf32>
    %cst_155 = arith.constant dense<0.000000e+00> : vector<56x32xf32>
    %230 = tpu.matmul %227, %229, %cst_155 {dimension_numbers = #tpu.dot_dimension_numbers<[1], [0], [0], [1], [0, 0, 1, 1], [], []>} : vector<56x32xf32>, vector<32x32xf32>, vector<56x32xf32> -> vector<56x32xf32>
    %c3_156 = arith.constant 3 : index
    %c0_157 = arith.constant 0 : index
    %c0_158 = arith.constant 0 : index
    %231 = vector.load %arg12[%c3_156, %c0_157, %c0_158] : memref<4x1x32xf32, #tpu.memory_space<vmem>>, vector<1x1x32xf32>
    %232 = vector.shape_cast %231 : vector<1x1x32xf32> to vector<1x32xf32>
    %233 = vector.broadcast %232 : vector<1x32xf32> to vector<56x32xf32>
    %234 = arith.addf %230, %233 : vector<56x32xf32>
    %cst_159 = arith.constant 5.000000e-01 : f32
    %235 = vector.broadcast %cst_159 : f32 to vector<56x32xf32>
    %236 = arith.mulf %235, %234 : vector<56x32xf32>
    %cst_160 = arith.constant 5.000000e-01 : f32
    %237 = vector.broadcast %cst_160 : f32 to vector<56x32xf32>
    %238 = arith.mulf %237, %234 : vector<56x32xf32>
    %239 = math.tanh %238 : vector<56x32xf32>
    %cst_161 = arith.constant 1.000000e+00 : f32
    %240 = vector.broadcast %cst_161 : f32 to vector<56x32xf32>
    %241 = arith.addf %240, %239 : vector<56x32xf32>
    %242 = arith.mulf %236, %241 : vector<56x32xf32>
    %cst_162 = arith.constant dense<0.000000e+00> : vector<8x32xf32>
    %243 = tpu.matmul %16, %242, %cst_162 {dimension_numbers = #tpu.dot_dimension_numbers<[1], [0], [0], [1], [0, 0, 1, 1], [], []>} : vector<8x56xf32>, vector<56x32xf32>, vector<8x32xf32> -> vector<8x32xf32>
    %244 = tpu.concatenate %206, %243 in 1 : vector<8x32xf32>, vector<8x32xf32> -> vector<8x64xf32>
    %c3_163 = arith.constant 3 : index
    %c0_164 = arith.constant 0 : index
    %c0_165 = arith.constant 0 : index
    %245 = vector.load %arg13[%c3_163, %c0_164, %c0_165] : memref<4x64x32xf32, #tpu.memory_space<vmem>>, vector<1x64x32xf32>
    %246 = vector.shape_cast %245 : vector<1x64x32xf32> to vector<64x32xf32>
    %cst_166 = arith.constant dense<0.000000e+00> : vector<8x32xf32>
    %247 = tpu.matmul %244, %246, %cst_166 {dimension_numbers = #tpu.dot_dimension_numbers<[1], [0], [0], [1], [0, 0, 1, 1], [], []>} : vector<8x64xf32>, vector<64x32xf32>, vector<8x32xf32> -> vector<8x32xf32>
    %c3_167 = arith.constant 3 : index
    %c0_168 = arith.constant 0 : index
    %c0_169 = arith.constant 0 : index
    %248 = vector.load %arg14[%c3_167, %c0_168, %c0_169] : memref<4x1x32xf32, #tpu.memory_space<vmem>>, vector<1x1x32xf32>
    %249 = vector.shape_cast %248 : vector<1x1x32xf32> to vector<1x32xf32>
    %250 = vector.broadcast %249 : vector<1x32xf32> to vector<8x32xf32>
    %251 = arith.addf %247, %250 : vector<8x32xf32>
    %cst_170 = arith.constant 5.000000e-01 : f32
    %252 = vector.broadcast %cst_170 : f32 to vector<8x32xf32>
    %253 = arith.mulf %252, %251 : vector<8x32xf32>
    %cst_171 = arith.constant 5.000000e-01 : f32
    %254 = vector.broadcast %cst_171 : f32 to vector<8x32xf32>
    %255 = arith.mulf %254, %251 : vector<8x32xf32>
    %256 = math.tanh %255 : vector<8x32xf32>
    %cst_172 = arith.constant 1.000000e+00 : f32
    %257 = vector.broadcast %cst_172 : f32 to vector<8x32xf32>
    %258 = arith.addf %257, %256 : vector<8x32xf32>
    %259 = arith.mulf %253, %258 : vector<8x32xf32>
    %c3_173 = arith.constant 3 : index
    %c0_174 = arith.constant 0 : index
    %c0_175 = arith.constant 0 : index
    %260 = vector.load %arg15[%c3_173, %c0_174, %c0_175] : memref<4x32x32xf32, #tpu.memory_space<vmem>>, vector<1x32x32xf32>
    %261 = vector.shape_cast %260 : vector<1x32x32xf32> to vector<32x32xf32>
    %cst_176 = arith.constant dense<0.000000e+00> : vector<8x32xf32>
    %262 = tpu.matmul %259, %261, %cst_176 {dimension_numbers = #tpu.dot_dimension_numbers<[1], [0], [0], [1], [0, 0, 1, 1], [], []>} : vector<8x32xf32>, vector<32x32xf32>, vector<8x32xf32> -> vector<8x32xf32>
    %c3_177 = arith.constant 3 : index
    %c0_178 = arith.constant 0 : index
    %c0_179 = arith.constant 0 : index
    %263 = vector.load %arg16[%c3_177, %c0_178, %c0_179] : memref<4x1x32xf32, #tpu.memory_space<vmem>>, vector<1x1x32xf32>
    %264 = vector.shape_cast %263 : vector<1x1x32xf32> to vector<1x32xf32>
    %265 = vector.broadcast %264 : vector<1x32xf32> to vector<8x32xf32>
    %266 = arith.addf %262, %265 : vector<8x32xf32>
    %c0_180 = arith.constant 0 : index
    %c0_181 = arith.constant 0 : index
    %267 = vector.load %arg17[%c0_180, %c0_181] : memref<32x32xf32, #tpu.memory_space<vmem>>, vector<32x32xf32>
    %cst_182 = arith.constant dense<0.000000e+00> : vector<8x32xf32>
    %268 = tpu.matmul %266, %267, %cst_182 {dimension_numbers = #tpu.dot_dimension_numbers<[1], [0], [0], [1], [0, 0, 1, 1], [], []>} : vector<8x32xf32>, vector<32x32xf32>, vector<8x32xf32> -> vector<8x32xf32>
    %c0_183 = arith.constant 0 : index
    %c0_184 = arith.constant 0 : index
    %269 = vector.load %arg18[%c0_183, %c0_184] : memref<1x32xf32, #tpu.memory_space<vmem>>, vector<1x32xf32>
    %270 = vector.broadcast %269 : vector<1x32xf32> to vector<8x32xf32>
    %271 = arith.addf %268, %270 : vector<8x32xf32>
    %cst_185 = arith.constant 5.000000e-01 : f32
    %272 = vector.broadcast %cst_185 : f32 to vector<8x32xf32>
    %273 = arith.mulf %272, %271 : vector<8x32xf32>
    %cst_186 = arith.constant 5.000000e-01 : f32
    %274 = vector.broadcast %cst_186 : f32 to vector<8x32xf32>
    %275 = arith.mulf %274, %271 : vector<8x32xf32>
    %276 = math.tanh %275 : vector<8x32xf32>
    %cst_187 = arith.constant 1.000000e+00 : f32
    %277 = vector.broadcast %cst_187 : f32 to vector<8x32xf32>
    %278 = arith.addf %277, %276 : vector<8x32xf32>
    %279 = arith.mulf %273, %278 : vector<8x32xf32>
    %c0_188 = arith.constant 0 : index
    %c0_189 = arith.constant 0 : index
    %280 = vector.load %arg19[%c0_188, %c0_189] : memref<32x128xf32, #tpu.memory_space<vmem>>, vector<32x128xf32>
    %cst_190 = arith.constant dense<0.000000e+00> : vector<8x128xf32>
    %281 = tpu.matmul %279, %280, %cst_190 {dimension_numbers = #tpu.dot_dimension_numbers<[1], [0], [0], [1], [0, 0, 1, 1], [], []>} : vector<8x32xf32>, vector<32x128xf32>, vector<8x128xf32> -> vector<8x128xf32>
    %c0_191 = arith.constant 0 : index
    %c0_192 = arith.constant 0 : index
    %282 = vector.load %arg20[%c0_191, %c0_192] : memref<1x128xf32, #tpu.memory_space<vmem>>, vector<1x128xf32>
    %283 = vector.broadcast %282 : vector<1x128xf32> to vector<8x128xf32>
    %284 = arith.addf %281, %283 : vector<8x128xf32>
    %c0_193 = arith.constant 0 : index
    %c0_194 = arith.constant 0 : index
    %c0_195 = arith.constant 0 : index
    %285 = vector.load %arg21[%c0_193, %c0_194, %c0_195] : memref<1x8x128xf32, #tpu.memory_space<vmem>>, vector<1x8x128xf32>
    %286 = vector.shape_cast %285 : vector<1x8x128xf32> to vector<8x128xf32>
    %287 = vector.shape_cast %284 : vector<8x128xf32> to vector<1x8x128xf32>
    tpu.vector_store %arg21[%c0_193, %c0_194, %c0_195], %287 {strides = array<i32>} : memref<1x8x128xf32, #tpu.memory_space<vmem>>, vector<1x8x128xf32>,
    return
  }
  func.func @transform_0(%arg0: i32) -> (i32, i32) {
    %c0_i32 = arith.constant 0 : i32
    %c0_i32_0 = arith.constant 0 : i32
    %c0_i32_1 = arith.constant 0 : i32
    return %c0_i32, %c0_i32_0 : i32, i32
  }
  func.func @transform_1(%arg0: i32) -> (i32, i32) {
    %c0_i32 = arith.constant 0 : i32
    %c0_i32_0 = arith.constant 0 : i32
    %c0_i32_1 = arith.constant 0 : i32
    return %c0_i32, %c0_i32_0 : i32, i32
  }
  func.func @transform_2(%arg0: i32) -> (i32, i32) {
    %c0_i32 = arith.constant 0 : i32
    %c0_i32_0 = arith.constant 0 : i32
    %c0_i32_1 = arith.constant 0 : i32
    return %c0_i32, %c0_i32_0 : i32, i32
  }
  func.func @transform_3(%arg0: i32) -> (i32, i32, i32) {
    %c0_i32 = arith.constant 0 : i32
    %c0_i32_0 = arith.constant 0 : i32
    %c0_i32_1 = arith.constant 0 : i32
    return %arg0, %c0_i32, %c0_i32_0 : i32, i32, i32
  }
  func.func @transform_4(%arg0: i32) -> (i32, i32, i32) {
    %c0_i32 = arith.constant 0 : i32
    %c0_i32_0 = arith.constant 0 : i32
    %c0_i32_1 = arith.constant 0 : i32
    return %arg0, %c0_i32, %c0_i32_0 : i32, i32, i32
  }
  func.func @transform_5(%arg0: i32) -> (i32, i32) {
    %c0_i32 = arith.constant 0 : i32
    %c0_i32_0 = arith.constant 0 : i32
    %c0_i32_1 = arith.constant 0 : i32
    return %c0_i32, %c0_i32_0 : i32, i32
  }
  func.func @transform_6(%arg0: i32) -> (i32, i32) {
    %c0_i32 = arith.constant 0 : i32
    %c0_i32_0 = arith.constant 0 : i32
    %c0_i32_1 = arith.constant 0 : i32
    return %c0_i32, %c0_i32_0 : i32, i32
  }
  func.func @transform_7(%arg0: i32) -> (i32, i32, i32) {
    %c0_i32 = arith.constant 0 : i32
    %c0_i32_0 = arith.constant 0 : i32
    %c0_i32_1 = arith.constant 0 : i32
    %c0_i32_2 = arith.constant 0 : i32
    return %c0_i32, %c0_i32_0, %c0_i32_1 : i32, i32, i32
  }
  func.func @transform_8(%arg0: i32) -> (i32, i32, i32) {
    %c0_i32 = arith.constant 0 : i32
    %c0_i32_0 = arith.constant 0 : i32
    %c0_i32_1 = arith.constant 0 : i32
    %c0_i32_2 = arith.constant 0 : i32
    return %c0_i32, %c0_i32_0, %c0_i32_1 : i32, i32, i32
  }
  func.func @transform_9(%arg0: i32) -> (i32, i32, i32) {
    %c0_i32 = arith.constant 0 : i32
    %c0_i32_0 = arith.constant 0 : i32
    %c0_i32_1 = arith.constant 0 : i32
    %c0_i32_2 = arith.constant 0 : i32
    return %c0_i32, %c0_i32_0, %c0_i32_1 : i32, i32, i32
  }
  func.func @transform_10(%arg0: i32) -> (i32, i32, i32) {
    %c0_i32 = arith.constant 0 : i32
    %c0_i32_0 = arith.constant 0 : i32
    %c0_i32_1 = arith.constant 0 : i32
    %c0_i32_2 = arith.constant 0 : i32
    return %c0_i32, %c0_i32_0, %c0_i32_1 : i32, i32, i32
  }
  func.func @transform_11(%arg0: i32) -> (i32, i32, i32) {
    %c0_i32 = arith.constant 0 : i32
    %c0_i32_0 = arith.constant 0 : i32
    %c0_i32_1 = arith.constant 0 : i32
    %c0_i32_2 = arith.constant 0 : i32
    return %c0_i32, %c0_i32_0, %c0_i32_1 : i32, i32, i32
  }
  func.func @transform_12(%arg0: i32) -> (i32, i32, i32) {
    %c0_i32 = arith.constant 0 : i32
    %c0_i32_0 = arith.constant 0 : i32
    %c0_i32_1 = arith.constant 0 : i32
    %c0_i32_2 = arith.constant 0 : i32
    return %c0_i32, %c0_i32_0, %c0_i32_1 : i32, i32, i32
  }
  func.func @transform_13(%arg0: i32) -> (i32, i32, i32) {
    %c0_i32 = arith.constant 0 : i32
    %c0_i32_0 = arith.constant 0 : i32
    %c0_i32_1 = arith.constant 0 : i32
    %c0_i32_2 = arith.constant 0 : i32
    return %c0_i32, %c0_i32_0, %c0_i32_1 : i32, i32, i32
  }
  func.func @transform_14(%arg0: i32) -> (i32, i32, i32) {
    %c0_i32 = arith.constant 0 : i32
    %c0_i32_0 = arith.constant 0 : i32
    %c0_i32_1 = arith.constant 0 : i32
    %c0_i32_2 = arith.constant 0 : i32
    return %c0_i32, %c0_i32_0, %c0_i32_1 : i32, i32, i32
  }
  func.func @transform_15(%arg0: i32) -> (i32, i32, i32) {
    %c0_i32 = arith.constant 0 : i32
    %c0_i32_0 = arith.constant 0 : i32
    %c0_i32_1 = arith.constant 0 : i32
    %c0_i32_2 = arith.constant 0 : i32
    return %c0_i32, %c0_i32_0, %c0_i32_1 : i32, i32, i32
  }
  func.func @transform_16(%arg0: i32) -> (i32, i32) {
    %c0_i32 = arith.constant 0 : i32
    %c0_i32_0 = arith.constant 0 : i32
    %c0_i32_1 = arith.constant 0 : i32
    return %c0_i32, %c0_i32_0 : i32, i32
  }
  func.func @transform_17(%arg0: i32) -> (i32, i32) {
    %c0_i32 = arith.constant 0 : i32
    %c0_i32_0 = arith.constant 0 : i32
    %c0_i32_1 = arith.constant 0 : i32
    return %c0_i32, %c0_i32_0 : i32, i32
  }
  func.func @transform_18(%arg0: i32) -> (i32, i32) {
    %c0_i32 = arith.constant 0 : i32
    %c0_i32_0 = arith.constant 0 : i32
    %c0_i32_1 = arith.constant 0 : i32
    return %c0_i32, %c0_i32_0 : i32, i32
  }
  func.func @transform_19(%arg0: i32) -> (i32, i32) {
    %c0_i32 = arith.constant 0 : i32
    %c0_i32_0 = arith.constant 0 : i32
    %c0_i32_1 = arith.constant 0 : i32
    return %c0_i32, %c0_i32_0 : i32, i32
  }
  func.func @transform_20(%arg0: i32) -> (i32, i32, i32) {
    %c0_i32 = arith.constant 0 : i32
    %c0_i32_0 = arith.constant 0 : i32
    %c0_i32_1 = arith.constant 0 : i32
    return %arg0, %c0_i32, %c0_i32_0 : i32, i32, i32
  }
}

</mosaic_0001>

<llo_original>
// kernel: tpu_custom_call.1
$region0: #{tpu_custom_call.1}
  #allocation0 [shape = 'u32[]', space=smem, size = 0x4, offset = 0x4, fixed_abs, tag = 'smem constant byte address 0x4 - core index']
  #allocation1 [shape = 'u32[144,128]{1,0:T(1,128)}', space=vmem, size = 0x12000, scoped, tag = 'internal scratch']
  %s0 = inlined_call_operand.vmem [shape: s32[56,1], index: 0, kind: input, shape index: {}]
  %s1 = inlined_call_operand.vmem [shape: s32[56,1], index: 1, kind: input, shape index: {}]
  %s2 = inlined_call_operand.vmem [shape: s32[1,56], index: 2, kind: input, shape index: {}]
  %s3 = inlined_call_operand.vmem [shape: f32[2,8,4], index: 3, kind: input, shape index: {}]
  %s4 = inlined_call_operand.vmem [shape: f32[2,56,1], index: 4, kind: input, shape index: {}]
  %s5 = inlined_call_operand.vmem [shape: f32[4,32], index: 5, kind: input, shape index: {}]
  %s6 = inlined_call_operand.vmem [shape: f32[1,32], index: 6, kind: input, shape index: {}]
  %s7 = inlined_call_operand.vmem [shape: f32[4,32,64], index: 7, kind: input, shape index: {}]
  %s8 = inlined_call_operand.vmem [shape: f32[4,1,32], index: 8, kind: input, shape index: {}]
  %s9 = inlined_call_operand.vmem [shape: f32[4,1,32], index: 9, kind: input, shape index: {}]
  %s10 = inlined_call_operand.vmem [shape: f32[4,32,32], index: 10, kind: input, shape index: {}]
  %s11 = inlined_call_operand.vmem [shape: f32[4,1,32], index: 11, kind: input, shape index: {}]
  %s12 = inlined_call_operand.vmem [shape: f32[4,64,32], index: 12, kind: input, shape index: {}]
  %s13 = inlined_call_operand.vmem [shape: f32[4,1,32], index: 13, kind: input, shape index: {}]
  %s14 = inlined_call_operand.vmem [shape: f32[4,32,32], index: 14, kind: input, shape index: {}]
  %s15 = inlined_call_operand.vmem [shape: f32[4,1,32], index: 15, kind: input, shape index: {}]
  %s16 = inlined_call_operand.vmem [shape: f32[32,32], index: 16, kind: input, shape index: {}]
  %s17 = inlined_call_operand.vmem [shape: f32[1,32], index: 17, kind: input, shape index: {}]
  %s18 = inlined_call_operand.vmem [shape: f32[32,128], index: 18, kind: input, shape index: {}]
  %s19 = inlined_call_operand.vmem [shape: f32[1,128], index: 19, kind: input, shape index: {}]
  %s20 = inlined_call_operand.hbm [shape: f32[2,8,128], index: 20, kind: output, shape index: {}]
  %s21 = sld [smem:[#allocation0]]
  $region113: #{tpu_custom_call.1} parent=0
    _
  %s23 = ssub.s32 1, %s21
  %s24 = scalar_select 0, %s23, %s21
  $region1: #{tpu_custom_call.1} parent=0
    #allocation2 [shape = 'u8[8192]{0}', space=vmem, size = 0x2000, scoped, tag = 'output window, operand 0']
    #allocation3 [shape = 's32[2]{0}', space=sflag, size = 0x8, scoped, tag = 'scoped memory for tpu_custom_call.1']
    %25 = vsyncpa [#allocation3], 0
    %s26 = scalar_lea.sflag [#allocation3], 1
    %27 = vsyncpa %s26, 0
    loop: start=0, step=1, limit=4
    $region2: #{tpu_custom_call.1} parent=1 // loop_pre_header
      _
    $region3: #{tpu_custom_call.1} parent=1 // loop_header
      %s29 = sphi 0, %s33
      %p30 = scmp.ge.s32.totalorder %s29, 4
      %s37 = sphi 0, %s37
      %s39 = sphi 0, %s37
      %s40 = sphi 0, %s39
      %s54 = sphi 0, %s40
      %s58 = sphi 0, %s58
      %s60 = sphi 0, %s58
      %s61 = sphi 0, %s60
      %s75 = sphi 0, %s61
      %s79 = sphi 0, %s79
      %s81 = sphi 0, %s79
      %s82 = sphi 0, %s81
      %s96 = sphi 0, %s82
      %s102 = sphi 0, %s104
      %s105 = sphi 0, %s102
      %s106 = sphi 0, %s105
      %s122 = sphi 0, %s106
      %s128 = sphi 0, %s130
      %s131 = sphi 0, %s128
      %s132 = sphi 0, %s131
      %s148 = sphi 0, %s132
      %s152 = sphi 0, %s152
      %s154 = sphi 0, %s152
      %s155 = sphi 0, %s154
      %s169 = sphi 0, %s155
      %s173 = sphi 0, %s173
      %s175 = sphi 0, %s173
      %s176 = sphi 0, %s175
      %s190 = sphi 0, %s176
      %s194 = sphi 0, %s194
      %s196 = sphi 0, %s194
      %s197 = sphi 0, %s196
      %s211 = sphi 0, %s197
      %s215 = sphi 0, %s215
      %s217 = sphi 0, %s215
      %s218 = sphi 0, %s217
      %s232 = sphi 0, %s218
      %s236 = sphi 0, %s236
      %s238 = sphi 0, %s236
      %s239 = sphi 0, %s238
      %s253 = sphi 0, %s239
      %s257 = sphi 0, %s257
      %s259 = sphi 0, %s257
      %s260 = sphi 0, %s259
      %s274 = sphi 0, %s260
      %s278 = sphi 0, %s278
      %s280 = sphi 0, %s278
      %s281 = sphi 0, %s280
      %s295 = sphi 0, %s281
      %s299 = sphi 0, %s299
      %s301 = sphi 0, %s299
      %s302 = sphi 0, %s301
      %s316 = sphi 0, %s302
      %s320 = sphi 0, %s320
      %s322 = sphi 0, %s320
      %s323 = sphi 0, %s322
      %s337 = sphi 0, %s323
      %s341 = sphi 0, %s341
      %s343 = sphi 0, %s341
      %s344 = sphi 0, %s343
      %s358 = sphi 0, %s344
      %s362 = sphi 0, %s362
      %s364 = sphi 0, %s362
      %s365 = sphi 0, %s364
      %s379 = sphi 0, %s365
      %s383 = sphi 0, %s383
      %s385 = sphi 0, %s383
      %s386 = sphi 0, %s385
      %s400 = sphi 0, %s386
      %s404 = sphi 0, %s404
      %s406 = sphi 0, %s404
      %s407 = sphi 0, %s406
      %s421 = sphi 0, %s407
      %s425 = sphi 0, %s425
      %s427 = sphi 0, %s425
      %s428 = sphi 0, %s427
      %s442 = sphi 0, %s428
      %s446 = sphi 0, %s446
      %s448 = sphi 0, %s446
      %s449 = sphi 0, %s448
      %s463 = sphi 0, %s449
      %s469 = sphi 0, %s471
      %s472 = sphi 0, %s469
      %s473 = sphi 0, %s472
      %s489 = sphi 0, %s473
    $region4: #{tpu_custom_call.1} parent=1 // loop_header_branch
      %32 = sbr.rel (%p30) target = $region8
    $region5: #{tpu_custom_call.1} parent=1 // loop_body
      %s34 = ssub.s32 %s29, 1
      %s35 = ssub.s32 %s29, 2
      %s36 = sadd.s32 %s29, 1
      %s38 = sadd.s32 %s37, 1
      %p41 = scmp.eq.s32.totalorder %s29, 1
      %p42 = scmp.ne.s32.totalorder %s37, %s39
      %p43 = scmp.eq.s32.totalorder %s29, 0
      %p44 = por %p42, %p43
      %p45 = scmp.ne.s32.totalorder %s37, %s39
      %p46 = scmp.eq.s32.totalorder %s34, 1
      %p47 = por %p45, %p46
      %p48 = scmp.ne.s32.totalorder %s39, %s40
      %p49 = scmp.eq.s32.totalorder %s34, 0
      %p50 = por %p48, %p49
      %p51 = scmp.ne.s32.totalorder %s39, %s40
      %p52 = scmp.eq.s32.totalorder %s35, 1
      %p53 = por %p51, %p52
      %p55 = scmp.ne.s32.totalorder %s40, %s54
      %p56 = scmp.eq.s32.totalorder %s35, 0
      %p57 = por %p55, %p56
      %s59 = sadd.s32 %s58, 1
      %p62 = scmp.eq.s32.totalorder %s29, 1
      %p63 = scmp.ne.s32.totalorder %s58, %s60
      %p64 = scmp.eq.s32.totalorder %s29, 0
      %p65 = por %p63, %p64
      %p66 = scmp.ne.s32.totalorder %s58, %s60
      %p67 = scmp.eq.s32.totalorder %s34, 1
      %p68 = por %p66, %p67
      %p69 = scmp.ne.s32.totalorder %s60, %s61
      %p70 = scmp.eq.s32.totalorder %s34, 0
      %p71 = por %p69, %p70
      %p72 = scmp.ne.s32.totalorder %s60, %s61
      %p73 = scmp.eq.s32.totalorder %s35, 1
      %p74 = por %p72, %p73
      %p76 = scmp.ne.s32.totalorder %s61, %s75
      %p77 = scmp.eq.s32.totalorder %s35, 0
      %p78 = por %p76, %p77
      %s80 = sadd.s32 %s79, 1
      %p83 = scmp.eq.s32.totalorder %s29, 1
      %p84 = scmp.ne.s32.totalorder %s79, %s81
      %p85 = scmp.eq.s32.totalorder %s29, 0
      %p86 = por %p84, %p85
      %p87 = scmp.ne.s32.totalorder %s79, %s81
      %p88 = scmp.eq.s32.totalorder %s34, 1
      %p89 = por %p87, %p88
      %p90 = scmp.ne.s32.totalorder %s81, %s82
      %p91 = scmp.eq.s32.totalorder %s34, 0
      %p92 = por %p90, %p91
      %p93 = scmp.ne.s32.totalorder %s81, %s82
      %p94 = scmp.eq.s32.totalorder %s35, 1
      %p95 = por %p93, %p94
      %p97 = scmp.ne.s32.totalorder %s82, %s96
      %p98 = scmp.eq.s32.totalorder %s35, 0
      %p99 = por %p97, %p98
      %s100 = ssub.s32 %s29, %s36
      %p101 = scmp.eq.s32.totalorder %s100, 0
      %s103 = sadd.s32 %s102, 1
      %s104 = scalar_select %p101, %s102, %s103
      %p107 = pneg %p101
      %p108 = scmp.eq.s32.totalorder %s29, 1
      %p109 = por %p107, %p108
      %p110 = scmp.ne.s32.totalorder %s102, %s105
      %p111 = scmp.eq.s32.totalorder %s29, 0
      %p112 = por %p110, %p111
      %p113 = scmp.ne.s32.totalorder %s102, %s105
      %p114 = scmp.eq.s32.totalorder %s34, 1
      %p115 = por %p113, %p114
      %p116 = scmp.ne.s32.totalorder %s105, %s106
      %p117 = scmp.eq.s32.totalorder %s34, 0
      %p118 = por %p116, %p117
      %p119 = scmp.ne.s32.totalorder %s105, %s106
      %p120 = scmp.eq.s32.totalorder %s35, 1
      %p121 = por %p119, %p120
      %p123 = scmp.ne.s32.totalorder %s106, %s122
      %p124 = scmp.eq.s32.totalorder %s35, 0
      %p125 = por %p123, %p124
      %s126 = ssub.s32 %s29, %s36
      %p127 = scmp.eq.s32.totalorder %s126, 0
      %s129 = sadd.s32 %s128, 1
      %s130 = scalar_select %p127, %s128, %s129
      %p133 = pneg %p127
      %p134 = scmp.eq.s32.totalorder %s29, 1
      %p135 = por %p133, %p134
      %p136 = scmp.ne.s32.totalorder %s128, %s131
      %p137 = scmp.eq.s32.totalorder %s29, 0
      %p138 = por %p136, %p137
      %p139 = scmp.ne.s32.totalorder %s128, %s131
      %p140 = scmp.eq.s32.totalorder %s34, 1
      %p141 = por %p139, %p140
      %p142 = scmp.ne.s32.totalorder %s131, %s132
      %p143 = scmp.eq.s32.totalorder %s34, 0
      %p144 = por %p142, %p143
      %p145 = scmp.ne.s32.totalorder %s131, %s132
      %p146 = scmp.eq.s32.totalorder %s35, 1
      %p147 = por %p145, %p146
      %p149 = scmp.ne.s32.totalorder %s132, %s148
      %p150 = scmp.eq.s32.totalorder %s35, 0
      %p151 = por %p149, %p150
      %s153 = sadd.s32 %s152, 1
      %p156 = scmp.eq.s32.totalorder %s29, 1
      %p157 = scmp.ne.s32.totalorder %s152, %s154
      %p158 = scmp.eq.s32.totalorder %s29, 0
      %p159 = por %p157, %p158
      %p160 = scmp.ne.s32.totalorder %s152, %s154
      %p161 = scmp.eq.s32.totalorder %s34, 1
      %p162 = por %p160, %p161
      %p163 = scmp.ne.s32.totalorder %s154, %s155
      %p164 = scmp.eq.s32.totalorder %s34, 0
      %p165 = por %p163, %p164
      %p166 = scmp.ne.s32.totalorder %s154, %s155
      %p167 = scmp.eq.s32.totalorder %s35, 1
      %p168 = por %p166, %p167
      %p170 = scmp.ne.s32.totalorder %s155, %s169
      %p171 = scmp.eq.s32.totalorder %s35, 0
      %p172 = por %p170, %p171
      %s174 = sadd.s32 %s173, 1
      %p177 = scmp.eq.s32.totalorder %s29, 1
      %p178 = scmp.ne.s32.totalorder %s173, %s175
      %p179 = scmp.eq.s32.totalorder %s29, 0
      %p180 = por %p178, %p179
      %p181 = scmp.ne.s32.totalorder %s173, %s175
      %p182 = scmp.eq.s32.totalorder %s34, 1
      %p183 = por %p181, %p182
      %p184 = scmp.ne.s32.totalorder %s175, %s176
      %p185 = scmp.eq.s32.totalorder %s34, 0
      %p186 = por %p184, %p185
      %p187 = scmp.ne.s32.totalorder %s175, %s176
      %p188 = scmp.eq.s32.totalorder %s35, 1
      %p189 = por %p187, %p188
      %p191 = scmp.ne.s32.totalorder %s176, %s190
      %p192 = scmp.eq.s32.totalorder %s35, 0
      %p193 = por %p191, %p192
      %s195 = sadd.s32 %s194, 1
      %p198 = scmp.eq.s32.totalorder %s29, 1
      %p199 = scmp.ne.s32.totalorder %s194, %s196
      %p200 = scmp.eq.s32.totalorder %s29, 0
      %p201 = por %p199, %p200
      %p202 = scmp.ne.s32.totalorder %s194, %s196
      %p203 = scmp.eq.s32.totalorder %s34, 1
      %p204 = por %p202, %p203
      %p205 = scmp.ne.s32.totalorder %s196, %s197
      %p206 = scmp.eq.s32.totalorder %s34, 0
      %p207 = por %p205, %p206
      %p208 = scmp.ne.s32.totalorder %s196, %s197
      %p209 = scmp.eq.s32.totalorder %s35, 1
      %p210 = por %p208, %p209
      %p212 = scmp.ne.s32.totalorder %s197, %s211
      %p213 = scmp.eq.s32.totalorder %s35, 0
      %p214 = por %p212, %p213
      %s216 = sadd.s32 %s215, 1
      %p219 = scmp.eq.s32.totalorder %s29, 1
      %p220 = scmp.ne.s32.totalorder %s215, %s217
      %p221 = scmp.eq.s32.totalorder %s29, 0
      %p222 = por %p220, %p221
      %p223 = scmp.ne.s32.totalorder %s215, %s217
      %p224 = scmp.eq.s32.totalorder %s34, 1
      %p225 = por %p223, %p224
      %p226 = scmp.ne.s32.totalorder %s217, %s218
      %p227 = scmp.eq.s32.totalorder %s34, 0
      %p228 = por %p226, %p227
      %p229 = scmp.ne.s32.totalorder %s217, %s218
      %p230 = scmp.eq.s32.totalorder %s35, 1
      %p231 = por %p229, %p230
      %p233 = scmp.ne.s32.totalorder %s218, %s232
      %p234 = scmp.eq.s32.totalorder %s35, 0
      %p235 = por %p233, %p234
      %s237 = sadd.s32 %s236, 1
      %p240 = scmp.eq.s32.totalorder %s29, 1
      %p241 = scmp.ne.s32.totalorder %s236, %s238
      %p242 = scmp.eq.s32.totalorder %s29, 0
      %p243 = por %p241, %p242
      %p244 = scmp.ne.s32.totalorder %s236, %s238
      %p245 = scmp.eq.s32.totalorder %s34, 1
      %p246 = por %p244, %p245
      %p247 = scmp.ne.s32.totalorder %s238, %s239
      %p248 = scmp.eq.s32.totalorder %s34, 0
      %p249 = por %p247, %p248
      %p250 = scmp.ne.s32.totalorder %s238, %s239
      %p251 = scmp.eq.s32.totalorder %s35, 1
      %p252 = por %p250, %p251
      %p254 = scmp.ne.s32.totalorder %s239, %s253
      %p255 = scmp.eq.s32.totalorder %s35, 0
      %p256 = por %p254, %p255
      %s258 = sadd.s32 %s257, 1
      %p261 = scmp.eq.s32.totalorder %s29, 1
      %p262 = scmp.ne.s32.totalorder %s257, %s259
      %p263 = scmp.eq.s32.totalorder %s29, 0
      %p264 = por %p262, %p263
      %p265 = scmp.ne.s32.totalorder %s257, %s259
      %p266 = scmp.eq.s32.totalorder %s34, 1
      %p267 = por %p265, %p266
      %p268 = scmp.ne.s32.totalorder %s259, %s260
      %p269 = scmp.eq.s32.totalorder %s34, 0
      %p270 = por %p268, %p269
      %p271 = scmp.ne.s32.totalorder %s259, %s260
      %p272 = scmp.eq.s32.totalorder %s35, 1
      %p273 = por %p271, %p272
      %p275 = scmp.ne.s32.totalorder %s260, %s274
      %p276 = scmp.eq.s32.totalorder %s35, 0
      %p277 = por %p275, %p276
      %s279 = sadd.s32 %s278, 1
      %p282 = scmp.eq.s32.totalorder %s29, 1
      %p283 = scmp.ne.s32.totalorder %s278, %s280
      %p284 = scmp.eq.s32.totalorder %s29, 0
      %p285 = por %p283, %p284
      %p286 = scmp.ne.s32.totalorder %s278, %s280
      %p287 = scmp.eq.s32.totalorder %s34, 1
      %p288 = por %p286, %p287
      %p289 = scmp.ne.s32.totalorder %s280, %s281
      %p290 = scmp.eq.s32.totalorder %s34, 0
      %p291 = por %p289, %p290
      %p292 = scmp.ne.s32.totalorder %s280, %s281
      %p293 = scmp.eq.s32.totalorder %s35, 1
      %p294 = por %p292, %p293
      %p296 = scmp.ne.s32.totalorder %s281, %s295
      %p297 = scmp.eq.s32.totalorder %s35, 0
      %p298 = por %p296, %p297
      %s300 = sadd.s32 %s299, 1
      %p303 = scmp.eq.s32.totalorder %s29, 1
      %p304 = scmp.ne.s32.totalorder %s299, %s301
      %p305 = scmp.eq.s32.totalorder %s29, 0
      %p306 = por %p304, %p305
      %p307 = scmp.ne.s32.totalorder %s299, %s301
      %p308 = scmp.eq.s32.totalorder %s34, 1
      %p309 = por %p307, %p308
      %p310 = scmp.ne.s32.totalorder %s301, %s302
      %p311 = scmp.eq.s32.totalorder %s34, 0
      %p312 = por %p310, %p311
      %p313 = scmp.ne.s32.totalorder %s301, %s302
      %p314 = scmp.eq.s32.totalorder %s35, 1
      %p315 = por %p313, %p314
      %p317 = scmp.ne.s32.totalorder %s302, %s316
      %p318 = scmp.eq.s32.totalorder %s35, 0
      %p319 = por %p317, %p318
      %s321 = sadd.s32 %s320, 1
      %p324 = scmp.eq.s32.totalorder %s29, 1
      %p325 = scmp.ne.s32.totalorder %s320, %s322
      %p326 = scmp.eq.s32.totalorder %s29, 0
      %p327 = por %p325, %p326
      %p328 = scmp.ne.s32.totalorder %s320, %s322
      %p329 = scmp.eq.s32.totalorder %s34, 1
      %p330 = por %p328, %p329
      %p331 = scmp.ne.s32.totalorder %s322, %s323
      %p332 = scmp.eq.s32.totalorder %s34, 0
      %p333 = por %p331, %p332
      %p334 = scmp.ne.s32.totalorder %s322, %s323
      %p335 = scmp.eq.s32.totalorder %s35, 1
      %p336 = por %p334, %p335
      %p338 = scmp.ne.s32.totalorder %s323, %s337
      %p339 = scmp.eq.s32.totalorder %s35, 0
      %p340 = por %p338, %p339
      %s342 = sadd.s32 %s341, 1
      %p345 = scmp.eq.s32.totalorder %s29, 1
      %p346 = scmp.ne.s32.totalorder %s341, %s343
      %p347 = scmp.eq.s32.totalorder %s29, 0
      %p348 = por %p346, %p347
      %p349 = scmp.ne.s32.totalorder %s341, %s343
      %p350 = scmp.eq.s32.totalorder %s34, 1
      %p351 = por %p349, %p350
      %p352 = scmp.ne.s32.totalorder %s343, %s344
      %p353 = scmp.eq.s32.totalorder %s34, 0
      %p354 = por %p352, %p353
      %p355 = scmp.ne.s32.totalorder %s343, %s344
      %p356 = scmp.eq.s32.totalorder %s35, 1
      %p357 = por %p355, %p356
      %p359 = scmp.ne.s32.totalorder %s344, %s358
      %p360 = scmp.eq.s32.totalorder %s35, 0
      %p361 = por %p359, %p360
      %s363 = sadd.s32 %s362, 1
      %p366 = scmp.eq.s32.totalorder %s29, 1
      %p367 = scmp.ne.s32.totalorder %s362, %s364
      %p368 = scmp.eq.s32.totalorder %s29, 0
      %p369 = por %p367, %p368
      %p370 = scmp.ne.s32.totalorder %s362, %s364
      %p371 = scmp.eq.s32.totalorder %s34, 1
      %p372 = por %p370, %p371
      %p373 = scmp.ne.s32.totalorder %s364, %s365
      %p374 = scmp.eq.s32.totalorder %s34, 0
      %p375 = por %p373, %p374
      %p376 = scmp.ne.s32.totalorder %s364, %s365
      %p377 = scmp.eq.s32.totalorder %s35, 1
      %p378 = por %p376, %p377
      %p380 = scmp.ne.s32.totalorder %s365, %s379
      %p381 = scmp.eq.s32.totalorder %s35, 0
      %p382 = por %p380, %p381
      %s384 = sadd.s32 %s383, 1
      %p387 = scmp.eq.s32.totalorder %s29, 1
      %p388 = scmp.ne.s32.totalorder %s383, %s385
      %p389 = scmp.eq.s32.totalorder %s29, 0
      %p390 = por %p388, %p389
      %p391 = scmp.ne.s32.totalorder %s383, %s385
      %p392 = scmp.eq.s32.totalorder %s34, 1
      %p393 = por %p391, %p392
      %p394 = scmp.ne.s32.totalorder %s385, %s386
      %p395 = scmp.eq.s32.totalorder %s34, 0
      %p396 = por %p394, %p395
      %p397 = scmp.ne.s32.totalorder %s385, %s386
      %p398 = scmp.eq.s32.totalorder %s35, 1
      %p399 = por %p397, %p398
      %p401 = scmp.ne.s32.totalorder %s386, %s400
      %p402 = scmp.eq.s32.totalorder %s35, 0
      %p403 = por %p401, %p402
      %s405 = sadd.s32 %s404, 1
      %p408 = scmp.eq.s32.totalorder %s29, 1
      %p409 = scmp.ne.s32.totalorder %s404, %s406
      %p410 = scmp.eq.s32.totalorder %s29, 0
      %p411 = por %p409, %p410
      %p412 = scmp.ne.s32.totalorder %s404, %s406
      %p413 = scmp.eq.s32.totalorder %s34, 1
      %p414 = por %p412, %p413
      %p415 = scmp.ne.s32.totalorder %s406, %s407
      %p416 = scmp.eq.s32.totalorder %s34, 0
      %p417 = por %p415, %p416
      %p418 = scmp.ne.s32.totalorder %s406, %s407
      %p419 = scmp.eq.s32.totalorder %s35, 1
      %p420 = por %p418, %p419
      %p422 = scmp.ne.s32.totalorder %s407, %s421
      %p423 = scmp.eq.s32.totalorder %s35, 0
      %p424 = por %p422, %p423
      %s426 = sadd.s32 %s425, 1
      %p429 = scmp.eq.s32.totalorder %s29, 1
      %p430 = scmp.ne.s32.totalorder %s425, %s427
      %p431 = scmp.eq.s32.totalorder %s29, 0
      %p432 = por %p430, %p431
      %p433 = scmp.ne.s32.totalorder %s425, %s427
      %p434 = scmp.eq.s32.totalorder %s34, 1
      %p435 = por %p433, %p434
      %p436 = scmp.ne.s32.totalorder %s427, %s428
      %p437 = scmp.eq.s32.totalorder %s34, 0
      %p438 = por %p436, %p437
      %p439 = scmp.ne.s32.totalorder %s427, %s428
      %p440 = scmp.eq.s32.totalorder %s35, 1
      %p441 = por %p439, %p440
      %p443 = scmp.ne.s32.totalorder %s428, %s442
      %p444 = scmp.eq.s32.totalorder %s35, 0
      %p445 = por %p443, %p444
      %s447 = sadd.s32 %s446, 1
      %p450 = scmp.eq.s32.totalorder %s29, 1
      %p451 = scmp.ne.s32.totalorder %s446, %s448
      %p452 = scmp.eq.s32.totalorder %s29, 0
      %p453 = por %p451, %p452
      %p454 = scmp.ne.s32.totalorder %s446, %s448
      %p455 = scmp.eq.s32.totalorder %s34, 1
      %p456 = por %p454, %p455
      %p457 = scmp.ne.s32.totalorder %s448, %s449
      %p458 = scmp.eq.s32.totalorder %s34, 0
      %p459 = por %p457, %p458
      %p460 = scmp.ne.s32.totalorder %s448, %s449
      %p461 = scmp.eq.s32.totalorder %s35, 1
      %p462 = por %p460, %p461
      %p464 = scmp.ne.s32.totalorder %s449, %s463
      %p465 = scmp.eq.s32.totalorder %s35, 0
      %p466 = por %p464, %p465
      %s467 = ssub.s32 %s29, %s36
      %p468 = scmp.eq.s32.totalorder %s467, 0
      %s470 = sadd.s32 %s469, 1
      %s471 = scalar_select %p468, %s469, %s470
      %p474 = pneg %p468
      %p475 = scmp.eq.s32.totalorder %s29, 1
      %p476 = por %p474, %p475
      %p477 = scmp.ne.s32.totalorder %s469, %s472
      %p478 = scmp.eq.s32.totalorder %s29, 0
      %p479 = por %p477, %p478
      %p480 = scmp.ne.s32.totalorder %s469, %s472
      %p481 = scmp.eq.s32.totalorder %s34, 1
      %p482 = por %p480, %p481
      %p483 = scmp.ne.s32.totalorder %s472, %s473
      %p484 = scmp.eq.s32.totalorder %s34, 0
      %p485 = por %p483, %p484
      %p486 = scmp.ne.s32.totalorder %s472, %s473
      %p487 = scmp.eq.s32.totalorder %s35, 1
      %p488 = por %p486, %p487
      %p490 = scmp.ne.s32.totalorder %s473, %s489
      %p491 = scmp.eq.s32.totalorder %s35, 0
      %p492 = por %p490, %p491
      %p493 = scmp.le.s32.totalorder 1, %s29
      %p494 = scmp.lt.s32.totalorder %s29, 3
      %p495 = pnand %p493, %p494
      %p496 = pneg %p495
      // Predicated region
      $region9: #{tpu_custom_call.1} parent=5 // pred_check
        _
      $region10: #{tpu_custom_call.1} parent=5 // pred_check_branch
        %498 = sbr.rel (%p495) target = $region12
      $region11: #{tpu_custom_call.1} parent=5 // pred_region
        %s499 = ssub.s32 %s29, 1
        // Predicated region
        $region13: #{tpu_custom_call.1} parent=11 // pred_check
          %p500 = pneg %p50
        $region14: #{tpu_custom_call.1} parent=11 // pred_check_branch
          %502 = sbr.rel (%p500) target = $region16
        $region15: #{tpu_custom_call.1} parent=11 // pred_region
          _
        $region16: #{tpu_custom_call.1} parent=11 // pred_fallthru
          _
        // Predicated region
        $region17: #{tpu_custom_call.1} parent=11 // pred_check
          %p503 = pneg %p71
        $region18: #{tpu_custom_call.1} parent=11 // pred_check_branch
          %505 = sbr.rel (%p503) target = $region20
        $region19: #{tpu_custom_call.1} parent=11 // pred_region
          _
        $region20: #{tpu_custom_call.1} parent=11 // pred_fallthru
          _
        // Predicated region
        $region21: #{tpu_custom_call.1} parent=11 // pred_check
          %p506 = pneg %p92
        $region22: #{tpu_custom_call.1} parent=11 // pred_check_branch
          %508 = sbr.rel (%p506) target = $region24
        $region23: #{tpu_custom_call.1} parent=11 // pred_region
          _
        $region24: #{tpu_custom_call.1} parent=11 // pred_fallthru
          _
        // Predicated region
        $region25: #{tpu_custom_call.1} parent=11 // pred_check
          %p509 = pneg %p165
        $region26: #{tpu_custom_call.1} parent=11 // pred_check_branch
          %511 = sbr.rel (%p509) target = $region28
        $region27: #{tpu_custom_call.1} parent=11 // pred_region
          _
        $region28: #{tpu_custom_call.1} parent=11 // pred_fallthru
          _
        // Predicated region
        $region29: #{tpu_custom_call.1} parent=11 // pred_check
          %p512 = pneg %p186
        $region30: #{tpu_custom_call.1} parent=11 // pred_check_branch
          %514 = sbr.rel (%p512) target = $region32
        $region31: #{tpu_custom_call.1} parent=11 // pred_region
          _
        $region32: #{tpu_custom_call.1} parent=11 // pred_fallthru
          _
        // Predicated region
        $region33: #{tpu_custom_call.1} parent=11 // pred_check
          %p515 = pneg %p207
        $region34: #{tpu_custom_call.1} parent=11 // pred_check_branch
          %517 = sbr.rel (%p515) target = $region36
        $region35: #{tpu_custom_call.1} parent=11 // pred_region
          _
        $region36: #{tpu_custom_call.1} parent=11 // pred_fallthru
          _
        // Predicated region
        $region37: #{tpu_custom_call.1} parent=11 // pred_check
          %p518 = pneg %p228
        $region38: #{tpu_custom_call.1} parent=11 // pred_check_branch
          %520 = sbr.rel (%p518) target = $region40
        $region39: #{tpu_custom_call.1} parent=11 // pred_region
          _
        $region40: #{tpu_custom_call.1} parent=11 // pred_fallthru
          _
        // Predicated region
        $region41: #{tpu_custom_call.1} parent=11 // pred_check
          %p521 = pneg %p249
        $region42: #{tpu_custom_call.1} parent=11 // pred_check_branch
          %523 = sbr.rel (%p521) target = $region44
        $region43: #{tpu_custom_call.1} parent=11 // pred_region
          _
        $region44: #{tpu_custom_call.1} parent=11 // pred_fallthru
          _
        // Predicated region
        $region45: #{tpu_custom_call.1} parent=11 // pred_check
          %p524 = pneg %p270
        $region46: #{tpu_custom_call.1} parent=11 // pred_check_branch
          %526 = sbr.rel (%p524) target = $region48
        $region47: #{tpu_custom_call.1} parent=11 // pred_region
          _
        $region48: #{tpu_custom_call.1} parent=11 // pred_fallthru
          _
        // Predicated region
        $region49: #{tpu_custom_call.1} parent=11 // pred_check
          %p527 = pneg %p291
        $region50: #{tpu_custom_call.1} parent=11 // pred_check_branch
          %529 = sbr.rel (%p527) target = $region52
        $region51: #{tpu_custom_call.1} parent=11 // pred_region
          _
        $region52: #{tpu_custom_call.1} parent=11 // pred_fallthru
          _
        // Predicated region
        $region53: #{tpu_custom_call.1} parent=11 // pred_check
          %p530 = pneg %p312
        $region54: #{tpu_custom_call.1} parent=11 // pred_check_branch
          %532 = sbr.rel (%p530) target = $region56
        $region55: #{tpu_custom_call.1} parent=11 // pred_region
          _
        $region56: #{tpu_custom_call.1} parent=11 // pred_fallthru
          _
        // Predicated region
        $region57: #{tpu_custom_call.1} parent=11 // pred_check
          %p533 = pneg %p333
        $region58: #{tpu_custom_call.1} parent=11 // pred_check_branch
          %535 = sbr.rel (%p533) target = $region60
        $region59: #{tpu_custom_call.1} parent=11 // pred_region
          _
        $region60: #{tpu_custom_call.1} parent=11 // pred_fallthru
          _
        // Predicated region
        $region61: #{tpu_custom_call.1} parent=11 // pred_check
          %p536 = pneg %p354
        $region62: #{tpu_custom_call.1} parent=11 // pred_check_branch
          %538 = sbr.rel (%p536) target = $region64
        $region63: #{tpu_custom_call.1} parent=11 // pred_region
          _
        $region64: #{tpu_custom_call.1} parent=11 // pred_fallthru
          _
        // Predicated region
        $region65: #{tpu_custom_call.1} parent=11 // pred_check
          %p539 = pneg %p375
        $region66: #{tpu_custom_call.1} parent=11 // pred_check_branch
          %541 = sbr.rel (%p539) target = $region68
        $region67: #{tpu_custom_call.1} parent=11 // pred_region
          _
        $region68: #{tpu_custom_call.1} parent=11 // pred_fallthru
          _
        // Predicated region
        $region69: #{tpu_custom_call.1} parent=11 // pred_check
          %p542 = pneg %p396
        $region70: #{tpu_custom_call.1} parent=11 // pred_check_branch
          %544 = sbr.rel (%p542) target = $region72
        $region71: #{tpu_custom_call.1} parent=11 // pred_region
          _
        $region72: #{tpu_custom_call.1} parent=11 // pred_fallthru
          _
        // Predicated region
        $region73: #{tpu_custom_call.1} parent=11 // pred_check
          %p545 = pneg %p417
        $region74: #{tpu_custom_call.1} parent=11 // pred_check_branch
          %547 = sbr.rel (%p545) target = $region76
        $region75: #{tpu_custom_call.1} parent=11 // pred_region
          _
        $region76: #{tpu_custom_call.1} parent=11 // pred_fallthru
          _
        // Predicated region
        $region77: #{tpu_custom_call.1} parent=11 // pred_check
          %p548 = pneg %p438
        $region78: #{tpu_custom_call.1} parent=11 // pred_check_branch
          %550 = sbr.rel (%p548) target = $region80
        $region79: #{tpu_custom_call.1} parent=11 // pred_region
          _
        $region80: #{tpu_custom_call.1} parent=11 // pred_fallthru
          _
        // Predicated region
        $region81: #{tpu_custom_call.1} parent=11 // pred_check
          %p551 = pneg %p459
        $region82: #{tpu_custom_call.1} parent=11 // pred_check_branch
          %553 = sbr.rel (%p551) target = $region84
        $region83: #{tpu_custom_call.1} parent=11 // pred_region
          _
        $region84: #{tpu_custom_call.1} parent=11 // pred_fallthru
          _
      $region12: #{tpu_custom_call.1} parent=5 // pred_fallthru
        _
      %p554 = scmp.lt.s32.totalorder %s29, 2
      // Predicated region
      $region85: #{tpu_custom_call.1} parent=5 // pred_check
        %p555 = pneg %p554
      $region86: #{tpu_custom_call.1} parent=5 // pred_check_branch
        %557 = sbr.rel (%p555) target = $region88
      $region87: #{tpu_custom_call.1} parent=5 // pred_region
        // Predicated region
        $region89: #{tpu_custom_call.1} parent=87 // pred_check
          %p558 = pneg %p112
        $region90: #{tpu_custom_call.1} parent=87 // pred_check_branch
          %560 = sbr.rel (%p558) target = $region92
        $region91: #{tpu_custom_call.1} parent=87 // pred_region
          %p561 = scmp.lt.s32.totalorder %s29, 1
          %s562 = scalar_select %p561, %s29, 1
          %s563 = smul.addr %s562, 8
          %s564 = scalar_lea.vmem %s3, %s563
        $region92: #{tpu_custom_call.1} parent=87 // pred_fallthru
          _
        // Predicated region
        $region93: #{tpu_custom_call.1} parent=87 // pred_check
          %p565 = pneg %p138
        $region94: #{tpu_custom_call.1} parent=87 // pred_check_branch
          %567 = sbr.rel (%p565) target = $region96
        $region95: #{tpu_custom_call.1} parent=87 // pred_region
          %p568 = scmp.lt.s32.totalorder %s29, 1
          %s569 = scalar_select %p568, %s29, 1
          %s570 = smul.addr %s569, 7
          %s571 = smul.addr %s570, 8
          %s572 = scalar_lea.vmem %s4, %s571
        $region96: #{tpu_custom_call.1} parent=87 // pred_fallthru
          _
      $region88: #{tpu_custom_call.1} parent=5 // pred_fallthru
        _
      %p573 = scmp.le.s32.totalorder 1, %s29
      %p574 = scmp.lt.s32.totalorder %s29, 3
      %p575 = pnand %p573, %p574
      %p576 = pneg %p575
      // Predicated region
      $region97: #{tpu_custom_call.1} parent=5 // pred_check
        _
      $region98: #{tpu_custom_call.1} parent=5 // pred_check_branch
        %578 = sbr.rel (%p575) target = $region100
      $region99: #{tpu_custom_call.1} parent=5 // pred_region
        %s579 = ssub.s32 %s29, 1
        %p580 = pneg %p50
        %p581 = pneg %p47
        %p582 = pneg %p71
        %p583 = pneg %p68
        %p584 = pneg %p92
        %p585 = pneg %p89
        %p586 = scmp.lt.s32.totalorder %s34, 1
        %s587 = scalar_select %p586, %s34, 1
        %s588 = smul.addr %s587, 8
        %s589 = scalar_lea.vmem %s3, %s588
        %p590 = pneg %p118
        %p591 = pneg %p115
        %p592 = scmp.lt.s32.totalorder %s34, 1
        %s593 = scalar_select %p592, %s34, 1
        %s594 = smul.addr %s593, 7
        %s595 = smul.addr %s594, 8
        %s596 = scalar_lea.vmem %s4, %s595
        %p597 = pneg %p144
        %p598 = pneg %p141
        %p599 = pneg %p165
        %p600 = pneg %p162
        %p601 = pneg %p186
        %p602 = pneg %p183
        %p603 = pneg %p207
        %p604 = pneg %p204
        %p605 = pneg %p228
        %p606 = pneg %p225
        %p607 = pneg %p249
        %p608 = pneg %p246
        %p609 = pneg %p270
        %p610 = pneg %p267
        %p611 = pneg %p291
        %p612 = pneg %p288
        %p613 = pneg %p312
        %p614 = pneg %p309
        %p615 = pneg %p333
        %p616 = pneg %p330
        %p617 = pneg %p354
        %p618 = pneg %p351
        %p619 = pneg %p375
        %p620 = pneg %p372
        %p621 = pneg %p396
        %p622 = pneg %p393
        %p623 = pneg %p417
        %p624 = pneg %p414
        %p625 = pneg %p438
        %p626 = pneg %p435
        %p627 = pneg %p459
        %p628 = pneg %p456
        %p629 = pneg %p485
        %p630 = pneg %p482
        %s631 = sand.u32 %s472, 1
        %s632 = scalar_lea.sflag [#allocation3], %s631
        %s633 = sand.u32 %s472, 1
        %s634 = smul.addr %s633, 8
        %s635 = scalar_lea.vmem [#allocation2], %s634
        %p636 = scmp.lt.s32.totalorder %s34, 1
        %s637 = scalar_select %p636, %s34, 1
        %s638 = smul.addr %s637, 8
        %s639 = scalar_lea.vmem %s3, %s638
        %p640 = scmp.lt.s32.totalorder %s34, 1
        %s641 = scalar_select %p640, %s34, 1
        %s642 = smul.addr %s641, 7
        %s643 = smul.addr %s642, 8
        %s644 = scalar_lea.vmem %s4, %s643
        %v645 = vlaneseq
        %v646 = vand.u32 %v645, 127
        %v647 = vld [vmem:[%s0] sm:$0xff]
        %v648 = vld [vmem:[%s0 + $0x8] sm:$0xff]
        %v649 = vld [vmem:[%s0 + $0x10] sm:$0xff]
        %v650 = vld [vmem:[%s0 + $0x18] sm:$0xff]
        %v651 = vld [vmem:[%s0 + $0x20] sm:$0xff]
        %v652 = vld [vmem:[%s0 + $0x28] sm:$0xff]
        %v653 = vld [vmem:[%s0 + $0x30] sm:$0xff]
        %654 = vset.pattern.permute.xlu0 0
        %655 = vperm.xlu0 %654, %v647
        %v656 = vpop.permute.xlu0 %655
        %657 = vset.pattern.permute.xlu0 0
        %658 = vperm.xlu0 %657, %v648
        %v659 = vpop.permute.xlu0 %658
        %660 = vset.pattern.permute.xlu0 0
        %661 = vperm.xlu0 %660, %v649
        %v662 = vpop.permute.xlu0 %661
        %663 = vset.pattern.permute.xlu0 0
        %664 = vperm.xlu0 %663, %v650
        %v665 = vpop.permute.xlu0 %664
        %666 = vset.pattern.permute.xlu0 0
        %667 = vperm.xlu0 %666, %v651
        %v668 = vpop.permute.xlu0 %667
        %669 = vset.pattern.permute.xlu0 0
        %670 = vperm.xlu0 %669, %v652
        %v671 = vpop.permute.xlu0 %670
        %672 = vset.pattern.permute.xlu0 0
        %673 = vperm.xlu0 %672, %v653
        %v674 = vpop.permute.xlu0 %673
        %vm675 = vcmp.eq.s32.totalorder %v646, %v656
        %vm676 = vcmp.eq.s32.totalorder %v646, %v659
        %vm677 = vcmp.eq.s32.totalorder %v646, %v662
        %vm678 = vcmp.eq.s32.totalorder %v646, %v665
        %vm679 = vcmp.eq.s32.totalorder %v646, %v668
        %vm680 = vcmp.eq.s32.totalorder %v646, %v671
        %vm681 = vcmp.eq.s32.totalorder %v646, %v674
        %v682 = vsel %vm675, 1, 0
        %v683 = vsel %vm676, 1, 0
        %v684 = vsel %vm677, 1, 0
        %v685 = vsel %vm678, 1, 0
        %v686 = vsel %vm679, 1, 0
        %v687 = vsel %vm680, 1, 0
        %v688 = vsel %vm681, 1, 0
        %v689 = vcvt.s32.f32 %v682
        %v690 = vcvt.s32.f32 %v683
        %v691 = vcvt.s32.f32 %v684
        %v692 = vcvt.s32.f32 %v685
        %v693 = vcvt.s32.f32 %v686
        %v694 = vcvt.s32.f32 %v687
        %v695 = vcvt.s32.f32 %v688
        %v696 = vld [vmem:[%s1] sm:$0xff]
        %v697 = vld [vmem:[%s1 + $0x8] sm:$0xff]
        %v698 = vld [vmem:[%s1 + $0x10] sm:$0xff]
        %v699 = vld [vmem:[%s1 + $0x18] sm:$0xff]
        %v700 = vld [vmem:[%s1 + $0x20] sm:$0xff]
        %v701 = vld [vmem:[%s1 + $0x28] sm:$0xff]
        %v702 = vld [vmem:[%s1 + $0x30] sm:$0xff]
        %703 = vset.pattern.permute.xlu0 0
        %704 = vperm.xlu0 %703, %v696
        %v705 = vpop.permute.xlu0 %704
        %706 = vset.pattern.permute.xlu0 0
        %707 = vperm.xlu0 %706, %v697
        %v708 = vpop.permute.xlu0 %707
        %709 = vset.pattern.permute.xlu0 0
        %710 = vperm.xlu0 %709, %v698
        %v711 = vpop.permute.xlu0 %710
        %712 = vset.pattern.permute.xlu0 0
        %713 = vperm.xlu0 %712, %v699
        %v714 = vpop.permute.xlu0 %713
        %715 = vset.pattern.permute.xlu0 0
        %716 = vperm.xlu0 %715, %v700
        %v717 = vpop.permute.xlu0 %716
        %718 = vset.pattern.permute.xlu0 0
        %719 = vperm.xlu0 %718, %v701
        %v720 = vpop.permute.xlu0 %719
        %721 = vset.pattern.permute.xlu0 0
        %722 = vperm.xlu0 %721, %v702
        %v723 = vpop.permute.xlu0 %722
        %vm724 = vcmp.eq.s32.totalorder %v646, %v705
        %vm725 = vcmp.eq.s32.totalorder %v646, %v708
        %vm726 = vcmp.eq.s32.totalorder %v646, %v711
        %vm727 = vcmp.eq.s32.totalorder %v646, %v714
        %vm728 = vcmp.eq.s32.totalorder %v646, %v717
        %vm729 = vcmp.eq.s32.totalorder %v646, %v720
        %vm730 = vcmp.eq.s32.totalorder %v646, %v723
        %v731 = vsel %vm724, 1, 0
        %v732 = vsel %vm725, 1, 0
        %v733 = vsel %vm726, 1, 0
        %v734 = vsel %vm727, 1, 0
        %v735 = vsel %vm728, 1, 0
        %v736 = vsel %vm729, 1, 0
        %v737 = vsel %vm730, 1, 0
        %v738 = vcvt.s32.f32 %v731
        %v739 = vcvt.s32.f32 %v732
        %v740 = vcvt.s32.f32 %v733
        %v741 = vcvt.s32.f32 %v734
        %v742 = vcvt.s32.f32 %v735
        %v743 = vcvt.s32.f32 %v736
        %v744 = vcvt.s32.f32 %v737
        %v745 = vlaneseq
        %v746 = vshrl.u32 %v745, 7
        %v747 = vld [vmem:[%s2] sm:$0x1]
        %v748 = vlaneseq
        %v749 = vshrl.u32 %v748, 7
        %v750 = vsub.s32 0, %v749
        %v751 = vrot.slane %v747, %v750
        %vm752 = vcmp.eq.s32.totalorder %v746, %v751
        %v753 = vsel %vm752, 1, 0
        %v754 = vcvt.s32.f32 %v753
        %v755 = vld [vmem:[%s644] sm:$0xff]
        %v756 = vld [vmem:[%s644 + $0x8] sm:$0xff]
        %v757 = vld [vmem:[%s644 + $0x10] sm:$0xff]
        %v758 = vld [vmem:[%s644 + $0x18] sm:$0xff]
        %v759 = vld [vmem:[%s644 + $0x20] sm:$0xff]
        %v760 = vld [vmem:[%s644 + $0x28] sm:$0xff]
        %v761 = vld [vmem:[%s644 + $0x30] sm:$0xff]
        %769 = vrot.lane.b32.xlu0 %v738, 8
        %v770 = vpop.permute.xlu0 %769
        %771 = vrot.lane.b32.xlu0 %v739, 8
        %v772 = vpop.permute.xlu0 %771
        %773 = vrot.lane.b32.xlu0 %v740, 8
        %v774 = vpop.permute.xlu0 %773
        %775 = vrot.lane.b32.xlu0 %v741, 8
        %v776 = vpop.permute.xlu0 %775
        %777 = vrot.lane.b32.xlu0 %v742, 8
        %v778 = vpop.permute.xlu0 %777
        %779 = vrot.lane.b32.xlu0 %v743, 8
        %v780 = vpop.permute.xlu0 %779
        %781 = vrot.lane.b32.xlu0 %v744, 8
        %v782 = vpop.permute.xlu0 %781
        %797 = vrot.lane.b32.xlu0 %v755, 16
        %v798 = vpop.permute.xlu0 %797
        %799 = vrot.lane.b32.xlu0 %v756, 16
        %v800 = vpop.permute.xlu0 %799
        %801 = vrot.lane.b32.xlu0 %v757, 16
        %v802 = vpop.permute.xlu0 %801
        %803 = vrot.lane.b32.xlu0 %v758, 16
        %v804 = vpop.permute.xlu0 %803
        %805 = vrot.lane.b32.xlu0 %v759, 16
        %v806 = vpop.permute.xlu0 %805
        %807 = vrot.lane.b32.xlu0 %v760, 16
        %v808 = vpop.permute.xlu0 %807
        %809 = vrot.lane.b32.xlu0 %v761, 16
        %v810 = vpop.permute.xlu0 %809
        %vm818 = vcmask 64512
        %v819 = vsel %vm818, %v689, %v770
        %v820 = vsel %vm818, %v690, %v772
        %v821 = vsel %vm818, %v691, %v774
        %v822 = vsel %vm818, %v692, %v776
        %v823 = vsel %vm818, %v693, %v778
        %v824 = vsel %vm818, %v694, %v780
        %v825 = vsel %vm818, %v695, %v782
        %vm826 = vcmask 130048
        %v827 = vsel %vm826, %v819, %v798
        %v828 = vsel %vm826, %v820, %v800
        %v829 = vsel %vm826, %v821, %v802
        %v830 = vsel %vm826, %v822, %v804
        %v831 = vsel %vm826, %v823, %v806
        %v832 = vsel %vm826, %v824, %v808
        %v833 = vsel %vm826, %v825, %v810
        %v834 = vld [vmem:[%s639] sm:$0xff]
        %v835 = vld [vmem:[%s5] sm:$0xf]
        %v836 = vld [vmem:[%s6] sm:$0x1]
        %v838 = vlaneseq
        %v839 = vshrl.u32 %v838, 7
        %v840 = vsub.s32 0, %v839
        %v841 = vrot.slane %v836, %v840
        %vm843 = vcmask 31744
        %v845 = vsel %vm843, %v834, 0
        %vm847 = vcmask 1043456
        %v849 = vsel %vm847, %v835, 0
        %851 = vmatprep.subr.mxu0 0.0
        %852 = vmatpush1.msra.mxu0 %v849
        %853 = vmatprep.subr.mxu0 0.0
        %854 = vmatpush1.msra.mxu0 0.0
        %855 = vmatprep.subr.mxu0 0.0
        %856 = vmatpush1.msra.mxu0 0.0
        %857 = vmatprep.subr.mxu0 0.0
        %858 = vmatpush1.msra.mxu0 0.0
        %859 = vmatprep.subr.mxu0 0.0
        %860 = vmatpush1.msra.mxu0 0.0
        %861 = vmatprep.subr.mxu0 0.0
        %862 = vmatpush1.msra.mxu0 0.0
        %863 = vmatprep.subr.mxu0 0.0
        %864 = vmatpush1.msra.mxu0 0.0
        %865 = vmatprep.subr.mxu0 0.0
        %866 = vmatpush1.msra.mxu0 0.0
        %867 = vmatprep.subr.mxu0 0.0
        %868 = vmatpush1.msra.mxu0 0.0
        %869 = vmatprep.subr.mxu0 0.0
        %870 = vmatpush1.msra.mxu0 0.0
        %871 = vmatprep.subr.mxu0 0.0
        %872 = vmatpush1.msra.mxu0 0.0
        %873 = vmatprep.subr.mxu0 0.0
        %874 = vmatpush1.msra.mxu0 0.0
        %875 = vmatprep.subr.mxu0 0.0
        %876 = vmatpush1.msra.mxu0 0.0
        %877 = vmatprep.subr.mxu0 0.0
        %878 = vmatpush1.msra.mxu0 0.0
        %879 = vmatprep.subr.mxu0 0.0
        %880 = vmatpush1.msra.mxu0 0.0
        %881 = vmatprep.subr.mxu0 0.0
        %882 = vmatpush1.msra.mxu0 0.0
        %883 = vmatprep.subr.mxu0 0.0
        %884 = vmatpush1.msra.mxu0 0.0
        %885 = vmatprep.subr.mxu0 0.0
        %886 = vmatpush1.msra.mxu0 0.0
        %887 = vmatprep.subr.mxu0 0.0
        %888 = vmatpush1.msra.mxu0 0.0
        %889 = vmatprep.subr.mxu0 0.0
        %890 = vmatpush1.msra.mxu0 0.0
        %891 = vmatprep.subr.mxu0 0.0
        %892 = vmatpush1.msra.mxu0 0.0
        %893 = vmatprep.subr.mxu0 0.0
        %894 = vmatpush1.msra.mxu0 0.0
        %895 = vmatprep.subr.mxu0 0.0
        %896 = vmatpush1.msra.mxu0 0.0
        %897 = vmatprep.subr.mxu0 0.0
        %898 = vmatpush1.msra.mxu0 0.0
        %899 = vmatprep.subr.mxu0 0.0
        %900 = vmatpush1.msra.mxu0 0.0
        %901 = vmatprep.subr.mxu0 0.0
        %902 = vmatpush1.msra.mxu0 0.0
        %903 = vmatprep.subr.mxu0 0.0
        %904 = vmatpush1.msra.mxu0 0.0
        %905 = vmatprep.subr.mxu0 0.0
        %906 = vmatpush1.msra.mxu0 0.0
        %907 = vmatprep.subr.mxu0 0.0
        %908 = vmatpush1.msra.mxu0 0.0
        %909 = vmatprep.subr.mxu0 0.0
        %910 = vmatpush1.msra.mxu0 0.0
        %911 = vmatprep.subr.mxu0 0.0
        %912 = vmatpush1.msra.mxu0 0.0
        %913 = vmatprep.subr.mxu0 0.0
        %914 = vmatpush1.msra.mxu0 0.0
        %915 = vmatprep.mubr.f32.mxu0 0.0
        %916 = vmatmul.mubr.f32.gmra.mrb[0].mxu0 %v845
        %v917 = vpop.f32.mrb[0].mxu0
        %v918 = vadd.f32 %v841, %v917
        %v919 = vpop.f32.mrb[0].mxu0
        %920 = vdwg.mxu0
        %v921 = vld [vmem:[%s7] sm:$0xff]
        %v922 = vld [vmem:[%s7 + $0x8] sm:$0xff]
        %v923 = vld [vmem:[%s7 + $0x10] sm:$0xff]
        %v924 = vld [vmem:[%s7 + $0x18] sm:$0xff]
        %vm925 = vcmask 261120
        %v927 = vsel %vm925, %v918, 0
        %929 = vmatprep.subr.mxu0 0.0
        %930 = vmatpush1.msra.mxu0 %v921
        %931 = vmatprep.subr.mxu0 0.0
        %932 = vmatpush1.msra.mxu0 %v922
        %933 = vmatprep.subr.mxu0 0.0
        %934 = vmatpush1.msra.mxu0 %v923
        %935 = vmatprep.subr.mxu0 0.0
        %936 = vmatpush1.msra.mxu0 %v924
        %937 = vmatprep.subr.mxu0 0.0
        %938 = vmatpush1.msra.mxu0 0.0
        %939 = vmatprep.subr.mxu0 0.0
        %940 = vmatpush1.msra.mxu0 0.0
        %941 = vmatprep.subr.mxu0 0.0
        %942 = vmatpush1.msra.mxu0 0.0
        %943 = vmatprep.subr.mxu0 0.0
        %944 = vmatpush1.msra.mxu0 0.0
        %945 = vmatprep.subr.mxu0 0.0
        %946 = vmatpush1.msra.mxu0 0.0
        %947 = vmatprep.subr.mxu0 0.0
        %948 = vmatpush1.msra.mxu0 0.0
        %949 = vmatprep.subr.mxu0 0.0
        %950 = vmatpush1.msra.mxu0 0.0
        %951 = vmatprep.subr.mxu0 0.0
        %952 = vmatpush1.msra.mxu0 0.0
        %953 = vmatprep.subr.mxu0 0.0
        %954 = vmatpush1.msra.mxu0 0.0
        %955 = vmatprep.subr.mxu0 0.0
        %956 = vmatpush1.msra.mxu0 0.0
        %957 = vmatprep.subr.mxu0 0.0
        %958 = vmatpush1.msra.mxu0 0.0
        %959 = vmatprep.subr.mxu0 0.0
        %960 = vmatpush1.msra.mxu0 0.0
        %961 = vmatprep.subr.mxu0 0.0
        %962 = vmatpush1.msra.mxu0 0.0
        %963 = vmatprep.subr.mxu0 0.0
        %964 = vmatpush1.msra.mxu0 0.0
        %965 = vmatprep.subr.mxu0 0.0
        %966 = vmatpush1.msra.mxu0 0.0
        %967 = vmatprep.subr.mxu0 0.0
        %968 = vmatpush1.msra.mxu0 0.0
        %969 = vmatprep.subr.mxu0 0.0
        %970 = vmatpush1.msra.mxu0 0.0
        %971 = vmatprep.subr.mxu0 0.0
        %972 = vmatpush1.msra.mxu0 0.0
        %973 = vmatprep.subr.mxu0 0.0
        %974 = vmatpush1.msra.mxu0 0.0
        %975 = vmatprep.subr.mxu0 0.0
        %976 = vmatpush1.msra.mxu0 0.0
        %977 = vmatprep.subr.mxu0 0.0
        %978 = vmatpush1.msra.mxu0 0.0
        %979 = vmatprep.subr.mxu0 0.0
        %980 = vmatpush1.msra.mxu0 0.0
        %981 = vmatprep.subr.mxu0 0.0
        %982 = vmatpush1.msra.mxu0 0.0
        %983 = vmatprep.subr.mxu0 0.0
        %984 = vmatpush1.msra.mxu0 0.0
        %985 = vmatprep.subr.mxu0 0.0
        %986 = vmatpush1.msra.mxu0 0.0
        %987 = vmatprep.subr.mxu0 0.0
        %988 = vmatpush1.msra.mxu0 0.0
        %989 = vmatprep.subr.mxu0 0.0
        %990 = vmatpush1.msra.mxu0 0.0
        %991 = vmatprep.subr.mxu0 0.0
        %992 = vmatpush1.msra.mxu0 0.0
        %993 = vmatprep.mubr.f32.mxu0 0.0
        %994 = vmatmul.mubr.f32.gmra.mrb[0].mxu0 %v927
        %v995 = vpop.f32.mrb[0].mxu0
        %v996 = vadd.f32 0.0, %v995
        %v997 = vpop.f32.mrb[0].mxu0
        %998 = vdwg.mxu0
        %v999 = vld [vmem:[%s8] sm:$0x1]
        %1001 = vrot.lane.b32.xlu0 %v996, 96
        %v1002 = vpop.permute.xlu0 %1001
        %v1004 = vld [vmem:[%s9] sm:$0x1]
        %v1006 = vlaneseq
        %v1007 = vshrl.u32 %v1006, 7
        %v1008 = vsub.s32 0, %v1007
        %v1009 = vrot.slane %v1004, %v1008
        %vm1011 = vcmask 138240
        %v1013 = vsel %vm1011, %v827, 0
        %v1016 = vsel %vm1011, %v828, 0
        %v1019 = vsel %vm1011, %v829, 0
        %v1022 = vsel %vm1011, %v830, 0
        %v1025 = vsel %vm1011, %v831, 0
        %v1028 = vsel %vm1011, %v832, 0
        %v1031 = vsel %vm1011, %v833, 0
        %vm1033 = vcmask 1040384
        %v1035 = vsel %vm1033, %v999, 0
        %1037 = vmatprep.subr.mxu0 0.0
        %1038 = vmatpush1.msra.mxu0 %v996
        %1039 = vmatprep.subr.mxu0 0.0
        %1040 = vmatpush1.msra.mxu0 %v1002
        %1041 = vmatprep.subr.mxu0 0.0
        %1042 = vmatpush1.msra.mxu0 %v1035
        %1043 = vmatprep.subr.mxu0 0.0
        %1044 = vmatpush1.msra.mxu0 0.0
        %1045 = vmatprep.subr.mxu0 0.0
        %1046 = vmatpush1.msra.mxu0 0.0
        %1047 = vmatprep.subr.mxu0 0.0
        %1048 = vmatpush1.msra.mxu0 0.0
        %1049 = vmatprep.subr.mxu0 0.0
        %1050 = vmatpush1.msra.mxu0 0.0
        %1051 = vmatprep.subr.mxu0 0.0
        %1052 = vmatpush1.msra.mxu0 0.0
        %1053 = vmatprep.subr.mxu0 0.0
        %1054 = vmatpush1.msra.mxu0 0.0
        %1055 = vmatprep.subr.mxu0 0.0
        %1056 = vmatpush1.msra.mxu0 0.0
        %1057 = vmatprep.subr.mxu0 0.0
        %1058 = vmatpush1.msra.mxu0 0.0
        %1059 = vmatprep.subr.mxu0 0.0
        %1060 = vmatpush1.msra.mxu0 0.0
        %1061 = vmatprep.subr.mxu0 0.0
        %1062 = vmatpush1.msra.mxu0 0.0
        %1063 = vmatprep.subr.mxu0 0.0
        %1064 = vmatpush1.msra.mxu0 0.0
        %1065 = vmatprep.subr.mxu0 0.0
        %1066 = vmatpush1.msra.mxu0 0.0
        %1067 = vmatprep.subr.mxu0 0.0
        %1068 = vmatpush1.msra.mxu0 0.0
        %1069 = vmatprep.subr.mxu0 0.0
        %1070 = vmatpush1.msra.mxu0 0.0
        %1071 = vmatprep.subr.mxu0 0.0
        %1072 = vmatpush1.msra.mxu0 0.0
        %1073 = vmatprep.subr.mxu0 0.0
        %1074 = vmatpush1.msra.mxu0 0.0
        %1075 = vmatprep.subr.mxu0 0.0
        %1076 = vmatpush1.msra.mxu0 0.0
        %1077 = vmatprep.subr.mxu0 0.0
        %1078 = vmatpush1.msra.mxu0 0.0
        %1079 = vmatprep.subr.mxu0 0.0
        %1080 = vmatpush1.msra.mxu0 0.0
        %1081 = vmatprep.subr.mxu0 0.0
        %1082 = vmatpush1.msra.mxu0 0.0
        %1083 = vmatprep.subr.mxu0 0.0
        %1084 = vmatpush1.msra.mxu0 0.0
        %1085 = vmatprep.subr.mxu0 0.0
        %1086 = vmatpush1.msra.mxu0 0.0
        %1087 = vmatprep.subr.mxu0 0.0
        %1088 = vmatpush1.msra.mxu0 0.0
        %1089 = vmatprep.subr.mxu0 0.0
        %1090 = vmatpush1.msra.mxu0 0.0
        %1091 = vmatprep.subr.mxu0 0.0
        %1092 = vmatpush1.msra.mxu0 0.0
        %1093 = vmatprep.subr.mxu0 0.0
        %1094 = vmatpush1.msra.mxu0 0.0
        %1095 = vmatprep.subr.mxu0 0.0
        %1096 = vmatpush1.msra.mxu0 0.0
        %1097 = vmatprep.subr.mxu0 0.0
        %1098 = vmatpush1.msra.mxu0 0.0
        %1099 = vmatprep.subr.mxu0 0.0
        %1100 = vmatpush1.msra.mxu0 0.0
        %1101 = vmatprep.mubr.f32.mxu0 0.0
        %1102 = vmatmul.mubr.f32.gmra.mrb[0].mxu0 %v1013
        %v1103 = vpop.f32.mrb[0].mxu0
        %v1104 = vadd.f32 %v1009, %v1103
        %v1105 = vpop.f32.mrb[0].mxu0
        %1106 = vmatprep.mubr.f32.mxu0 0.0
        %1107 = vmatmul.mubr.f32.gmra.mrb[0].mxu0 %v1016
        %v1108 = vpop.f32.mrb[0].mxu0
        %v1109 = vadd.f32 %v1009, %v1108
        %v1110 = vpop.f32.mrb[0].mxu0
        %1111 = vmatprep.mubr.f32.mxu0 0.0
        %1112 = vmatmul.mubr.f32.gmra.mrb[0].mxu0 %v1019
        %v1113 = vpop.f32.mrb[0].mxu0
        %v1114 = vadd.f32 %v1009, %v1113
        %v1115 = vpop.f32.mrb[0].mxu0
        %1116 = vmatprep.mubr.f32.mxu0 0.0
        %1117 = vmatmul.mubr.f32.gmra.mrb[0].mxu0 %v1022
        %v1118 = vpop.f32.mrb[0].mxu0
        %v1119 = vadd.f32 %v1009, %v1118
        %v1120 = vpop.f32.mrb[0].mxu0
        %1121 = vmatprep.mubr.f32.mxu0 0.0
        %1122 = vmatmul.mubr.f32.gmra.mrb[0].mxu0 %v1025
        %v1123 = vpop.f32.mrb[0].mxu0
        %v1124 = vadd.f32 %v1009, %v1123
        %v1125 = vpop.f32.mrb[0].mxu0
        %1126 = vmatprep.mubr.f32.mxu0 0.0
        %1127 = vmatmul.mubr.f32.gmra.mrb[0].mxu0 %v1028
        %v1128 = vpop.f32.mrb[0].mxu0
        %v1129 = vadd.f32 %v1009, %v1128
        %v1130 = vpop.f32.mrb[0].mxu0
        %1131 = vmatprep.mubr.f32.mxu0 0.0
        %1132 = vmatmul.mubr.f32.gmra.mrb[0].mxu0 %v1031
        %v1133 = vpop.f32.mrb[0].mxu0
        %v1134 = vadd.f32 %v1009, %v1133
        %v1135 = vpop.f32.mrb[0].mxu0
        %1136 = vdwg.mxu0
        %v1137 = vmul.f32 %v1104, 0.5
        %v1138 = vmul.f32 %v1109, 0.5
        %v1139 = vmul.f32 %v1114, 0.5
        %v1140 = vmul.f32 %v1119, 0.5
        %v1141 = vmul.f32 %v1124, 0.5
        %v1142 = vmul.f32 %v1129, 0.5
        %v1143 = vmul.f32 %v1134, 0.5
        %v1144 = vtanh.pop %v1137
        %v1145 = vtanh.pop %v1138
        %v1146 = vtanh.pop %v1139
        %v1147 = vtanh.pop %v1140
        %v1148 = vtanh.pop %v1141
        %v1149 = vtanh.pop %v1142
        %v1150 = vtanh.pop %v1143
        %v1151 = vadd.f32 %v1144, 1.0
        %v1152 = vadd.f32 %v1145, 1.0
        %v1153 = vadd.f32 %v1146, 1.0
        %v1154 = vadd.f32 %v1147, 1.0
        %v1155 = vadd.f32 %v1148, 1.0
        %v1156 = vadd.f32 %v1149, 1.0
        %v1157 = vadd.f32 %v1150, 1.0
        %v1158 = vmul.f32 %v1137, %v1151
        %v1159 = vmul.f32 %v1138, %v1152
        %v1160 = vmul.f32 %v1139, %v1153
        %v1161 = vmul.f32 %v1140, %v1154
        %v1162 = vmul.f32 %v1141, %v1155
        %v1163 = vmul.f32 %v1142, %v1156
        %v1164 = vmul.f32 %v1143, %v1157
        %v1165 = vld [vmem:[%s10] sm:$0xff]
        %v1166 = vld [vmem:[%s10 + $0x8] sm:$0xff]
        %v1167 = vld [vmem:[%s10 + $0x10] sm:$0xff]
        %v1168 = vld [vmem:[%s10 + $0x18] sm:$0xff]
        %v1169 = vld [vmem:[%s11] sm:$0x1]
        %v1171 = vlaneseq
        %v1172 = vshrl.u32 %v1171, 7
        %v1173 = vsub.s32 0, %v1172
        %v1174 = vrot.slane %v1169, %v1173
        %v1177 = vsel %vm925, %v1158, 0
        %v1180 = vsel %vm925, %v1159, 0
        %v1183 = vsel %vm925, %v1160, 0
        %v1186 = vsel %vm925, %v1161, 0
        %v1189 = vsel %vm925, %v1162, 0
        %v1192 = vsel %vm925, %v1163, 0
        %v1195 = vsel %vm925, %v1164, 0
        %1197 = vmatprep.subr.mxu0 0.0
        %1198 = vmatpush1.msra.mxu0 %v1165
        %1199 = vmatprep.subr.mxu0 0.0
        %1200 = vmatpush1.msra.mxu0 %v1166
        %1201 = vmatprep.subr.mxu0 0.0
        %1202 = vmatpush1.msra.mxu0 %v1167
        %1203 = vmatprep.subr.mxu0 0.0
        %1204 = vmatpush1.msra.mxu0 %v1168
        %1205 = vmatprep.subr.mxu0 0.0
        %1206 = vmatpush1.msra.mxu0 0.0
        %1207 = vmatprep.subr.mxu0 0.0
        %1208 = vmatpush1.msra.mxu0 0.0
        %1209 = vmatprep.subr.mxu0 0.0
        %1210 = vmatpush1.msra.mxu0 0.0
        %1211 = vmatprep.subr.mxu0 0.0
        %1212 = vmatpush1.msra.mxu0 0.0
        %1213 = vmatprep.subr.mxu0 0.0
        %1214 = vmatpush1.msra.mxu0 0.0
        %1215 = vmatprep.subr.mxu0 0.0
        %1216 = vmatpush1.msra.mxu0 0.0
        %1217 = vmatprep.subr.mxu0 0.0
        %1218 = vmatpush1.msra.mxu0 0.0
        %1219 = vmatprep.subr.mxu0 0.0
        %1220 = vmatpush1.msra.mxu0 0.0
        %1221 = vmatprep.subr.mxu0 0.0
        %1222 = vmatpush1.msra.mxu0 0.0
        %1223 = vmatprep.subr.mxu0 0.0
        %1224 = vmatpush1.msra.mxu0 0.0
        %1225 = vmatprep.subr.mxu0 0.0
        %1226 = vmatpush1.msra.mxu0 0.0
        %1227 = vmatprep.subr.mxu0 0.0
        %1228 = vmatpush1.msra.mxu0 0.0
        %1229 = vmatprep.subr.mxu0 0.0
        %1230 = vmatpush1.msra.mxu0 0.0
        %1231 = vmatprep.subr.mxu0 0.0
        %1232 = vmatpush1.msra.mxu0 0.0
        %1233 = vmatprep.subr.mxu0 0.0
        %1234 = vmatpush1.msra.mxu0 0.0
        %1235 = vmatprep.subr.mxu0 0.0
        %1236 = vmatpush1.msra.mxu0 0.0
        %1237 = vmatprep.subr.mxu0 0.0
        %1238 = vmatpush1.msra.mxu0 0.0
        %1239 = vmatprep.subr.mxu0 0.0
        %1240 = vmatpush1.msra.mxu0 0.0
        %1241 = vmatprep.subr.mxu0 0.0
        %1242 = vmatpush1.msra.mxu0 0.0
        %1243 = vmatprep.subr.mxu0 0.0
        %1244 = vmatpush1.msra.mxu0 0.0
        %1245 = vmatprep.subr.mxu0 0.0
        %1246 = vmatpush1.msra.mxu0 0.0
        %1247 = vmatprep.subr.mxu0 0.0
        %1248 = vmatpush1.msra.mxu0 0.0
        %1249 = vmatprep.subr.mxu0 0.0
        %1250 = vmatpush1.msra.mxu0 0.0
        %1251 = vmatprep.subr.mxu0 0.0
        %1252 = vmatpush1.msra.mxu0 0.0
        %1253 = vmatprep.subr.mxu0 0.0
        %1254 = vmatpush1.msra.mxu0 0.0
        %1255 = vmatprep.subr.mxu0 0.0
        %1256 = vmatpush1.msra.mxu0 0.0
        %1257 = vmatprep.subr.mxu0 0.0
        %1258 = vmatpush1.msra.mxu0 0.0
        %1259 = vmatprep.subr.mxu0 0.0
        %1260 = vmatpush1.msra.mxu0 0.0
        %1261 = vmatprep.mubr.f32.mxu0 0.0
        %1262 = vmatmul.mubr.f32.gmra.mrb[0].mxu0 %v1177
        %v1263 = vpop.f32.mrb[0].mxu0
        %v1264 = vadd.f32 %v1174, %v1263
        %v1265 = vpop.f32.mrb[0].mxu0
        %1266 = vmatprep.mubr.f32.mxu0 0.0
        %1267 = vmatmul.mubr.f32.gmra.mrb[0].mxu0 %v1180
        %v1268 = vpop.f32.mrb[0].mxu0
        %v1269 = vadd.f32 %v1174, %v1268
        %v1270 = vpop.f32.mrb[0].mxu0
        %1271 = vmatprep.mubr.f32.mxu0 0.0
        %1272 = vmatmul.mubr.f32.gmra.mrb[0].mxu0 %v1183
        %v1273 = vpop.f32.mrb[0].mxu0
        %v1274 = vadd.f32 %v1174, %v1273
        %v1275 = vpop.f32.mrb[0].mxu0
        %1276 = vmatprep.mubr.f32.mxu0 0.0
        %1277 = vmatmul.mubr.f32.gmra.mrb[0].mxu0 %v1186
        %v1278 = vpop.f32.mrb[0].mxu0
        %v1279 = vadd.f32 %v1174, %v1278
        %v1280 = vpop.f32.mrb[0].mxu0
        %1281 = vmatprep.mubr.f32.mxu0 0.0
        %1282 = vmatmul.mubr.f32.gmra.mrb[0].mxu0 %v1189
        %v1283 = vpop.f32.mrb[0].mxu0
        %v1284 = vadd.f32 %v1174, %v1283
        %v1285 = vpop.f32.mrb[0].mxu0
        %1286 = vmatprep.mubr.f32.mxu0 0.0
        %1287 = vmatmul.mubr.f32.gmra.mrb[0].mxu0 %v1192
        %v1288 = vpop.f32.mrb[0].mxu0
        %v1289 = vadd.f32 %v1174, %v1288
        %v1290 = vpop.f32.mrb[0].mxu0
        %1291 = vmatprep.mubr.f32.mxu0 0.0
        %1292 = vmatmul.mubr.f32.gmra.mrb[0].mxu0 %v1195
        %v1293 = vpop.f32.mrb[0].mxu0
        %v1294 = vadd.f32 %v1174, %v1293
        %v1295 = vpop.f32.mrb[0].mxu0
        %1296 = vdwg.mxu0
        %v1297 = vmul.f32 %v1264, 0.5
        %v1298 = vmul.f32 %v1269, 0.5
        %v1299 = vmul.f32 %v1274, 0.5
        %v1300 = vmul.f32 %v1279, 0.5
        %v1301 = vmul.f32 %v1284, 0.5
        %v1302 = vmul.f32 %v1289, 0.5
        %v1303 = vmul.f32 %v1294, 0.5
        %v1304 = vtanh.pop %v1297
        %v1305 = vtanh.pop %v1298
        %v1306 = vtanh.pop %v1299
        %v1307 = vtanh.pop %v1300
        %v1308 = vtanh.pop %v1301
        %v1309 = vtanh.pop %v1302
        %v1310 = vtanh.pop %v1303
        %v1311 = vadd.f32 %v1304, 1.0
        %v1312 = vadd.f32 %v1305, 1.0
        %v1313 = vadd.f32 %v1306, 1.0
        %v1314 = vadd.f32 %v1307, 1.0
        %v1315 = vadd.f32 %v1308, 1.0
        %v1316 = vadd.f32 %v1309, 1.0
        %v1317 = vadd.f32 %v1310, 1.0
        %v1318 = vmul.f32 %v1297, %v1311
        %v1319 = vmul.f32 %v1298, %v1312
        %v1320 = vmul.f32 %v1299, %v1313
        %v1321 = vmul.f32 %v1300, %v1314
        %v1322 = vmul.f32 %v1301, %v1315
        %v1323 = vmul.f32 %v1302, %v1316
        %v1324 = vmul.f32 %v1303, %v1317
        %vm1325 = vcmask 457728
        %v1327 = vsel %vm1325, %v754, 0
        %1329 = vmatprep.subr.mxu0 0.0
        %1330 = vmatpush1.msra.mxu0 %v1318
        %1331 = vmatprep.subr.mxu0 0.0
        %1332 = vmatpush1.msra.mxu0 %v1319
        %1333 = vmatprep.subr.mxu0 0.0
        %1334 = vmatpush1.msra.mxu0 %v1320
        %1335 = vmatprep.subr.mxu0 0.0
        %1336 = vmatpush1.msra.mxu0 %v1321
        %1337 = vmatprep.subr.mxu0 0.0
        %1338 = vmatpush1.msra.mxu0 %v1322
        %1339 = vmatprep.subr.mxu0 0.0
        %1340 = vmatpush1.msra.mxu0 %v1323
        %1341 = vmatprep.subr.mxu0 0.0
        %1342 = vmatpush1.msra.mxu0 %v1324
        %1343 = vmatprep.subr.mxu0 0.0
        %1344 = vmatpush1.msra.mxu0 0.0
        %1345 = vmatprep.subr.mxu0 0.0
        %1346 = vmatpush1.msra.mxu0 0.0
        %1347 = vmatprep.subr.mxu0 0.0
        %1348 = vmatpush1.msra.mxu0 0.0
        %1349 = vmatprep.subr.mxu0 0.0
        %1350 = vmatpush1.msra.mxu0 0.0
        %1351 = vmatprep.subr.mxu0 0.0
        %1352 = vmatpush1.msra.mxu0 0.0
        %1353 = vmatprep.subr.mxu0 0.0
        %1354 = vmatpush1.msra.mxu0 0.0
        %1355 = vmatprep.subr.mxu0 0.0
        %1356 = vmatpush1.msra.mxu0 0.0
        %1357 = vmatprep.subr.mxu0 0.0
        %1358 = vmatpush1.msra.mxu0 0.0
        %1359 = vmatprep.subr.mxu0 0.0
        %1360 = vmatpush1.msra.mxu0 0.0
        %1361 = vmatprep.subr.mxu0 0.0
        %1362 = vmatpush1.msra.mxu0 0.0
        %1363 = vmatprep.subr.mxu0 0.0
        %1364 = vmatpush1.msra.mxu0 0.0
        %1365 = vmatprep.subr.mxu0 0.0
        %1366 = vmatpush1.msra.mxu0 0.0
        %1367 = vmatprep.subr.mxu0 0.0
        %1368 = vmatpush1.msra.mxu0 0.0
        %1369 = vmatprep.subr.mxu0 0.0
        %1370 = vmatpush1.msra.mxu0 0.0
        %1371 = vmatprep.subr.mxu0 0.0
        %1372 = vmatpush1.msra.mxu0 0.0
        %1373 = vmatprep.subr.mxu0 0.0
        %1374 = vmatpush1.msra.mxu0 0.0
        %1375 = vmatprep.subr.mxu0 0.0
        %1376 = vmatpush1.msra.mxu0 0.0
        %1377 = vmatprep.subr.mxu0 0.0
        %1378 = vmatpush1.msra.mxu0 0.0
        %1379 = vmatprep.subr.mxu0 0.0
        %1380 = vmatpush1.msra.mxu0 0.0
        %1381 = vmatprep.subr.mxu0 0.0
        %1382 = vmatpush1.msra.mxu0 0.0
        %1383 = vmatprep.subr.mxu0 0.0
        %1384 = vmatpush1.msra.mxu0 0.0
        %1385 = vmatprep.subr.mxu0 0.0
        %1386 = vmatpush1.msra.mxu0 0.0
        %1387 = vmatprep.subr.mxu0 0.0
        %1388 = vmatpush1.msra.mxu0 0.0
        %1389 = vmatprep.subr.mxu0 0.0
        %1390 = vmatpush1.msra.mxu0 0.0
        %1391 = vmatprep.subr.mxu0 0.0
        %1392 = vmatpush1.msra.mxu0 0.0
        %1393 = vmatprep.mubr.f32.mxu0 0.0
        %1394 = vmatmul.mubr.f32.gmra.mrb[0].mxu0 %v1327
        %v1395 = vpop.f32.mrb[0].mxu0
        %v1396 = vadd.f32 0.0, %v1395
        %v1397 = vpop.f32.mrb[0].mxu0
        %1398 = vdwg.mxu0
        %1400 = vrot.lane.b32.xlu0 %v1396, 32
        %v1401 = vpop.permute.xlu0 %1400
        %v1403 = vsel %vm925, %v918, %v1401
        %v1404 = vld [vmem:[%s12] sm:$0xff]
        %v1405 = vld [vmem:[%s12 + $0x8] sm:$0xff]
        %v1406 = vld [vmem:[%s12 + $0x10] sm:$0xff]
        %v1407 = vld [vmem:[%s12 + $0x18] sm:$0xff]
        %v1408 = vld [vmem:[%s12 + $0x20] sm:$0xff]
        %v1409 = vld [vmem:[%s12 + $0x28] sm:$0xff]
        %v1410 = vld [vmem:[%s12 + $0x30] sm:$0xff]
        %v1411 = vld [vmem:[%s12 + $0x38] sm:$0xff]
        %v1412 = vld [vmem:[%s13] sm:$0x1]
        %v1414 = vlaneseq
        %v1415 = vshrl.u32 %v1414, 7
        %v1416 = vsub.s32 0, %v1415
        %v1417 = vrot.slane %v1412, %v1416
        %vm1419 = vcmask 523264
        %v1421 = vsel %vm1419, %v1403, 0
        %1423 = vmatprep.subr.mxu0 0.0
        %1424 = vmatpush1.msra.mxu0 %v1404
        %1425 = vmatprep.subr.mxu0 0.0
        %1426 = vmatpush1.msra.mxu0 %v1405
        %1427 = vmatprep.subr.mxu0 0.0
        %1428 = vmatpush1.msra.mxu0 %v1406
        %1429 = vmatprep.subr.mxu0 0.0
        %1430 = vmatpush1.msra.mxu0 %v1407
        %1431 = vmatprep.subr.mxu0 0.0
        %1432 = vmatpush1.msra.mxu0 %v1408
        %1433 = vmatprep.subr.mxu0 0.0
        %1434 = vmatpush1.msra.mxu0 %v1409
        %1435 = vmatprep.subr.mxu0 0.0
        %1436 = vmatpush1.msra.mxu0 %v1410
        %1437 = vmatprep.subr.mxu0 0.0
        %1438 = vmatpush1.msra.mxu0 %v1411
        %1439 = vmatprep.subr.mxu0 0.0
        %1440 = vmatpush1.msra.mxu0 0.0
        %1441 = vmatprep.subr.mxu0 0.0
        %1442 = vmatpush1.msra.mxu0 0.0
        %1443 = vmatprep.subr.mxu0 0.0
        %1444 = vmatpush1.msra.mxu0 0.0
        %1445 = vmatprep.subr.mxu0 0.0
        %1446 = vmatpush1.msra.mxu0 0.0
        %1447 = vmatprep.subr.mxu0 0.0
        %1448 = vmatpush1.msra.mxu0 0.0
        %1449 = vmatprep.subr.mxu0 0.0
        %1450 = vmatpush1.msra.mxu0 0.0
        %1451 = vmatprep.subr.mxu0 0.0
        %1452 = vmatpush1.msra.mxu0 0.0
        %1453 = vmatprep.subr.mxu0 0.0
        %1454 = vmatpush1.msra.mxu0 0.0
        %1455 = vmatprep.subr.mxu0 0.0
        %1456 = vmatpush1.msra.mxu0 0.0
        %1457 = vmatprep.subr.mxu0 0.0
        %1458 = vmatpush1.msra.mxu0 0.0
        %1459 = vmatprep.subr.mxu0 0.0
        %1460 = vmatpush1.msra.mxu0 0.0
        %1461 = vmatprep.subr.mxu0 0.0
        %1462 = vmatpush1.msra.mxu0 0.0
        %1463 = vmatprep.subr.mxu0 0.0
        %1464 = vmatpush1.msra.mxu0 0.0
        %1465 = vmatprep.subr.mxu0 0.0
        %1466 = vmatpush1.msra.mxu0 0.0
        %1467 = vmatprep.subr.mxu0 0.0
        %1468 = vmatpush1.msra.mxu0 0.0
        %1469 = vmatprep.subr.mxu0 0.0
        %1470 = vmatpush1.msra.mxu0 0.0
        %1471 = vmatprep.subr.mxu0 0.0
        %1472 = vmatpush1.msra.mxu0 0.0
        %1473 = vmatprep.subr.mxu0 0.0
        %1474 = vmatpush1.msra.mxu0 0.0
        %1475 = vmatprep.subr.mxu0 0.0
        %1476 = vmatpush1.msra.mxu0 0.0
        %1477 = vmatprep.subr.mxu0 0.0
        %1478 = vmatpush1.msra.mxu0 0.0
        %1479 = vmatprep.subr.mxu0 0.0
        %1480 = vmatpush1.msra.mxu0 0.0
        %1481 = vmatprep.subr.mxu0 0.0
        %1482 = vmatpush1.msra.mxu0 0.0
        %1483 = vmatprep.subr.mxu0 0.0
        %1484 = vmatpush1.msra.mxu0 0.0
        %1485 = vmatprep.subr.mxu0 0.0
        %1486 = vmatpush1.msra.mxu0 0.0
        %1487 = vmatprep.mubr.f32.mxu0 0.0
        %1488 = vmatmul.mubr.f32.gmra.mrb[0].mxu0 %v1421
        %v1489 = vpop.f32.mrb[0].mxu0
        %v1490 = vadd.f32 %v1417, %v1489
        %v1491 = vpop.f32.mrb[0].mxu0
        %1492 = vdwg.mxu0
        %v1493 = vmul.f32 %v1490, 0.5
        %v1494 = vtanh.pop %v1493
        %v1495 = vadd.f32 %v1494, 1.0
        %v1496 = vmul.f32 %v1493, %v1495
        %v1497 = vld [vmem:[%s14] sm:$0xff]
        %v1498 = vld [vmem:[%s14 + $0x8] sm:$0xff]
        %v1499 = vld [vmem:[%s14 + $0x10] sm:$0xff]
        %v1500 = vld [vmem:[%s14 + $0x18] sm:$0xff]
        %v1501 = vld [vmem:[%s15] sm:$0x1]
        %v1503 = vlaneseq
        %v1504 = vshrl.u32 %v1503, 7
        %v1505 = vsub.s32 0, %v1504
        %v1506 = vrot.slane %v1501, %v1505
        %v1509 = vsel %vm925, %v1496, 0
        %1511 = vmatprep.subr.mxu0 0.0
        %1512 = vmatpush1.msra.mxu0 %v1497
        %1513 = vmatprep.subr.mxu0 0.0
        %1514 = vmatpush1.msra.mxu0 %v1498
        %1515 = vmatprep.subr.mxu0 0.0
        %1516 = vmatpush1.msra.mxu0 %v1499
        %1517 = vmatprep.subr.mxu0 0.0
        %1518 = vmatpush1.msra.mxu0 %v1500
        %1519 = vmatprep.subr.mxu0 0.0
        %1520 = vmatpush1.msra.mxu0 0.0
        %1521 = vmatprep.subr.mxu0 0.0
        %1522 = vmatpush1.msra.mxu0 0.0
        %1523 = vmatprep.subr.mxu0 0.0
        %1524 = vmatpush1.msra.mxu0 0.0
        %1525 = vmatprep.subr.mxu0 0.0
        %1526 = vmatpush1.msra.mxu0 0.0
        %1527 = vmatprep.subr.mxu0 0.0
        %1528 = vmatpush1.msra.mxu0 0.0
        %1529 = vmatprep.subr.mxu0 0.0
        %1530 = vmatpush1.msra.mxu0 0.0
        %1531 = vmatprep.subr.mxu0 0.0
        %1532 = vmatpush1.msra.mxu0 0.0
        %1533 = vmatprep.subr.mxu0 0.0
        %1534 = vmatpush1.msra.mxu0 0.0
        %1535 = vmatprep.subr.mxu0 0.0
        %1536 = vmatpush1.msra.mxu0 0.0
        %1537 = vmatprep.subr.mxu0 0.0
        %1538 = vmatpush1.msra.mxu0 0.0
        %1539 = vmatprep.subr.mxu0 0.0
        %1540 = vmatpush1.msra.mxu0 0.0
        %1541 = vmatprep.subr.mxu0 0.0
        %1542 = vmatpush1.msra.mxu0 0.0
        %1543 = vmatprep.subr.mxu0 0.0
        %1544 = vmatpush1.msra.mxu0 0.0
        %1545 = vmatprep.subr.mxu0 0.0
        %1546 = vmatpush1.msra.mxu0 0.0
        %1547 = vmatprep.subr.mxu0 0.0
        %1548 = vmatpush1.msra.mxu0 0.0
        %1549 = vmatprep.subr.mxu0 0.0
        %1550 = vmatpush1.msra.mxu0 0.0
        %1551 = vmatprep.subr.mxu0 0.0
        %1552 = vmatpush1.msra.mxu0 0.0
        %1553 = vmatprep.subr.mxu0 0.0
        %1554 = vmatpush1.msra.mxu0 0.0
        %1555 = vmatprep.subr.mxu0 0.0
        %1556 = vmatpush1.msra.mxu0 0.0
        %1557 = vmatprep.subr.mxu0 0.0
        %1558 = vmatpush1.msra.mxu0 0.0
        %1559 = vmatprep.subr.mxu0 0.0
        %1560 = vmatpush1.msra.mxu0 0.0
        %1561 = vmatprep.subr.mxu0 0.0
        %1562 = vmatpush1.msra.mxu0 0.0
        %1563 = vmatprep.subr.mxu0 0.0
        %1564 = vmatpush1.msra.mxu0 0.0
        %1565 = vmatprep.subr.mxu0 0.0
        %1566 = vmatpush1.msra.mxu0 0.0
        %1567 = vmatprep.subr.mxu0 0.0
        %1568 = vmatpush1.msra.mxu0 0.0
        %1569 = vmatprep.subr.mxu0 0.0
        %1570 = vmatpush1.msra.mxu0 0.0
        %1571 = vmatprep.subr.mxu0 0.0
        %1572 = vmatpush1.msra.mxu0 0.0
        %1573 = vmatprep.subr.mxu0 0.0
        %1574 = vmatpush1.msra.mxu0 0.0
        %1575 = vmatprep.mubr.f32.mxu0 0.0
        %1576 = vmatmul.mubr.f32.gmra.mrb[0].mxu0 %v1509
        %v1577 = vpop.f32.mrb[0].mxu0
        %v1578 = vadd.f32 %v1506, %v1577
        %v1579 = vpop.f32.mrb[0].mxu0
        %1580 = vdwg.mxu0
        %s1581 = scalar_lea.vmem %s7, 32
        %v1582 = vld [vmem:[%s1581] sm:$0xff]
        %v1583 = vld [vmem:[%s1581 + $0x8] sm:$0xff]
        %v1584 = vld [vmem:[%s1581 + $0x10] sm:$0xff]
        %v1585 = vld [vmem:[%s1581 + $0x18] sm:$0xff]
        %v1587 = vsel %vm925, %v1578, 0
        %1589 = vmatprep.subr.mxu0 0.0
        %1590 = vmatpush1.msra.mxu0 %v1582
        %1591 = vmatprep.subr.mxu0 0.0
        %1592 = vmatpush1.msra.mxu0 %v1583
        %1593 = vmatprep.subr.mxu0 0.0
        %1594 = vmatpush1.msra.mxu0 %v1584
        %1595 = vmatprep.subr.mxu0 0.0
        %1596 = vmatpush1.msra.mxu0 %v1585
        %1597 = vmatprep.subr.mxu0 0.0
        %1598 = vmatpush1.msra.mxu0 0.0
        %1599 = vmatprep.subr.mxu0 0.0
        %1600 = vmatpush1.msra.mxu0 0.0
        %1601 = vmatprep.subr.mxu0 0.0
        %1602 = vmatpush1.msra.mxu0 0.0
        %1603 = vmatprep.subr.mxu0 0.0
        %1604 = vmatpush1.msra.mxu0 0.0
        %1605 = vmatprep.subr.mxu0 0.0
        %1606 = vmatpush1.msra.mxu0 0.0
        %1607 = vmatprep.subr.mxu0 0.0
        %1608 = vmatpush1.msra.mxu0 0.0
        %1609 = vmatprep.subr.mxu0 0.0
        %1610 = vmatpush1.msra.mxu0 0.0
        %1611 = vmatprep.subr.mxu0 0.0
        %1612 = vmatpush1.msra.mxu0 0.0
        %1613 = vmatprep.subr.mxu0 0.0
        %1614 = vmatpush1.msra.mxu0 0.0
        %1615 = vmatprep.subr.mxu0 0.0
        %1616 = vmatpush1.msra.mxu0 0.0
        %1617 = vmatprep.subr.mxu0 0.0
        %1618 = vmatpush1.msra.mxu0 0.0
        %1619 = vmatprep.subr.mxu0 0.0
        %1620 = vmatpush1.msra.mxu0 0.0
        %1621 = vmatprep.subr.mxu0 0.0
        %1622 = vmatpush1.msra.mxu0 0.0
        %1623 = vmatprep.subr.mxu0 0.0
        %1624 = vmatpush1.msra.mxu0 0.0
        %1625 = vmatprep.subr.mxu0 0.0
        %1626 = vmatpush1.msra.mxu0 0.0
        %1627 = vmatprep.subr.mxu0 0.0
        %1628 = vmatpush1.msra.mxu0 0.0
        %1629 = vmatprep.subr.mxu0 0.0
        %1630 = vmatpush1.msra.mxu0 0.0
        %1631 = vmatprep.subr.mxu0 0.0
        %1632 = vmatpush1.msra.mxu0 0.0
        %1633 = vmatprep.subr.mxu0 0.0
        %1634 = vmatpush1.msra.mxu0 0.0
        %1635 = vmatprep.subr.mxu0 0.0
        %1636 = vmatpush1.msra.mxu0 0.0
        %1637 = vmatprep.subr.mxu0 0.0
        %1638 = vmatpush1.msra.mxu0 0.0
        %1639 = vmatprep.subr.mxu0 0.0
        %1640 = vmatpush1.msra.mxu0 0.0
        %1641 = vmatprep.subr.mxu0 0.0
        %1642 = vmatpush1.msra.mxu0 0.0
        %1643 = vmatprep.subr.mxu0 0.0
        %1644 = vmatpush1.msra.mxu0 0.0
        %1645 = vmatprep.subr.mxu0 0.0
        %1646 = vmatpush1.msra.mxu0 0.0
        %1647 = vmatprep.subr.mxu0 0.0
        %1648 = vmatpush1.msra.mxu0 0.0
        %1649 = vmatprep.subr.mxu0 0.0
        %1650 = vmatpush1.msra.mxu0 0.0
        %1651 = vmatprep.subr.mxu0 0.0
        %1652 = vmatpush1.msra.mxu0 0.0
        %1653 = vmatprep.mubr.f32.mxu0 0.0
        %1654 = vmatmul.mubr.f32.gmra.mrb[0].mxu0 %v1587
        %v1655 = vpop.f32.mrb[0].mxu0
        %v1656 = vadd.f32 0.0, %v1655
        %v1657 = vpop.f32.mrb[0].mxu0
        %1658 = vdwg.mxu0
        %s1659 = scalar_lea.vmem %s8, 1
        %v1660 = vld [vmem:[%s1659] sm:$0x1]
        %1662 = vrot.lane.b32.xlu0 %v1656, 96
        %v1663 = vpop.permute.xlu0 %1662
        %s1665 = scalar_lea.vmem %s9, 1
        %v1666 = vld [vmem:[%s1665] sm:$0x1]
        %v1668 = vlaneseq
        %v1669 = vshrl.u32 %v1668, 7
        %v1670 = vsub.s32 0, %v1669
        %v1671 = vrot.slane %v1666, %v1670
        %v1674 = vsel %vm1033, %v1660, 0
        %1676 = vmatprep.subr.mxu0 0.0
        %1677 = vmatpush1.msra.mxu0 %v1656
        %1678 = vmatprep.subr.mxu0 0.0
        %1679 = vmatpush1.msra.mxu0 %v1663
        %1680 = vmatprep.subr.mxu0 0.0
        %1681 = vmatpush1.msra.mxu0 %v1674
        %1682 = vmatprep.subr.mxu0 0.0
        %1683 = vmatpush1.msra.mxu0 0.0
        %1684 = vmatprep.subr.mxu0 0.0
        %1685 = vmatpush1.msra.mxu0 0.0
        %1686 = vmatprep.subr.mxu0 0.0
        %1687 = vmatpush1.msra.mxu0 0.0
        %1688 = vmatprep.subr.mxu0 0.0
        %1689 = vmatpush1.msra.mxu0 0.0
        %1690 = vmatprep.subr.mxu0 0.0
        %1691 = vmatpush1.msra.mxu0 0.0
        %1692 = vmatprep.subr.mxu0 0.0
        %1693 = vmatpush1.msra.mxu0 0.0
        %1694 = vmatprep.subr.mxu0 0.0
        %1695 = vmatpush1.msra.mxu0 0.0
        %1696 = vmatprep.subr.mxu0 0.0
        %1697 = vmatpush1.msra.mxu0 0.0
        %1698 = vmatprep.subr.mxu0 0.0
        %1699 = vmatpush1.msra.mxu0 0.0
        %1700 = vmatprep.subr.mxu0 0.0
        %1701 = vmatpush1.msra.mxu0 0.0
        %1702 = vmatprep.subr.mxu0 0.0
        %1703 = vmatpush1.msra.mxu0 0.0
        %1704 = vmatprep.subr.mxu0 0.0
        %1705 = vmatpush1.msra.mxu0 0.0
        %1706 = vmatprep.subr.mxu0 0.0
        %1707 = vmatpush1.msra.mxu0 0.0
        %1708 = vmatprep.subr.mxu0 0.0
        %1709 = vmatpush1.msra.mxu0 0.0
        %1710 = vmatprep.subr.mxu0 0.0
        %1711 = vmatpush1.msra.mxu0 0.0
        %1712 = vmatprep.subr.mxu0 0.0
        %1713 = vmatpush1.msra.mxu0 0.0
        %1714 = vmatprep.subr.mxu0 0.0
        %1715 = vmatpush1.msra.mxu0 0.0
        %1716 = vmatprep.subr.mxu0 0.0
        %1717 = vmatpush1.msra.mxu0 0.0
        %1718 = vmatprep.subr.mxu0 0.0
        %1719 = vmatpush1.msra.mxu0 0.0
        %1720 = vmatprep.subr.mxu0 0.0
        %1721 = vmatpush1.msra.mxu0 0.0
        %1722 = vmatprep.subr.mxu0 0.0
        %1723 = vmatpush1.msra.mxu0 0.0
        %1724 = vmatprep.subr.mxu0 0.0
        %1725 = vmatpush1.msra.mxu0 0.0
        %1726 = vmatprep.subr.mxu0 0.0
        %1727 = vmatpush1.msra.mxu0 0.0
        %1728 = vmatprep.subr.mxu0 0.0
        %1729 = vmatpush1.msra.mxu0 0.0
        %1730 = vmatprep.subr.mxu0 0.0
        %1731 = vmatpush1.msra.mxu0 0.0
        %1732 = vmatprep.subr.mxu0 0.0
        %1733 = vmatpush1.msra.mxu0 0.0
        %1734 = vmatprep.subr.mxu0 0.0
        %1735 = vmatpush1.msra.mxu0 0.0
        %1736 = vmatprep.subr.mxu0 0.0
        %1737 = vmatpush1.msra.mxu0 0.0
        %1738 = vmatprep.subr.mxu0 0.0
        %1739 = vmatpush1.msra.mxu0 0.0
        %1740 = vmatprep.mubr.f32.mxu0 0.0
        %1741 = vmatmul.mubr.f32.gmra.mrb[0].mxu0 %v1013
        %v1742 = vpop.f32.mrb[0].mxu0
        %v1743 = vadd.f32 %v1671, %v1742
        %v1744 = vpop.f32.mrb[0].mxu0
        %1745 = vmatprep.mubr.f32.mxu0 0.0
        %1746 = vmatmul.mubr.f32.gmra.mrb[0].mxu0 %v1016
        %v1747 = vpop.f32.mrb[0].mxu0
        %v1748 = vadd.f32 %v1671, %v1747
        %v1749 = vpop.f32.mrb[0].mxu0
        %1750 = vmatprep.mubr.f32.mxu0 0.0
        %1751 = vmatmul.mubr.f32.gmra.mrb[0].mxu0 %v1019
        %v1752 = vpop.f32.mrb[0].mxu0
        %v1753 = vadd.f32 %v1671, %v1752
        %v1754 = vpop.f32.mrb[0].mxu0
        %1755 = vmatprep.mubr.f32.mxu0 0.0
        %1756 = vmatmul.mubr.f32.gmra.mrb[0].mxu0 %v1022
        %v1757 = vpop.f32.mrb[0].mxu0
        %v1758 = vadd.f32 %v1671, %v1757
        %v1759 = vpop.f32.mrb[0].mxu0
        %1760 = vmatprep.mubr.f32.mxu0 0.0
        %1761 = vmatmul.mubr.f32.gmra.mrb[0].mxu0 %v1025
        %v1762 = vpop.f32.mrb[0].mxu0
        %v1763 = vadd.f32 %v1671, %v1762
        %v1764 = vpop.f32.mrb[0].mxu0
        %1765 = vmatprep.mubr.f32.mxu0 0.0
        %1766 = vmatmul.mubr.f32.gmra.mrb[0].mxu0 %v1028
        %v1767 = vpop.f32.mrb[0].mxu0
        %v1768 = vadd.f32 %v1671, %v1767
        %v1769 = vpop.f32.mrb[0].mxu0
        %1770 = vmatprep.mubr.f32.mxu0 0.0
        %1771 = vmatmul.mubr.f32.gmra.mrb[0].mxu0 %v1031
        %v1772 = vpop.f32.mrb[0].mxu0
        %v1773 = vadd.f32 %v1671, %v1772
        %v1774 = vpop.f32.mrb[0].mxu0
        %1775 = vdwg.mxu0
        %v1776 = vmul.f32 %v1743, 0.5
        %v1777 = vmul.f32 %v1748, 0.5
        %v1778 = vmul.f32 %v1753, 0.5
        %v1779 = vmul.f32 %v1758, 0.5
        %v1780 = vmul.f32 %v1763, 0.5
        %v1781 = vmul.f32 %v1768, 0.5
        %v1782 = vmul.f32 %v1773, 0.5
        %v1783 = vtanh.pop %v1776
        %v1784 = vtanh.pop %v1777
        %v1785 = vtanh.pop %v1778
        %v1786 = vtanh.pop %v1779
        %v1787 = vtanh.pop %v1780
        %v1788 = vtanh.pop %v1781
        %v1789 = vtanh.pop %v1782
        %v1790 = vadd.f32 %v1783, 1.0
        %v1791 = vadd.f32 %v1784, 1.0
        %v1792 = vadd.f32 %v1785, 1.0
        %v1793 = vadd.f32 %v1786, 1.0
        %v1794 = vadd.f32 %v1787, 1.0
        %v1795 = vadd.f32 %v1788, 1.0
        %v1796 = vadd.f32 %v1789, 1.0
        %v1797 = vmul.f32 %v1776, %v1790
        %v1798 = vmul.f32 %v1777, %v1791
        %v1799 = vmul.f32 %v1778, %v1792
        %v1800 = vmul.f32 %v1779, %v1793
        %v1801 = vmul.f32 %v1780, %v1794
        %v1802 = vmul.f32 %v1781, %v1795
        %v1803 = vmul.f32 %v1782, %v1796
        %s1804 = scalar_lea.vmem %s10, 32
        %v1805 = vld [vmem:[%s1804] sm:$0xff]
        %v1806 = vld [vmem:[%s1804 + $0x8] sm:$0xff]
        %v1807 = vld [vmem:[%s1804 + $0x10] sm:$0xff]
        %v1808 = vld [vmem:[%s1804 + $0x18] sm:$0xff]
        %s1809 = scalar_lea.vmem %s11, 1
        %v1810 = vld [vmem:[%s1809] sm:$0x1]
        %v1812 = vlaneseq
        %v1813 = vshrl.u32 %v1812, 7
        %v1814 = vsub.s32 0, %v1813
        %v1815 = vrot.slane %v1810, %v1814
        %v1818 = vsel %vm925, %v1797, 0
        %v1821 = vsel %vm925, %v1798, 0
        %v1824 = vsel %vm925, %v1799, 0
        %v1827 = vsel %vm925, %v1800, 0
        %v1830 = vsel %vm925, %v1801, 0
        %v1833 = vsel %vm925, %v1802, 0
        %v1836 = vsel %vm925, %v1803, 0
        %1838 = vmatprep.subr.mxu0 0.0
        %1839 = vmatpush1.msra.mxu0 %v1805
        %1840 = vmatprep.subr.mxu0 0.0
        %1841 = vmatpush1.msra.mxu0 %v1806
        %1842 = vmatprep.subr.mxu0 0.0
        %1843 = vmatpush1.msra.mxu0 %v1807
        %1844 = vmatprep.subr.mxu0 0.0
        %1845 = vmatpush1.msra.mxu0 %v1808
        %1846 = vmatprep.subr.mxu0 0.0
        %1847 = vmatpush1.msra.mxu0 0.0
        %1848 = vmatprep.subr.mxu0 0.0
        %1849 = vmatpush1.msra.mxu0 0.0
        %1850 = vmatprep.subr.mxu0 0.0
        %1851 = vmatpush1.msra.mxu0 0.0
        %1852 = vmatprep.subr.mxu0 0.0
        %1853 = vmatpush1.msra.mxu0 0.0
        %1854 = vmatprep.subr.mxu0 0.0
        %1855 = vmatpush1.msra.mxu0 0.0
        %1856 = vmatprep.subr.mxu0 0.0
        %1857 = vmatpush1.msra.mxu0 0.0
        %1858 = vmatprep.subr.mxu0 0.0
        %1859 = vmatpush1.msra.mxu0 0.0
        %1860 = vmatprep.subr.mxu0 0.0
        %1861 = vmatpush1.msra.mxu0 0.0
        %1862 = vmatprep.subr.mxu0 0.0
        %1863 = vmatpush1.msra.mxu0 0.0
        %1864 = vmatprep.subr.mxu0 0.0
        %1865 = vmatpush1.msra.mxu0 0.0
        %1866 = vmatprep.subr.mxu0 0.0
        %1867 = vmatpush1.msra.mxu0 0.0
        %1868 = vmatprep.subr.mxu0 0.0
        %1869 = vmatpush1.msra.mxu0 0.0
        %1870 = vmatprep.subr.mxu0 0.0
        %1871 = vmatpush1.msra.mxu0 0.0
        %1872 = vmatprep.subr.mxu0 0.0
        %1873 = vmatpush1.msra.mxu0 0.0
        %1874 = vmatprep.subr.mxu0 0.0
        %1875 = vmatpush1.msra.mxu0 0.0
        %1876 = vmatprep.subr.mxu0 0.0
        %1877 = vmatpush1.msra.mxu0 0.0
        %1878 = vmatprep.subr.mxu0 0.0
        %1879 = vmatpush1.msra.mxu0 0.0
        %1880 = vmatprep.subr.mxu0 0.0
        %1881 = vmatpush1.msra.mxu0 0.0
        %1882 = vmatprep.subr.mxu0 0.0
        %1883 = vmatpush1.msra.mxu0 0.0
        %1884 = vmatprep.subr.mxu0 0.0
        %1885 = vmatpush1.msra.mxu0 0.0
        %1886 = vmatprep.subr.mxu0 0.0
        %1887 = vmatpush1.msra.mxu0 0.0
        %1888 = vmatprep.subr.mxu0 0.0
        %1889 = vmatpush1.msra.mxu0 0.0
        %1890 = vmatprep.subr.mxu0 0.0
        %1891 = vmatpush1.msra.mxu0 0.0
        %1892 = vmatprep.subr.mxu0 0.0
        %1893 = vmatpush1.msra.mxu0 0.0
        %1894 = vmatprep.subr.mxu0 0.0
        %1895 = vmatpush1.msra.mxu0 0.0
        %1896 = vmatprep.subr.mxu0 0.0
        %1897 = vmatpush1.msra.mxu0 0.0
        %1898 = vmatprep.subr.mxu0 0.0
        %1899 = vmatpush1.msra.mxu0 0.0
        %1900 = vmatprep.subr.mxu0 0.0
        %1901 = vmatpush1.msra.mxu0 0.0
        %1902 = vmatprep.mubr.f32.mxu0 0.0
        %1903 = vmatmul.mubr.f32.gmra.mrb[0].mxu0 %v1818
        %v1904 = vpop.f32.mrb[0].mxu0
        %v1905 = vadd.f32 %v1815, %v1904
        %v1906 = vpop.f32.mrb[0].mxu0
        %1907 = vmatprep.mubr.f32.mxu0 0.0
        %1908 = vmatmul.mubr.f32.gmra.mrb[0].mxu0 %v1821
        %v1909 = vpop.f32.mrb[0].mxu0
        %v1910 = vadd.f32 %v1815, %v1909
        %v1911 = vpop.f32.mrb[0].mxu0
        %1912 = vmatprep.mubr.f32.mxu0 0.0
        %1913 = vmatmul.mubr.f32.gmra.mrb[0].mxu0 %v1824
        %v1914 = vpop.f32.mrb[0].mxu0
        %v1915 = vadd.f32 %v1815, %v1914
        %v1916 = vpop.f32.mrb[0].mxu0
        %1917 = vmatprep.mubr.f32.mxu0 0.0
        %1918 = vmatmul.mubr.f32.gmra.mrb[0].mxu0 %v1827
        %v1919 = vpop.f32.mrb[0].mxu0
        %v1920 = vadd.f32 %v1815, %v1919
        %v1921 = vpop.f32.mrb[0].mxu0
        %1922 = vmatprep.mubr.f32.mxu0 0.0
        %1923 = vmatmul.mubr.f32.gmra.mrb[0].mxu0 %v1830
        %v1924 = vpop.f32.mrb[0].mxu0
        %v1925 = vadd.f32 %v1815, %v1924
        %v1926 = vpop.f32.mrb[0].mxu0
        %1927 = vmatprep.mubr.f32.mxu0 0.0
        %1928 = vmatmul.mubr.f32.gmra.mrb[0].mxu0 %v1833
        %v1929 = vpop.f32.mrb[0].mxu0
        %v1930 = vadd.f32 %v1815, %v1929
        %v1931 = vpop.f32.mrb[0].mxu0
        %1932 = vmatprep.mubr.f32.mxu0 0.0
        %1933 = vmatmul.mubr.f32.gmra.mrb[0].mxu0 %v1836
        %v1934 = vpop.f32.mrb[0].mxu0
        %v1935 = vadd.f32 %v1815, %v1934
        %v1936 = vpop.f32.mrb[0].mxu0
        %1937 = vdwg.mxu0
        %v1938 = vmul.f32 %v1905, 0.5
        %v1939 = vmul.f32 %v1910, 0.5
        %v1940 = vmul.f32 %v1915, 0.5
        %v1941 = vmul.f32 %v1920, 0.5
        %v1942 = vmul.f32 %v1925, 0.5
        %v1943 = vmul.f32 %v1930, 0.5
        %v1944 = vmul.f32 %v1935, 0.5
        %v1945 = vtanh.pop %v1938
        %v1946 = vtanh.pop %v1939
        %v1947 = vtanh.pop %v1940
        %v1948 = vtanh.pop %v1941
        %v1949 = vtanh.pop %v1942
        %v1950 = vtanh.pop %v1943
        %v1951 = vtanh.pop %v1944
        %v1952 = vadd.f32 %v1945, 1.0
        %v1953 = vadd.f32 %v1946, 1.0
        %v1954 = vadd.f32 %v1947, 1.0
        %v1955 = vadd.f32 %v1948, 1.0
        %v1956 = vadd.f32 %v1949, 1.0
        %v1957 = vadd.f32 %v1950, 1.0
        %v1958 = vadd.f32 %v1951, 1.0
        %v1959 = vmul.f32 %v1938, %v1952
        %v1960 = vmul.f32 %v1939, %v1953
        %v1961 = vmul.f32 %v1940, %v1954
        %v1962 = vmul.f32 %v1941, %v1955
        %v1963 = vmul.f32 %v1942, %v1956
        %v1964 = vmul.f32 %v1943, %v1957
        %v1965 = vmul.f32 %v1944, %v1958
        %1966 = vmatprep.subr.mxu0 0.0
        %1967 = vmatpush1.msra.mxu0 %v1959
        %1968 = vmatprep.subr.mxu0 0.0
        %1969 = vmatpush1.msra.mxu0 %v1960
        %1970 = vmatprep.subr.mxu0 0.0
        %1971 = vmatpush1.msra.mxu0 %v1961
        %1972 = vmatprep.subr.mxu0 0.0
        %1973 = vmatpush1.msra.mxu0 %v1962
        %1974 = vmatprep.subr.mxu0 0.0
        %1975 = vmatpush1.msra.mxu0 %v1963
        %1976 = vmatprep.subr.mxu0 0.0
        %1977 = vmatpush1.msra.mxu0 %v1964
        %1978 = vmatprep.subr.mxu0 0.0
        %1979 = vmatpush1.msra.mxu0 %v1965
        %1980 = vmatprep.subr.mxu0 0.0
        %1981 = vmatpush1.msra.mxu0 0.0
        %1982 = vmatprep.subr.mxu0 0.0
        %1983 = vmatpush1.msra.mxu0 0.0
        %1984 = vmatprep.subr.mxu0 0.0
        %1985 = vmatpush1.msra.mxu0 0.0
        %1986 = vmatprep.subr.mxu0 0.0
        %1987 = vmatpush1.msra.mxu0 0.0
        %1988 = vmatprep.subr.mxu0 0.0
        %1989 = vmatpush1.msra.mxu0 0.0
        %1990 = vmatprep.subr.mxu0 0.0
        %1991 = vmatpush1.msra.mxu0 0.0
        %1992 = vmatprep.subr.mxu0 0.0
        %1993 = vmatpush1.msra.mxu0 0.0
        %1994 = vmatprep.subr.mxu0 0.0
        %1995 = vmatpush1.msra.mxu0 0.0
        %1996 = vmatprep.subr.mxu0 0.0
        %1997 = vmatpush1.msra.mxu0 0.0
        %1998 = vmatprep.subr.mxu0 0.0
        %1999 = vmatpush1.msra.mxu0 0.0
        %2000 = vmatprep.subr.mxu0 0.0
        %2001 = vmatpush1.msra.mxu0 0.0
        %2002 = vmatprep.subr.mxu0 0.0
        %2003 = vmatpush1.msra.mxu0 0.0
        %2004 = vmatprep.subr.mxu0 0.0
        %2005 = vmatpush1.msra.mxu0 0.0
        %2006 = vmatprep.subr.mxu0 0.0
        %2007 = vmatpush1.msra.mxu0 0.0
        %2008 = vmatprep.subr.mxu0 0.0
        %2009 = vmatpush1.msra.mxu0 0.0
        %2010 = vmatprep.subr.mxu0 0.0
        %2011 = vmatpush1.msra.mxu0 0.0
        %2012 = vmatprep.subr.mxu0 0.0
        %2013 = vmatpush1.msra.mxu0 0.0
        %2014 = vmatprep.subr.mxu0 0.0
        %2015 = vmatpush1.msra.mxu0 0.0
        %2016 = vmatprep.subr.mxu0 0.0
        %2017 = vmatpush1.msra.mxu0 0.0
        %2018 = vmatprep.subr.mxu0 0.0
        %2019 = vmatpush1.msra.mxu0 0.0
        %2020 = vmatprep.subr.mxu0 0.0
        %2021 = vmatpush1.msra.mxu0 0.0
        %2022 = vmatprep.subr.mxu0 0.0
        %2023 = vmatpush1.msra.mxu0 0.0
        %2024 = vmatprep.subr.mxu0 0.0
        %2025 = vmatpush1.msra.mxu0 0.0
        %2026 = vmatprep.subr.mxu0 0.0
        %2027 = vmatpush1.msra.mxu0 0.0
        %2028 = vmatprep.subr.mxu0 0.0
        %2029 = vmatpush1.msra.mxu0 0.0
        %2030 = vmatprep.mubr.f32.mxu0 0.0
        %2031 = vmatmul.mubr.f32.gmra.mrb[0].mxu0 %v1327
        %v2032 = vpop.f32.mrb[0].mxu0
        %v2033 = vadd.f32 0.0, %v2032
        %v2034 = vpop.f32.mrb[0].mxu0
        %2035 = vdwg.mxu0
        %2037 = vrot.lane.b32.xlu0 %v2033, 32
        %v2038 = vpop.permute.xlu0 %2037
        %v2040 = vsel %vm925, %v1578, %v2038
        %s2041 = scalar_lea.vmem %s12, 64
        %v2042 = vld [vmem:[%s2041] sm:$0xff]
        %v2043 = vld [vmem:[%s2041 + $0x8] sm:$0xff]
        %v2044 = vld [vmem:[%s2041 + $0x10] sm:$0xff]
        %v2045 = vld [vmem:[%s2041 + $0x18] sm:$0xff]
        %v2046 = vld [vmem:[%s2041 + $0x20] sm:$0xff]
        %v2047 = vld [vmem:[%s2041 + $0x28] sm:$0xff]
        %v2048 = vld [vmem:[%s2041 + $0x30] sm:$0xff]
        %v2049 = vld [vmem:[%s2041 + $0x38] sm:$0xff]
        %s2050 = scalar_lea.vmem %s13, 1
        %v2051 = vld [vmem:[%s2050] sm:$0x1]
        %v2053 = vlaneseq
        %v2054 = vshrl.u32 %v2053, 7
        %v2055 = vsub.s32 0, %v2054
        %v2056 = vrot.slane %v2051, %v2055
        %v2059 = vsel %vm1419, %v2040, 0
        %2061 = vmatprep.subr.mxu0 0.0
        %2062 = vmatpush1.msra.mxu0 %v2042
        %2063 = vmatprep.subr.mxu0 0.0
        %2064 = vmatpush1.msra.mxu0 %v2043
        %2065 = vmatprep.subr.mxu0 0.0
        %2066 = vmatpush1.msra.mxu0 %v2044
        %2067 = vmatprep.subr.mxu0 0.0
        %2068 = vmatpush1.msra.mxu0 %v2045
        %2069 = vmatprep.subr.mxu0 0.0
        %2070 = vmatpush1.msra.mxu0 %v2046
        %2071 = vmatprep.subr.mxu0 0.0
        %2072 = vmatpush1.msra.mxu0 %v2047
        %2073 = vmatprep.subr.mxu0 0.0
        %2074 = vmatpush1.msra.mxu0 %v2048
        %2075 = vmatprep.subr.mxu0 0.0
        %2076 = vmatpush1.msra.mxu0 %v2049
        %2077 = vmatprep.subr.mxu0 0.0
        %2078 = vmatpush1.msra.mxu0 0.0
        %2079 = vmatprep.subr.mxu0 0.0
        %2080 = vmatpush1.msra.mxu0 0.0
        %2081 = vmatprep.subr.mxu0 0.0
        %2082 = vmatpush1.msra.mxu0 0.0
        %2083 = vmatprep.subr.mxu0 0.0
        %2084 = vmatpush1.msra.mxu0 0.0
        %2085 = vmatprep.subr.mxu0 0.0
        %2086 = vmatpush1.msra.mxu0 0.0
        %2087 = vmatprep.subr.mxu0 0.0
        %2088 = vmatpush1.msra.mxu0 0.0
        %2089 = vmatprep.subr.mxu0 0.0
        %2090 = vmatpush1.msra.mxu0 0.0
        %2091 = vmatprep.subr.mxu0 0.0
        %2092 = vmatpush1.msra.mxu0 0.0
        %2093 = vmatprep.subr.mxu0 0.0
        %2094 = vmatpush1.msra.mxu0 0.0
        %2095 = vmatprep.subr.mxu0 0.0
        %2096 = vmatpush1.msra.mxu0 0.0
        %2097 = vmatprep.subr.mxu0 0.0
        %2098 = vmatpush1.msra.mxu0 0.0
        %2099 = vmatprep.subr.mxu0 0.0
        %2100 = vmatpush1.msra.mxu0 0.0
        %2101 = vmatprep.subr.mxu0 0.0
        %2102 = vmatpush1.msra.mxu0 0.0
        %2103 = vmatprep.subr.mxu0 0.0
        %2104 = vmatpush1.msra.mxu0 0.0
        %2105 = vmatprep.subr.mxu0 0.0
        %2106 = vmatpush1.msra.mxu0 0.0
        %2107 = vmatprep.subr.mxu0 0.0
        %2108 = vmatpush1.msra.mxu0 0.0
        %2109 = vmatprep.subr.mxu0 0.0
        %2110 = vmatpush1.msra.mxu0 0.0
        %2111 = vmatprep.subr.mxu0 0.0
        %2112 = vmatpush1.msra.mxu0 0.0
        %2113 = vmatprep.subr.mxu0 0.0
        %2114 = vmatpush1.msra.mxu0 0.0
        %2115 = vmatprep.subr.mxu0 0.0
        %2116 = vmatpush1.msra.mxu0 0.0
        %2117 = vmatprep.subr.mxu0 0.0
        %2118 = vmatpush1.msra.mxu0 0.0
        %2119 = vmatprep.subr.mxu0 0.0
        %2120 = vmatpush1.msra.mxu0 0.0
        %2121 = vmatprep.subr.mxu0 0.0
        %2122 = vmatpush1.msra.mxu0 0.0
        %2123 = vmatprep.subr.mxu0 0.0
        %2124 = vmatpush1.msra.mxu0 0.0
        %2125 = vmatprep.mubr.f32.mxu0 0.0
        %2126 = vmatmul.mubr.f32.gmra.mrb[0].mxu0 %v2059
        %v2127 = vpop.f32.mrb[0].mxu0
        %v2128 = vadd.f32 %v2056, %v2127
        %v2129 = vpop.f32.mrb[0].mxu0
        %2130 = vdwg.mxu0
        %v2131 = vmul.f32 %v2128, 0.5
        %v2132 = vtanh.pop %v2131
        %v2133 = vadd.f32 %v2132, 1.0
        %v2134 = vmul.f32 %v2131, %v2133
        %s2135 = scalar_lea.vmem %s14, 32
        %v2136 = vld [vmem:[%s2135] sm:$0xff]
        %v2137 = vld [vmem:[%s2135 + $0x8] sm:$0xff]
        %v2138 = vld [vmem:[%s2135 + $0x10] sm:$0xff]
        %v2139 = vld [vmem:[%s2135 + $0x18] sm:$0xff]
        %s2140 = scalar_lea.vmem %s15, 1
        %v2141 = vld [vmem:[%s2140] sm:$0x1]
        %v2143 = vlaneseq
        %v2144 = vshrl.u32 %v2143, 7
        %v2145 = vsub.s32 0, %v2144
        %v2146 = vrot.slane %v2141, %v2145
        %v2149 = vsel %vm925, %v2134, 0
        %2151 = vmatprep.subr.mxu0 0.0
        %2152 = vmatpush1.msra.mxu0 %v2136
        %2153 = vmatprep.subr.mxu0 0.0
        %2154 = vmatpush1.msra.mxu0 %v2137
        %2155 = vmatprep.subr.mxu0 0.0
        %2156 = vmatpush1.msra.mxu0 %v2138
        %2157 = vmatprep.subr.mxu0 0.0
        %2158 = vmatpush1.msra.mxu0 %v2139
        %2159 = vmatprep.subr.mxu0 0.0
        %2160 = vmatpush1.msra.mxu0 0.0
        %2161 = vmatprep.subr.mxu0 0.0
        %2162 = vmatpush1.msra.mxu0 0.0
        %2163 = vmatprep.subr.mxu0 0.0
        %2164 = vmatpush1.msra.mxu0 0.0
        %2165 = vmatprep.subr.mxu0 0.0
        %2166 = vmatpush1.msra.mxu0 0.0
        %2167 = vmatprep.subr.mxu0 0.0
        %2168 = vmatpush1.msra.mxu0 0.0
        %2169 = vmatprep.subr.mxu0 0.0
        %2170 = vmatpush1.msra.mxu0 0.0
        %2171 = vmatprep.subr.mxu0 0.0
        %2172 = vmatpush1.msra.mxu0 0.0
        %2173 = vmatprep.subr.mxu0 0.0
        %2174 = vmatpush1.msra.mxu0 0.0
        %2175 = vmatprep.subr.mxu0 0.0
        %2176 = vmatpush1.msra.mxu0 0.0
        %2177 = vmatprep.subr.mxu0 0.0
        %2178 = vmatpush1.msra.mxu0 0.0
        %2179 = vmatprep.subr.mxu0 0.0
        %2180 = vmatpush1.msra.mxu0 0.0
        %2181 = vmatprep.subr.mxu0 0.0
        %2182 = vmatpush1.msra.mxu0 0.0
        %2183 = vmatprep.subr.mxu0 0.0
        %2184 = vmatpush1.msra.mxu0 0.0
        %2185 = vmatprep.subr.mxu0 0.0
        %2186 = vmatpush1.msra.mxu0 0.0
        %2187 = vmatprep.subr.mxu0 0.0
        %2188 = vmatpush1.msra.mxu0 0.0
        %2189 = vmatprep.subr.mxu0 0.0
        %2190 = vmatpush1.msra.mxu0 0.0
        %2191 = vmatprep.subr.mxu0 0.0
        %2192 = vmatpush1.msra.mxu0 0.0
        %2193 = vmatprep.subr.mxu0 0.0
        %2194 = vmatpush1.msra.mxu0 0.0
        %2195 = vmatprep.subr.mxu0 0.0
        %2196 = vmatpush1.msra.mxu0 0.0
        %2197 = vmatprep.subr.mxu0 0.0
        %2198 = vmatpush1.msra.mxu0 0.0
        %2199 = vmatprep.subr.mxu0 0.0
        %2200 = vmatpush1.msra.mxu0 0.0
        %2201 = vmatprep.subr.mxu0 0.0
        %2202 = vmatpush1.msra.mxu0 0.0
        %2203 = vmatprep.subr.mxu0 0.0
        %2204 = vmatpush1.msra.mxu0 0.0
        %2205 = vmatprep.subr.mxu0 0.0
        %2206 = vmatpush1.msra.mxu0 0.0
        %2207 = vmatprep.subr.mxu0 0.0
        %2208 = vmatpush1.msra.mxu0 0.0
        %2209 = vmatprep.subr.mxu0 0.0
        %2210 = vmatpush1.msra.mxu0 0.0
        %2211 = vmatprep.subr.mxu0 0.0
        %2212 = vmatpush1.msra.mxu0 0.0
        %2213 = vmatprep.subr.mxu0 0.0
        %2214 = vmatpush1.msra.mxu0 0.0
        %2215 = vmatprep.mubr.f32.mxu0 0.0
        %2216 = vmatmul.mubr.f32.gmra.mrb[0].mxu0 %v2149
        %v2217 = vpop.f32.mrb[0].mxu0
        %v2218 = vadd.f32 %v2146, %v2217
        %v2219 = vpop.f32.mrb[0].mxu0
        %2220 = vdwg.mxu0
        %s2221 = scalar_lea.vmem %s7, 64
        %v2222 = vld [vmem:[%s2221] sm:$0xff]
        %v2223 = vld [vmem:[%s2221 + $0x8] sm:$0xff]
        %v2224 = vld [vmem:[%s2221 + $0x10] sm:$0xff]
        %v2225 = vld [vmem:[%s2221 + $0x18] sm:$0xff]
        %v2227 = vsel %vm925, %v2218, 0
        %2229 = vmatprep.subr.mxu0 0.0
        %2230 = vmatpush1.msra.mxu0 %v2222
        %2231 = vmatprep.subr.mxu0 0.0
        %2232 = vmatpush1.msra.mxu0 %v2223
        %2233 = vmatprep.subr.mxu0 0.0
        %2234 = vmatpush1.msra.mxu0 %v2224
        %2235 = vmatprep.subr.mxu0 0.0
        %2236 = vmatpush1.msra.mxu0 %v2225
        %2237 = vmatprep.subr.mxu0 0.0
        %2238 = vmatpush1.msra.mxu0 0.0
        %2239 = vmatprep.subr.mxu0 0.0
        %2240 = vmatpush1.msra.mxu0 0.0
        %2241 = vmatprep.subr.mxu0 0.0
        %2242 = vmatpush1.msra.mxu0 0.0
        %2243 = vmatprep.subr.mxu0 0.0
        %2244 = vmatpush1.msra.mxu0 0.0
        %2245 = vmatprep.subr.mxu0 0.0
        %2246 = vmatpush1.msra.mxu0 0.0
        %2247 = vmatprep.subr.mxu0 0.0
        %2248 = vmatpush1.msra.mxu0 0.0
        %2249 = vmatprep.subr.mxu0 0.0
        %2250 = vmatpush1.msra.mxu0 0.0
        %2251 = vmatprep.subr.mxu0 0.0
        %2252 = vmatpush1.msra.mxu0 0.0
        %2253 = vmatprep.subr.mxu0 0.0
        %2254 = vmatpush1.msra.mxu0 0.0
        %2255 = vmatprep.subr.mxu0 0.0
        %2256 = vmatpush1.msra.mxu0 0.0
        %2257 = vmatprep.subr.mxu0 0.0
        %2258 = vmatpush1.msra.mxu0 0.0
        %2259 = vmatprep.subr.mxu0 0.0
        %2260 = vmatpush1.msra.mxu0 0.0
        %2261 = vmatprep.subr.mxu0 0.0
        %2262 = vmatpush1.msra.mxu0 0.0
        %2263 = vmatprep.subr.mxu0 0.0
        %2264 = vmatpush1.msra.mxu0 0.0
        %2265 = vmatprep.subr.mxu0 0.0
        %2266 = vmatpush1.msra.mxu0 0.0
        %2267 = vmatprep.subr.mxu0 0.0
        %2268 = vmatpush1.msra.mxu0 0.0
        %2269 = vmatprep.subr.mxu0 0.0
        %2270 = vmatpush1.msra.mxu0 0.0
        %2271 = vmatprep.subr.mxu0 0.0
        %2272 = vmatpush1.msra.mxu0 0.0
        %2273 = vmatprep.subr.mxu0 0.0
        %2274 = vmatpush1.msra.mxu0 0.0
        %2275 = vmatprep.subr.mxu0 0.0
        %2276 = vmatpush1.msra.mxu0 0.0
        %2277 = vmatprep.subr.mxu0 0.0
        %2278 = vmatpush1.msra.mxu0 0.0
        %2279 = vmatprep.subr.mxu0 0.0
        %2280 = vmatpush1.msra.mxu0 0.0
        %2281 = vmatprep.subr.mxu0 0.0
        %2282 = vmatpush1.msra.mxu0 0.0
        %2283 = vmatprep.subr.mxu0 0.0
        %2284 = vmatpush1.msra.mxu0 0.0
        %2285 = vmatprep.subr.mxu0 0.0
        %2286 = vmatpush1.msra.mxu0 0.0
        %2287 = vmatprep.subr.mxu0 0.0
        %2288 = vmatpush1.msra.mxu0 0.0
        %2289 = vmatprep.subr.mxu0 0.0
        %2290 = vmatpush1.msra.mxu0 0.0
        %2291 = vmatprep.subr.mxu0 0.0
        %2292 = vmatpush1.msra.mxu0 0.0
        %2293 = vmatprep.mubr.f32.mxu0 0.0
        %2294 = vmatmul.mubr.f32.gmra.mrb[0].mxu0 %v2227
        %v2295 = vpop.f32.mrb[0].mxu0
        %v2296 = vadd.f32 0.0, %v2295
        %v2297 = vpop.f32.mrb[0].mxu0
        %2298 = vdwg.mxu0
        %s2299 = scalar_lea.vmem %s8, 2
        %v2300 = vld [vmem:[%s2299] sm:$0x1]
        %2302 = vrot.lane.b32.xlu0 %v2296, 96
        %v2303 = vpop.permute.xlu0 %2302
        %s2305 = scalar_lea.vmem %s9, 2
        %v2306 = vld [vmem:[%s2305] sm:$0x1]
        %v2308 = vlaneseq
        %v2309 = vshrl.u32 %v2308, 7
        %v2310 = vsub.s32 0, %v2309
        %v2311 = vrot.slane %v2306, %v2310
        %v2314 = vsel %vm1033, %v2300, 0
        %2316 = vmatprep.subr.mxu0 0.0
        %2317 = vmatpush1.msra.mxu0 %v2296
        %2318 = vmatprep.subr.mxu0 0.0
        %2319 = vmatpush1.msra.mxu0 %v2303
        %2320 = vmatprep.subr.mxu0 0.0
        %2321 = vmatpush1.msra.mxu0 %v2314
        %2322 = vmatprep.subr.mxu0 0.0
        %2323 = vmatpush1.msra.mxu0 0.0
        %2324 = vmatprep.subr.mxu0 0.0
        %2325 = vmatpush1.msra.mxu0 0.0
        %2326 = vmatprep.subr.mxu0 0.0
        %2327 = vmatpush1.msra.mxu0 0.0
        %2328 = vmatprep.subr.mxu0 0.0
        %2329 = vmatpush1.msra.mxu0 0.0
        %2330 = vmatprep.subr.mxu0 0.0
        %2331 = vmatpush1.msra.mxu0 0.0
        %2332 = vmatprep.subr.mxu0 0.0
        %2333 = vmatpush1.msra.mxu0 0.0
        %2334 = vmatprep.subr.mxu0 0.0
        %2335 = vmatpush1.msra.mxu0 0.0
        %2336 = vmatprep.subr.mxu0 0.0
        %2337 = vmatpush1.msra.mxu0 0.0
        %2338 = vmatprep.subr.mxu0 0.0
        %2339 = vmatpush1.msra.mxu0 0.0
        %2340 = vmatprep.subr.mxu0 0.0
        %2341 = vmatpush1.msra.mxu0 0.0
        %2342 = vmatprep.subr.mxu0 0.0
        %2343 = vmatpush1.msra.mxu0 0.0
        %2344 = vmatprep.subr.mxu0 0.0
        %2345 = vmatpush1.msra.mxu0 0.0
        %2346 = vmatprep.subr.mxu0 0.0
        %2347 = vmatpush1.msra.mxu0 0.0
        %2348 = vmatprep.subr.mxu0 0.0
        %2349 = vmatpush1.msra.mxu0 0.0
        %2350 = vmatprep.subr.mxu0 0.0
        %2351 = vmatpush1.msra.mxu0 0.0
        %2352 = vmatprep.subr.mxu0 0.0
        %2353 = vmatpush1.msra.mxu0 0.0
        %2354 = vmatprep.subr.mxu0 0.0
        %2355 = vmatpush1.msra.mxu0 0.0
        %2356 = vmatprep.subr.mxu0 0.0
        %2357 = vmatpush1.msra.mxu0 0.0
        %2358 = vmatprep.subr.mxu0 0.0
        %2359 = vmatpush1.msra.mxu0 0.0
        %2360 = vmatprep.subr.mxu0 0.0
        %2361 = vmatpush1.msra.mxu0 0.0
        %2362 = vmatprep.subr.mxu0 0.0
        %2363 = vmatpush1.msra.mxu0 0.0
        %2364 = vmatprep.subr.mxu0 0.0
        %2365 = vmatpush1.msra.mxu0 0.0
        %2366 = vmatprep.subr.mxu0 0.0
        %2367 = vmatpush1.msra.mxu0 0.0
        %2368 = vmatprep.subr.mxu0 0.0
        %2369 = vmatpush1.msra.mxu0 0.0
        %2370 = vmatprep.subr.mxu0 0.0
        %2371 = vmatpush1.msra.mxu0 0.0
        %2372 = vmatprep.subr.mxu0 0.0
        %2373 = vmatpush1.msra.mxu0 0.0
        %2374 = vmatprep.subr.mxu0 0.0
        %2375 = vmatpush1.msra.mxu0 0.0
        %2376 = vmatprep.subr.mxu0 0.0
        %2377 = vmatpush1.msra.mxu0 0.0
        %2378 = vmatprep.subr.mxu0 0.0
        %2379 = vmatpush1.msra.mxu0 0.0
        %2380 = vmatprep.mubr.f32.mxu0 0.0
        %2381 = vmatmul.mubr.f32.gmra.mrb[0].mxu0 %v1013
        %v2382 = vpop.f32.mrb[0].mxu0
        %v2383 = vadd.f32 %v2311, %v2382
        %v2384 = vpop.f32.mrb[0].mxu0
        %2385 = vmatprep.mubr.f32.mxu0 0.0
        %2386 = vmatmul.mubr.f32.gmra.mrb[0].mxu0 %v1016
        %v2387 = vpop.f32.mrb[0].mxu0
        %v2388 = vadd.f32 %v2311, %v2387
        %v2389 = vpop.f32.mrb[0].mxu0
        %2390 = vmatprep.mubr.f32.mxu0 0.0
        %2391 = vmatmul.mubr.f32.gmra.mrb[0].mxu0 %v1019
        %v2392 = vpop.f32.mrb[0].mxu0
        %v2393 = vadd.f32 %v2311, %v2392
        %v2394 = vpop.f32.mrb[0].mxu0
        %2395 = vmatprep.mubr.f32.mxu0 0.0
        %2396 = vmatmul.mubr.f32.gmra.mrb[0].mxu0 %v1022
        %v2397 = vpop.f32.mrb[0].mxu0
        %v2398 = vadd.f32 %v2311, %v2397
        %v2399 = vpop.f32.mrb[0].mxu0
        %2400 = vmatprep.mubr.f32.mxu0 0.0
        %2401 = vmatmul.mubr.f32.gmra.mrb[0].mxu0 %v1025
        %v2402 = vpop.f32.mrb[0].mxu0
        %v2403 = vadd.f32 %v2311, %v2402
        %v2404 = vpop.f32.mrb[0].mxu0
        %2405 = vmatprep.mubr.f32.mxu0 0.0
        %2406 = vmatmul.mubr.f32.gmra.mrb[0].mxu0 %v1028
        %v2407 = vpop.f32.mrb[0].mxu0
        %v2408 = vadd.f32 %v2311, %v2407
        %v2409 = vpop.f32.mrb[0].mxu0
        %2410 = vmatprep.mubr.f32.mxu0 0.0
        %2411 = vmatmul.mubr.f32.gmra.mrb[0].mxu0 %v1031
        %v2412 = vpop.f32.mrb[0].mxu0
        %v2413 = vadd.f32 %v2311, %v2412
        %v2414 = vpop.f32.mrb[0].mxu0
        %2415 = vdwg.mxu0
        %v2416 = vmul.f32 %v2383, 0.5
        %v2417 = vmul.f32 %v2388, 0.5
        %v2418 = vmul.f32 %v2393, 0.5
        %v2419 = vmul.f32 %v2398, 0.5
        %v2420 = vmul.f32 %v2403, 0.5
        %v2421 = vmul.f32 %v2408, 0.5
        %v2422 = vmul.f32 %v2413, 0.5
        %v2423 = vtanh.pop %v2416
        %v2424 = vtanh.pop %v2417
        %v2425 = vtanh.pop %v2418
        %v2426 = vtanh.pop %v2419
        %v2427 = vtanh.pop %v2420
        %v2428 = vtanh.pop %v2421
        %v2429 = vtanh.pop %v2422
        %v2430 = vadd.f32 %v2423, 1.0
        %v2431 = vadd.f32 %v2424, 1.0
        %v2432 = vadd.f32 %v2425, 1.0
        %v2433 = vadd.f32 %v2426, 1.0
        %v2434 = vadd.f32 %v2427, 1.0
        %v2435 = vadd.f32 %v2428, 1.0
        %v2436 = vadd.f32 %v2429, 1.0
        %v2437 = vmul.f32 %v2416, %v2430
        %v2438 = vmul.f32 %v2417, %v2431
        %v2439 = vmul.f32 %v2418, %v2432
        %v2440 = vmul.f32 %v2419, %v2433
        %v2441 = vmul.f32 %v2420, %v2434
        %v2442 = vmul.f32 %v2421, %v2435
        %v2443 = vmul.f32 %v2422, %v2436
        %s2444 = scalar_lea.vmem %s10, 64
        %v2445 = vld [vmem:[%s2444] sm:$0xff]
        %v2446 = vld [vmem:[%s2444 + $0x8] sm:$0xff]
        %v2447 = vld [vmem:[%s2444 + $0x10] sm:$0xff]
        %v2448 = vld [vmem:[%s2444 + $0x18] sm:$0xff]
        %s2449 = scalar_lea.vmem %s11, 2
        %v2450 = vld [vmem:[%s2449] sm:$0x1]
        %v2452 = vlaneseq
        %v2453 = vshrl.u32 %v2452, 7
        %v2454 = vsub.s32 0, %v2453
        %v2455 = vrot.slane %v2450, %v2454
        %v2458 = vsel %vm925, %v2437, 0
        %v2461 = vsel %vm925, %v2438, 0
        %v2464 = vsel %vm925, %v2439, 0
        %v2467 = vsel %vm925, %v2440, 0
        %v2470 = vsel %vm925, %v2441, 0
        %v2473 = vsel %vm925, %v2442, 0
        %v2476 = vsel %vm925, %v2443, 0
        %2478 = vmatprep.subr.mxu0 0.0
        %2479 = vmatpush1.msra.mxu0 %v2445
        %2480 = vmatprep.subr.mxu0 0.0
        %2481 = vmatpush1.msra.mxu0 %v2446
        %2482 = vmatprep.subr.mxu0 0.0
        %2483 = vmatpush1.msra.mxu0 %v2447
        %2484 = vmatprep.subr.mxu0 0.0
        %2485 = vmatpush1.msra.mxu0 %v2448
        %2486 = vmatprep.subr.mxu0 0.0
        %2487 = vmatpush1.msra.mxu0 0.0
        %2488 = vmatprep.subr.mxu0 0.0
        %2489 = vmatpush1.msra.mxu0 0.0
        %2490 = vmatprep.subr.mxu0 0.0
        %2491 = vmatpush1.msra.mxu0 0.0
        %2492 = vmatprep.subr.mxu0 0.0
        %2493 = vmatpush1.msra.mxu0 0.0
        %2494 = vmatprep.subr.mxu0 0.0
        %2495 = vmatpush1.msra.mxu0 0.0
        %2496 = vmatprep.subr.mxu0 0.0
        %2497 = vmatpush1.msra.mxu0 0.0
        %2498 = vmatprep.subr.mxu0 0.0
        %2499 = vmatpush1.msra.mxu0 0.0
        %2500 = vmatprep.subr.mxu0 0.0
        %2501 = vmatpush1.msra.mxu0 0.0
        %2502 = vmatprep.subr.mxu0 0.0
        %2503 = vmatpush1.msra.mxu0 0.0
        %2504 = vmatprep.subr.mxu0 0.0
        %2505 = vmatpush1.msra.mxu0 0.0
        %2506 = vmatprep.subr.mxu0 0.0
        %2507 = vmatpush1.msra.mxu0 0.0
        %2508 = vmatprep.subr.mxu0 0.0
        %2509 = vmatpush1.msra.mxu0 0.0
        %2510 = vmatprep.subr.mxu0 0.0
        %2511 = vmatpush1.msra.mxu0 0.0
        %2512 = vmatprep.subr.mxu0 0.0
        %2513 = vmatpush1.msra.mxu0 0.0
        %2514 = vmatprep.subr.mxu0 0.0
        %2515 = vmatpush1.msra.mxu0 0.0
        %2516 = vmatprep.subr.mxu0 0.0
        %2517 = vmatpush1.msra.mxu0 0.0
        %2518 = vmatprep.subr.mxu0 0.0
        %2519 = vmatpush1.msra.mxu0 0.0
        %2520 = vmatprep.subr.mxu0 0.0
        %2521 = vmatpush1.msra.mxu0 0.0
        %2522 = vmatprep.subr.mxu0 0.0
        %2523 = vmatpush1.msra.mxu0 0.0
        %2524 = vmatprep.subr.mxu0 0.0
        %2525 = vmatpush1.msra.mxu0 0.0
        %2526 = vmatprep.subr.mxu0 0.0
        %2527 = vmatpush1.msra.mxu0 0.0
        %2528 = vmatprep.subr.mxu0 0.0
        %2529 = vmatpush1.msra.mxu0 0.0
        %2530 = vmatprep.subr.mxu0 0.0
        %2531 = vmatpush1.msra.mxu0 0.0
        %2532 = vmatprep.subr.mxu0 0.0
        %2533 = vmatpush1.msra.mxu0 0.0
        %2534 = vmatprep.subr.mxu0 0.0
        %2535 = vmatpush1.msra.mxu0 0.0
        %2536 = vmatprep.subr.mxu0 0.0
        %2537 = vmatpush1.msra.mxu0 0.0
        %2538 = vmatprep.subr.mxu0 0.0
        %2539 = vmatpush1.msra.mxu0 0.0
        %2540 = vmatprep.subr.mxu0 0.0
        %2541 = vmatpush1.msra.mxu0 0.0
        %2542 = vmatprep.mubr.f32.mxu0 0.0
        %2543 = vmatmul.mubr.f32.gmra.mrb[0].mxu0 %v2458
        %v2544 = vpop.f32.mrb[0].mxu0
        %v2545 = vadd.f32 %v2455, %v2544
        %v2546 = vpop.f32.mrb[0].mxu0
        %2547 = vmatprep.mubr.f32.mxu0 0.0
        %2548 = vmatmul.mubr.f32.gmra.mrb[0].mxu0 %v2461
        %v2549 = vpop.f32.mrb[0].mxu0
        %v2550 = vadd.f32 %v2455, %v2549
        %v2551 = vpop.f32.mrb[0].mxu0
        %2552 = vmatprep.mubr.f32.mxu0 0.0
        %2553 = vmatmul.mubr.f32.gmra.mrb[0].mxu0 %v2464
        %v2554 = vpop.f32.mrb[0].mxu0
        %v2555 = vadd.f32 %v2455, %v2554
        %v2556 = vpop.f32.mrb[0].mxu0
        %2557 = vmatprep.mubr.f32.mxu0 0.0
        %2558 = vmatmul.mubr.f32.gmra.mrb[0].mxu0 %v2467
        %v2559 = vpop.f32.mrb[0].mxu0
        %v2560 = vadd.f32 %v2455, %v2559
        %v2561 = vpop.f32.mrb[0].mxu0
        %2562 = vmatprep.mubr.f32.mxu0 0.0
        %2563 = vmatmul.mubr.f32.gmra.mrb[0].mxu0 %v2470
        %v2564 = vpop.f32.mrb[0].mxu0
        %v2565 = vadd.f32 %v2455, %v2564
        %v2566 = vpop.f32.mrb[0].mxu0
        %2567 = vmatprep.mubr.f32.mxu0 0.0
        %2568 = vmatmul.mubr.f32.gmra.mrb[0].mxu0 %v2473
        %v2569 = vpop.f32.mrb[0].mxu0
        %v2570 = vadd.f32 %v2455, %v2569
        %v2571 = vpop.f32.mrb[0].mxu0
        %2572 = vmatprep.mubr.f32.mxu0 0.0
        %2573 = vmatmul.mubr.f32.gmra.mrb[0].mxu0 %v2476
        %v2574 = vpop.f32.mrb[0].mxu0
        %v2575 = vadd.f32 %v2455, %v2574
        %v2576 = vpop.f32.mrb[0].mxu0
        %2577 = vdwg.mxu0
        %v2578 = vmul.f32 %v2545, 0.5
        %v2579 = vmul.f32 %v2550, 0.5
        %v2580 = vmul.f32 %v2555, 0.5
        %v2581 = vmul.f32 %v2560, 0.5
        %v2582 = vmul.f32 %v2565, 0.5
        %v2583 = vmul.f32 %v2570, 0.5
        %v2584 = vmul.f32 %v2575, 0.5
        %v2585 = vtanh.pop %v2578
        %v2586 = vtanh.pop %v2579
        %v2587 = vtanh.pop %v2580
        %v2588 = vtanh.pop %v2581
        %v2589 = vtanh.pop %v2582
        %v2590 = vtanh.pop %v2583
        %v2591 = vtanh.pop %v2584
        %v2592 = vadd.f32 %v2585, 1.0
        %v2593 = vadd.f32 %v2586, 1.0
        %v2594 = vadd.f32 %v2587, 1.0
        %v2595 = vadd.f32 %v2588, 1.0
        %v2596 = vadd.f32 %v2589, 1.0
        %v2597 = vadd.f32 %v2590, 1.0
        %v2598 = vadd.f32 %v2591, 1.0
        %v2599 = vmul.f32 %v2578, %v2592
        %v2600 = vmul.f32 %v2579, %v2593
        %v2601 = vmul.f32 %v2580, %v2594
        %v2602 = vmul.f32 %v2581, %v2595
        %v2603 = vmul.f32 %v2582, %v2596
        %v2604 = vmul.f32 %v2583, %v2597
        %v2605 = vmul.f32 %v2584, %v2598
        %2606 = vmatprep.subr.mxu0 0.0
        %2607 = vmatpush1.msra.mxu0 %v2599
        %2608 = vmatprep.subr.mxu0 0.0
        %2609 = vmatpush1.msra.mxu0 %v2600
        %2610 = vmatprep.subr.mxu0 0.0
        %2611 = vmatpush1.msra.mxu0 %v2601
        %2612 = vmatprep.subr.mxu0 0.0
        %2613 = vmatpush1.msra.mxu0 %v2602
        %2614 = vmatprep.subr.mxu0 0.0
        %2615 = vmatpush1.msra.mxu0 %v2603
        %2616 = vmatprep.subr.mxu0 0.0
        %2617 = vmatpush1.msra.mxu0 %v2604
        %2618 = vmatprep.subr.mxu0 0.0
        %2619 = vmatpush1.msra.mxu0 %v2605
        %2620 = vmatprep.subr.mxu0 0.0
        %2621 = vmatpush1.msra.mxu0 0.0
        %2622 = vmatprep.subr.mxu0 0.0
        %2623 = vmatpush1.msra.mxu0 0.0
        %2624 = vmatprep.subr.mxu0 0.0
        %2625 = vmatpush1.msra.mxu0 0.0
        %2626 = vmatprep.subr.mxu0 0.0
        %2627 = vmatpush1.msra.mxu0 0.0
        %2628 = vmatprep.subr.mxu0 0.0
        %2629 = vmatpush1.msra.mxu0 0.0
        %2630 = vmatprep.subr.mxu0 0.0
        %2631 = vmatpush1.msra.mxu0 0.0
        %2632 = vmatprep.subr.mxu0 0.0
        %2633 = vmatpush1.msra.mxu0 0.0
        %2634 = vmatprep.subr.mxu0 0.0
        %2635 = vmatpush1.msra.mxu0 0.0
        %2636 = vmatprep.subr.mxu0 0.0
        %2637 = vmatpush1.msra.mxu0 0.0
        %2638 = vmatprep.subr.mxu0 0.0
        %2639 = vmatpush1.msra.mxu0 0.0
        %2640 = vmatprep.subr.mxu0 0.0
        %2641 = vmatpush1.msra.mxu0 0.0
        %2642 = vmatprep.subr.mxu0 0.0
        %2643 = vmatpush1.msra.mxu0 0.0
        %2644 = vmatprep.subr.mxu0 0.0
        %2645 = vmatpush1.msra.mxu0 0.0
        %2646 = vmatprep.subr.mxu0 0.0
        %2647 = vmatpush1.msra.mxu0 0.0
        %2648 = vmatprep.subr.mxu0 0.0
        %2649 = vmatpush1.msra.mxu0 0.0
        %2650 = vmatprep.subr.mxu0 0.0
        %2651 = vmatpush1.msra.mxu0 0.0
        %2652 = vmatprep.subr.mxu0 0.0
        %2653 = vmatpush1.msra.mxu0 0.0
        %2654 = vmatprep.subr.mxu0 0.0
        %2655 = vmatpush1.msra.mxu0 0.0
        %2656 = vmatprep.subr.mxu0 0.0
        %2657 = vmatpush1.msra.mxu0 0.0
        %2658 = vmatprep.subr.mxu0 0.0
        %2659 = vmatpush1.msra.mxu0 0.0
        %2660 = vmatprep.subr.mxu0 0.0
        %2661 = vmatpush1.msra.mxu0 0.0
        %2662 = vmatprep.subr.mxu0 0.0
        %2663 = vmatpush1.msra.mxu0 0.0
        %2664 = vmatprep.subr.mxu0 0.0
        %2665 = vmatpush1.msra.mxu0 0.0
        %2666 = vmatprep.subr.mxu0 0.0
        %2667 = vmatpush1.msra.mxu0 0.0
        %2668 = vmatprep.subr.mxu0 0.0
        %2669 = vmatpush1.msra.mxu0 0.0
        %2670 = vmatprep.mubr.f32.mxu0 0.0
        %2671 = vmatmul.mubr.f32.gmra.mrb[0].mxu0 %v1327
        %v2672 = vpop.f32.mrb[0].mxu0
        %v2673 = vadd.f32 0.0, %v2672
        %v2674 = vpop.f32.mrb[0].mxu0
        %2675 = vdwg.mxu0
        %2677 = vrot.lane.b32.xlu0 %v2673, 32
        %v2678 = vpop.permute.xlu0 %2677
        %v2680 = vsel %vm925, %v2218, %v2678
        %s2681 = scalar_lea.vmem %s12, 128
        %v2682 = vld [vmem:[%s2681] sm:$0xff]
        %v2683 = vld [vmem:[%s2681 + $0x8] sm:$0xff]
        %v2684 = vld [vmem:[%s2681 + $0x10] sm:$0xff]
        %v2685 = vld [vmem:[%s2681 + $0x18] sm:$0xff]
        %v2686 = vld [vmem:[%s2681 + $0x20] sm:$0xff]
        %v2687 = vld [vmem:[%s2681 + $0x28] sm:$0xff]
        %v2688 = vld [vmem:[%s2681 + $0x30] sm:$0xff]
        %v2689 = vld [vmem:[%s2681 + $0x38] sm:$0xff]
        %s2690 = scalar_lea.vmem %s13, 2
        %v2691 = vld [vmem:[%s2690] sm:$0x1]
        %v2693 = vlaneseq
        %v2694 = vshrl.u32 %v2693, 7
        %v2695 = vsub.s32 0, %v2694
        %v2696 = vrot.slane %v2691, %v2695
        %v2699 = vsel %vm1419, %v2680, 0
        %2701 = vmatprep.subr.mxu0 0.0
        %2702 = vmatpush1.msra.mxu0 %v2682
        %2703 = vmatprep.subr.mxu0 0.0
        %2704 = vmatpush1.msra.mxu0 %v2683
        %2705 = vmatprep.subr.mxu0 0.0
        %2706 = vmatpush1.msra.mxu0 %v2684
        %2707 = vmatprep.subr.mxu0 0.0
        %2708 = vmatpush1.msra.mxu0 %v2685
        %2709 = vmatprep.subr.mxu0 0.0
        %2710 = vmatpush1.msra.mxu0 %v2686
        %2711 = vmatprep.subr.mxu0 0.0
        %2712 = vmatpush1.msra.mxu0 %v2687
        %2713 = vmatprep.subr.mxu0 0.0
        %2714 = vmatpush1.msra.mxu0 %v2688
        %2715 = vmatprep.subr.mxu0 0.0
        %2716 = vmatpush1.msra.mxu0 %v2689
        %2717 = vmatprep.subr.mxu0 0.0
        %2718 = vmatpush1.msra.mxu0 0.0
        %2719 = vmatprep.subr.mxu0 0.0
        %2720 = vmatpush1.msra.mxu0 0.0
        %2721 = vmatprep.subr.mxu0 0.0
        %2722 = vmatpush1.msra.mxu0 0.0
        %2723 = vmatprep.subr.mxu0 0.0
        %2724 = vmatpush1.msra.mxu0 0.0
        %2725 = vmatprep.subr.mxu0 0.0
        %2726 = vmatpush1.msra.mxu0 0.0
        %2727 = vmatprep.subr.mxu0 0.0
        %2728 = vmatpush1.msra.mxu0 0.0
        %2729 = vmatprep.subr.mxu0 0.0
        %2730 = vmatpush1.msra.mxu0 0.0
        %2731 = vmatprep.subr.mxu0 0.0
        %2732 = vmatpush1.msra.mxu0 0.0
        %2733 = vmatprep.subr.mxu0 0.0
        %2734 = vmatpush1.msra.mxu0 0.0
        %2735 = vmatprep.subr.mxu0 0.0
        %2736 = vmatpush1.msra.mxu0 0.0
        %2737 = vmatprep.subr.mxu0 0.0
        %2738 = vmatpush1.msra.mxu0 0.0
        %2739 = vmatprep.subr.mxu0 0.0
        %2740 = vmatpush1.msra.mxu0 0.0
        %2741 = vmatprep.subr.mxu0 0.0
        %2742 = vmatpush1.msra.mxu0 0.0
        %2743 = vmatprep.subr.mxu0 0.0
        %2744 = vmatpush1.msra.mxu0 0.0
        %2745 = vmatprep.subr.mxu0 0.0
        %2746 = vmatpush1.msra.mxu0 0.0
        %2747 = vmatprep.subr.mxu0 0.0
        %2748 = vmatpush1.msra.mxu0 0.0
        %2749 = vmatprep.subr.mxu0 0.0
        %2750 = vmatpush1.msra.mxu0 0.0
        %2751 = vmatprep.subr.mxu0 0.0
        %2752 = vmatpush1.msra.mxu0 0.0
        %2753 = vmatprep.subr.mxu0 0.0
        %2754 = vmatpush1.msra.mxu0 0.0
        %2755 = vmatprep.subr.mxu0 0.0
        %2756 = vmatpush1.msra.mxu0 0.0
        %2757 = vmatprep.subr.mxu0 0.0
        %2758 = vmatpush1.msra.mxu0 0.0
        %2759 = vmatprep.subr.mxu0 0.0
        %2760 = vmatpush1.msra.mxu0 0.0
        %2761 = vmatprep.subr.mxu0 0.0
        %2762 = vmatpush1.msra.mxu0 0.0
        %2763 = vmatprep.subr.mxu0 0.0
        %2764 = vmatpush1.msra.mxu0 0.0
        %2765 = vmatprep.mubr.f32.mxu0 0.0
        %2766 = vmatmul.mubr.f32.gmra.mrb[0].mxu0 %v2699
        %v2767 = vpop.f32.mrb[0].mxu0
        %v2768 = vadd.f32 %v2696, %v2767
        %v2769 = vpop.f32.mrb[0].mxu0
        %2770 = vdwg.mxu0
        %v2771 = vmul.f32 %v2768, 0.5
        %v2772 = vtanh.pop %v2771
        %v2773 = vadd.f32 %v2772, 1.0
        %v2774 = vmul.f32 %v2771, %v2773
        %s2775 = scalar_lea.vmem %s14, 64
        %v2776 = vld [vmem:[%s2775] sm:$0xff]
        %v2777 = vld [vmem:[%s2775 + $0x8] sm:$0xff]
        %v2778 = vld [vmem:[%s2775 + $0x10] sm:$0xff]
        %v2779 = vld [vmem:[%s2775 + $0x18] sm:$0xff]
        %s2780 = scalar_lea.vmem %s15, 2
        %v2781 = vld [vmem:[%s2780] sm:$0x1]
        %v2783 = vlaneseq
        %v2784 = vshrl.u32 %v2783, 7
        %v2785 = vsub.s32 0, %v2784
        %v2786 = vrot.slane %v2781, %v2785
        %v2789 = vsel %vm925, %v2774, 0
        %2791 = vmatprep.subr.mxu0 0.0
        %2792 = vmatpush1.msra.mxu0 %v2776
        %2793 = vmatprep.subr.mxu0 0.0
        %2794 = vmatpush1.msra.mxu0 %v2777
        %2795 = vmatprep.subr.mxu0 0.0
        %2796 = vmatpush1.msra.mxu0 %v2778
        %2797 = vmatprep.subr.mxu0 0.0
        %2798 = vmatpush1.msra.mxu0 %v2779
        %2799 = vmatprep.subr.mxu0 0.0
        %2800 = vmatpush1.msra.mxu0 0.0
        %2801 = vmatprep.subr.mxu0 0.0
        %2802 = vmatpush1.msra.mxu0 0.0
        %2803 = vmatprep.subr.mxu0 0.0
        %2804 = vmatpush1.msra.mxu0 0.0
        %2805 = vmatprep.subr.mxu0 0.0
        %2806 = vmatpush1.msra.mxu0 0.0
        %2807 = vmatprep.subr.mxu0 0.0
        %2808 = vmatpush1.msra.mxu0 0.0
        %2809 = vmatprep.subr.mxu0 0.0
        %2810 = vmatpush1.msra.mxu0 0.0
        %2811 = vmatprep.subr.mxu0 0.0
        %2812 = vmatpush1.msra.mxu0 0.0
        %2813 = vmatprep.subr.mxu0 0.0
        %2814 = vmatpush1.msra.mxu0 0.0
        %2815 = vmatprep.subr.mxu0 0.0
        %2816 = vmatpush1.msra.mxu0 0.0
        %2817 = vmatprep.subr.mxu0 0.0
        %2818 = vmatpush1.msra.mxu0 0.0
        %2819 = vmatprep.subr.mxu0 0.0
        %2820 = vmatpush1.msra.mxu0 0.0
        %2821 = vmatprep.subr.mxu0 0.0
        %2822 = vmatpush1.msra.mxu0 0.0
        %2823 = vmatprep.subr.mxu0 0.0
        %2824 = vmatpush1.msra.mxu0 0.0
        %2825 = vmatprep.subr.mxu0 0.0
        %2826 = vmatpush1.msra.mxu0 0.0
        %2827 = vmatprep.subr.mxu0 0.0
        %2828 = vmatpush1.msra.mxu0 0.0
        %2829 = vmatprep.subr.mxu0 0.0
        %2830 = vmatpush1.msra.mxu0 0.0
        %2831 = vmatprep.subr.mxu0 0.0
        %2832 = vmatpush1.msra.mxu0 0.0
        %2833 = vmatprep.subr.mxu0 0.0
        %2834 = vmatpush1.msra.mxu0 0.0
        %2835 = vmatprep.subr.mxu0 0.0
        %2836 = vmatpush1.msra.mxu0 0.0
        %2837 = vmatprep.subr.mxu0 0.0
        %2838 = vmatpush1.msra.mxu0 0.0
        %2839 = vmatprep.subr.mxu0 0.0
        %2840 = vmatpush1.msra.mxu0 0.0
        %2841 = vmatprep.subr.mxu0 0.0
        %2842 = vmatpush1.msra.mxu0 0.0
        %2843 = vmatprep.subr.mxu0 0.0
        %2844 = vmatpush1.msra.mxu0 0.0
        %2845 = vmatprep.subr.mxu0 0.0
        %2846 = vmatpush1.msra.mxu0 0.0
        %2847 = vmatprep.subr.mxu0 0.0
        %2848 = vmatpush1.msra.mxu0 0.0
        %2849 = vmatprep.subr.mxu0 0.0
        %2850 = vmatpush1.msra.mxu0 0.0
        %2851 = vmatprep.subr.mxu0 0.0
        %2852 = vmatpush1.msra.mxu0 0.0
        %2853 = vmatprep.subr.mxu0 0.0
        %2854 = vmatpush1.msra.mxu0 0.0
        %2855 = vmatprep.mubr.f32.mxu0 0.0
        %2856 = vmatmul.mubr.f32.gmra.mrb[0].mxu0 %v2789
        %v2857 = vpop.f32.mrb[0].mxu0
        %v2858 = vadd.f32 %v2786, %v2857
        %v2859 = vpop.f32.mrb[0].mxu0
        %2860 = vdwg.mxu0
        %s2861 = scalar_lea.vmem %s7, 96
        %v2862 = vld [vmem:[%s2861] sm:$0xff]
        %v2863 = vld [vmem:[%s2861 + $0x8] sm:$0xff]
        %v2864 = vld [vmem:[%s2861 + $0x10] sm:$0xff]
        %v2865 = vld [vmem:[%s2861 + $0x18] sm:$0xff]
        %v2867 = vsel %vm925, %v2858, 0
        %2869 = vmatprep.subr.mxu0 0.0
        %2870 = vmatpush1.msra.mxu0 %v2862
        %2871 = vmatprep.subr.mxu0 0.0
        %2872 = vmatpush1.msra.mxu0 %v2863
        %2873 = vmatprep.subr.mxu0 0.0
        %2874 = vmatpush1.msra.mxu0 %v2864
        %2875 = vmatprep.subr.mxu0 0.0
        %2876 = vmatpush1.msra.mxu0 %v2865
        %2877 = vmatprep.subr.mxu0 0.0
        %2878 = vmatpush1.msra.mxu0 0.0
        %2879 = vmatprep.subr.mxu0 0.0
        %2880 = vmatpush1.msra.mxu0 0.0
        %2881 = vmatprep.subr.mxu0 0.0
        %2882 = vmatpush1.msra.mxu0 0.0
        %2883 = vmatprep.subr.mxu0 0.0
        %2884 = vmatpush1.msra.mxu0 0.0
        %2885 = vmatprep.subr.mxu0 0.0
        %2886 = vmatpush1.msra.mxu0 0.0
        %2887 = vmatprep.subr.mxu0 0.0
        %2888 = vmatpush1.msra.mxu0 0.0
        %2889 = vmatprep.subr.mxu0 0.0
        %2890 = vmatpush1.msra.mxu0 0.0
        %2891 = vmatprep.subr.mxu0 0.0
        %2892 = vmatpush1.msra.mxu0 0.0
        %2893 = vmatprep.subr.mxu0 0.0
        %2894 = vmatpush1.msra.mxu0 0.0
        %2895 = vmatprep.subr.mxu0 0.0
        %2896 = vmatpush1.msra.mxu0 0.0
        %2897 = vmatprep.subr.mxu0 0.0
        %2898 = vmatpush1.msra.mxu0 0.0
        %2899 = vmatprep.subr.mxu0 0.0
        %2900 = vmatpush1.msra.mxu0 0.0
        %2901 = vmatprep.subr.mxu0 0.0
        %2902 = vmatpush1.msra.mxu0 0.0
        %2903 = vmatprep.subr.mxu0 0.0
        %2904 = vmatpush1.msra.mxu0 0.0
        %2905 = vmatprep.subr.mxu0 0.0
        %2906 = vmatpush1.msra.mxu0 0.0
        %2907 = vmatprep.subr.mxu0 0.0
        %2908 = vmatpush1.msra.mxu0 0.0
        %2909 = vmatprep.subr.mxu0 0.0
        %2910 = vmatpush1.msra.mxu0 0.0
        %2911 = vmatprep.subr.mxu0 0.0
        %2912 = vmatpush1.msra.mxu0 0.0
        %2913 = vmatprep.subr.mxu0 0.0
        %2914 = vmatpush1.msra.mxu0 0.0
        %2915 = vmatprep.subr.mxu0 0.0
        %2916 = vmatpush1.msra.mxu0 0.0
        %2917 = vmatprep.subr.mxu0 0.0
        %2918 = vmatpush1.msra.mxu0 0.0
        %2919 = vmatprep.subr.mxu0 0.0
        %2920 = vmatpush1.msra.mxu0 0.0
        %2921 = vmatprep.subr.mxu0 0.0
        %2922 = vmatpush1.msra.mxu0 0.0
        %2923 = vmatprep.subr.mxu0 0.0
        %2924 = vmatpush1.msra.mxu0 0.0
        %2925 = vmatprep.subr.mxu0 0.0
        %2926 = vmatpush1.msra.mxu0 0.0
        %2927 = vmatprep.subr.mxu0 0.0
        %2928 = vmatpush1.msra.mxu0 0.0
        %2929 = vmatprep.subr.mxu0 0.0
        %2930 = vmatpush1.msra.mxu0 0.0
        %2931 = vmatprep.subr.mxu0 0.0
        %2932 = vmatpush1.msra.mxu0 0.0
        %2933 = vmatprep.mubr.f32.mxu0 0.0
        %2934 = vmatmul.mubr.f32.gmra.mrb[0].mxu0 %v2867
        %v2935 = vpop.f32.mrb[0].mxu0
        %v2936 = vadd.f32 0.0, %v2935
        %v2937 = vpop.f32.mrb[0].mxu0
        %2938 = vdwg.mxu0
        %s2939 = scalar_lea.vmem %s8, 3
        %v2940 = vld [vmem:[%s2939] sm:$0x1]
        %2942 = vrot.lane.b32.xlu0 %v2936, 96
        %v2943 = vpop.permute.xlu0 %2942
        %s2945 = scalar_lea.vmem %s9, 3
        %v2946 = vld [vmem:[%s2945] sm:$0x1]
        %v2948 = vlaneseq
        %v2949 = vshrl.u32 %v2948, 7
        %v2950 = vsub.s32 0, %v2949
        %v2951 = vrot.slane %v2946, %v2950
        %v2954 = vsel %vm1033, %v2940, 0
        %2956 = vmatprep.subr.mxu0 0.0
        %2957 = vmatpush1.msra.mxu0 %v2936
        %2958 = vmatprep.subr.mxu0 0.0
        %2959 = vmatpush1.msra.mxu0 %v2943
        %2960 = vmatprep.subr.mxu0 0.0
        %2961 = vmatpush1.msra.mxu0 %v2954
        %2962 = vmatprep.subr.mxu0 0.0
        %2963 = vmatpush1.msra.mxu0 0.0
        %2964 = vmatprep.subr.mxu0 0.0
        %2965 = vmatpush1.msra.mxu0 0.0
        %2966 = vmatprep.subr.mxu0 0.0
        %2967 = vmatpush1.msra.mxu0 0.0
        %2968 = vmatprep.subr.mxu0 0.0
        %2969 = vmatpush1.msra.mxu0 0.0
        %2970 = vmatprep.subr.mxu0 0.0
        %2971 = vmatpush1.msra.mxu0 0.0
        %2972 = vmatprep.subr.mxu0 0.0
        %2973 = vmatpush1.msra.mxu0 0.0
        %2974 = vmatprep.subr.mxu0 0.0
        %2975 = vmatpush1.msra.mxu0 0.0
        %2976 = vmatprep.subr.mxu0 0.0
        %2977 = vmatpush1.msra.mxu0 0.0
        %2978 = vmatprep.subr.mxu0 0.0
        %2979 = vmatpush1.msra.mxu0 0.0
        %2980 = vmatprep.subr.mxu0 0.0
        %2981 = vmatpush1.msra.mxu0 0.0
        %2982 = vmatprep.subr.mxu0 0.0
        %2983 = vmatpush1.msra.mxu0 0.0
        %2984 = vmatprep.subr.mxu0 0.0
        %2985 = vmatpush1.msra.mxu0 0.0
        %2986 = vmatprep.subr.mxu0 0.0
        %2987 = vmatpush1.msra.mxu0 0.0
        %2988 = vmatprep.subr.mxu0 0.0
        %2989 = vmatpush1.msra.mxu0 0.0
        %2990 = vmatprep.subr.mxu0 0.0
        %2991 = vmatpush1.msra.mxu0 0.0
        %2992 = vmatprep.subr.mxu0 0.0
        %2993 = vmatpush1.msra.mxu0 0.0
        %2994 = vmatprep.subr.mxu0 0.0
        %2995 = vmatpush1.msra.mxu0 0.0
        %2996 = vmatprep.subr.mxu0 0.0
        %2997 = vmatpush1.msra.mxu0 0.0
        %2998 = vmatprep.subr.mxu0 0.0
        %2999 = vmatpush1.msra.mxu0 0.0
        %3000 = vmatprep.subr.mxu0 0.0
        %3001 = vmatpush1.msra.mxu0 0.0
        %3002 = vmatprep.subr.mxu0 0.0
        %3003 = vmatpush1.msra.mxu0 0.0
        %3004 = vmatprep.subr.mxu0 0.0
        %3005 = vmatpush1.msra.mxu0 0.0
        %3006 = vmatprep.subr.mxu0 0.0
        %3007 = vmatpush1.msra.mxu0 0.0
        %3008 = vmatprep.subr.mxu0 0.0
        %3009 = vmatpush1.msra.mxu0 0.0
        %3010 = vmatprep.subr.mxu0 0.0
        %3011 = vmatpush1.msra.mxu0 0.0
        %3012 = vmatprep.subr.mxu0 0.0
        %3013 = vmatpush1.msra.mxu0 0.0
        %3014 = vmatprep.subr.mxu0 0.0
        %3015 = vmatpush1.msra.mxu0 0.0
        %3016 = vmatprep.subr.mxu0 0.0
        %3017 = vmatpush1.msra.mxu0 0.0
        %3018 = vmatprep.subr.mxu0 0.0
        %3019 = vmatpush1.msra.mxu0 0.0
        %3020 = vmatprep.mubr.f32.mxu0 0.0
        %3021 = vmatmul.mubr.f32.gmra.mrb[0].mxu0 %v1013
        %v3022 = vpop.f32.mrb[0].mxu0
        %v3023 = vadd.f32 %v2951, %v3022
        %v3024 = vpop.f32.mrb[0].mxu0
        %3025 = vmatprep.mubr.f32.mxu0 0.0
        %3026 = vmatmul.mubr.f32.gmra.mrb[0].mxu0 %v1016
        %v3027 = vpop.f32.mrb[0].mxu0
        %v3028 = vadd.f32 %v2951, %v3027
        %v3029 = vpop.f32.mrb[0].mxu0
        %3030 = vmatprep.mubr.f32.mxu0 0.0
        %3031 = vmatmul.mubr.f32.gmra.mrb[0].mxu0 %v1019
        %v3032 = vpop.f32.mrb[0].mxu0
        %v3033 = vadd.f32 %v2951, %v3032
        %v3034 = vpop.f32.mrb[0].mxu0
        %3035 = vmatprep.mubr.f32.mxu0 0.0
        %3036 = vmatmul.mubr.f32.gmra.mrb[0].mxu0 %v1022
        %v3037 = vpop.f32.mrb[0].mxu0
        %v3038 = vadd.f32 %v2951, %v3037
        %v3039 = vpop.f32.mrb[0].mxu0
        %3040 = vmatprep.mubr.f32.mxu0 0.0
        %3041 = vmatmul.mubr.f32.gmra.mrb[0].mxu0 %v1025
        %v3042 = vpop.f32.mrb[0].mxu0
        %v3043 = vadd.f32 %v2951, %v3042
        %v3044 = vpop.f32.mrb[0].mxu0
        %3045 = vmatprep.mubr.f32.mxu0 0.0
        %3046 = vmatmul.mubr.f32.gmra.mrb[0].mxu0 %v1028
        %v3047 = vpop.f32.mrb[0].mxu0
        %v3048 = vadd.f32 %v2951, %v3047
        %v3049 = vpop.f32.mrb[0].mxu0
        %3050 = vmatprep.mubr.f32.mxu0 0.0
        %3051 = vmatmul.mubr.f32.gmra.mrb[0].mxu0 %v1031
        %v3052 = vpop.f32.mrb[0].mxu0
        %v3053 = vadd.f32 %v2951, %v3052
        %v3054 = vpop.f32.mrb[0].mxu0
        %3055 = vdwg.mxu0
        %v3056 = vmul.f32 %v3023, 0.5
        %v3057 = vmul.f32 %v3028, 0.5
        %v3058 = vmul.f32 %v3033, 0.5
        %v3059 = vmul.f32 %v3038, 0.5
        %v3060 = vmul.f32 %v3043, 0.5
        %v3061 = vmul.f32 %v3048, 0.5
        %v3062 = vmul.f32 %v3053, 0.5
        %v3063 = vtanh.pop %v3056
        %v3064 = vtanh.pop %v3057
        %v3065 = vtanh.pop %v3058
        %v3066 = vtanh.pop %v3059
        %v3067 = vtanh.pop %v3060
        %v3068 = vtanh.pop %v3061
        %v3069 = vtanh.pop %v3062
        %v3070 = vadd.f32 %v3063, 1.0
        %v3071 = vadd.f32 %v3064, 1.0
        %v3072 = vadd.f32 %v3065, 1.0
        %v3073 = vadd.f32 %v3066, 1.0
        %v3074 = vadd.f32 %v3067, 1.0
        %v3075 = vadd.f32 %v3068, 1.0
        %v3076 = vadd.f32 %v3069, 1.0
        %v3077 = vmul.f32 %v3056, %v3070
        %v3078 = vmul.f32 %v3057, %v3071
        %v3079 = vmul.f32 %v3058, %v3072
        %v3080 = vmul.f32 %v3059, %v3073
        %v3081 = vmul.f32 %v3060, %v3074
        %v3082 = vmul.f32 %v3061, %v3075
        %v3083 = vmul.f32 %v3062, %v3076
        %s3084 = scalar_lea.vmem %s10, 96
        %v3085 = vld [vmem:[%s3084] sm:$0xff]
        %v3086 = vld [vmem:[%s3084 + $0x8] sm:$0xff]
        %v3087 = vld [vmem:[%s3084 + $0x10] sm:$0xff]
        %v3088 = vld [vmem:[%s3084 + $0x18] sm:$0xff]
        %s3089 = scalar_lea.vmem %s11, 3
        %v3090 = vld [vmem:[%s3089] sm:$0x1]
        %v3092 = vlaneseq
        %v3093 = vshrl.u32 %v3092, 7
        %v3094 = vsub.s32 0, %v3093
        %v3095 = vrot.slane %v3090, %v3094
        %v3098 = vsel %vm925, %v3077, 0
        %v3101 = vsel %vm925, %v3078, 0
        %v3104 = vsel %vm925, %v3079, 0
        %v3107 = vsel %vm925, %v3080, 0
        %v3110 = vsel %vm925, %v3081, 0
        %v3113 = vsel %vm925, %v3082, 0
        %v3116 = vsel %vm925, %v3083, 0
        %3118 = vmatprep.subr.mxu0 0.0
        %3119 = vmatpush1.msra.mxu0 %v3085
        %3120 = vmatprep.subr.mxu0 0.0
        %3121 = vmatpush1.msra.mxu0 %v3086
        %3122 = vmatprep.subr.mxu0 0.0
        %3123 = vmatpush1.msra.mxu0 %v3087
        %3124 = vmatprep.subr.mxu0 0.0
        %3125 = vmatpush1.msra.mxu0 %v3088
        %3126 = vmatprep.subr.mxu0 0.0
        %3127 = vmatpush1.msra.mxu0 0.0
        %3128 = vmatprep.subr.mxu0 0.0
        %3129 = vmatpush1.msra.mxu0 0.0
        %3130 = vmatprep.subr.mxu0 0.0
        %3131 = vmatpush1.msra.mxu0 0.0
        %3132 = vmatprep.subr.mxu0 0.0
        %3133 = vmatpush1.msra.mxu0 0.0
        %3134 = vmatprep.subr.mxu0 0.0
        %3135 = vmatpush1.msra.mxu0 0.0
        %3136 = vmatprep.subr.mxu0 0.0
        %3137 = vmatpush1.msra.mxu0 0.0
        %3138 = vmatprep.subr.mxu0 0.0
        %3139 = vmatpush1.msra.mxu0 0.0
        %3140 = vmatprep.subr.mxu0 0.0
        %3141 = vmatpush1.msra.mxu0 0.0
        %3142 = vmatprep.subr.mxu0 0.0
        %3143 = vmatpush1.msra.mxu0 0.0
        %3144 = vmatprep.subr.mxu0 0.0
        %3145 = vmatpush1.msra.mxu0 0.0
        %3146 = vmatprep.subr.mxu0 0.0
        %3147 = vmatpush1.msra.mxu0 0.0
        %3148 = vmatprep.subr.mxu0 0.0
        %3149 = vmatpush1.msra.mxu0 0.0
        %3150 = vmatprep.subr.mxu0 0.0
        %3151 = vmatpush1.msra.mxu0 0.0
        %3152 = vmatprep.subr.mxu0 0.0
        %3153 = vmatpush1.msra.mxu0 0.0
        %3154 = vmatprep.subr.mxu0 0.0
        %3155 = vmatpush1.msra.mxu0 0.0
        %3156 = vmatprep.subr.mxu0 0.0
        %3157 = vmatpush1.msra.mxu0 0.0
        %3158 = vmatprep.subr.mxu0 0.0
        %3159 = vmatpush1.msra.mxu0 0.0
        %3160 = vmatprep.subr.mxu0 0.0
        %3161 = vmatpush1.msra.mxu0 0.0
        %3162 = vmatprep.subr.mxu0 0.0
        %3163 = vmatpush1.msra.mxu0 0.0
        %3164 = vmatprep.subr.mxu0 0.0
        %3165 = vmatpush1.msra.mxu0 0.0
        %3166 = vmatprep.subr.mxu0 0.0
        %3167 = vmatpush1.msra.mxu0 0.0
        %3168 = vmatprep.subr.mxu0 0.0
        %3169 = vmatpush1.msra.mxu0 0.0
        %3170 = vmatprep.subr.mxu0 0.0
        %3171 = vmatpush1.msra.mxu0 0.0
        %3172 = vmatprep.subr.mxu0 0.0
        %3173 = vmatpush1.msra.mxu0 0.0
        %3174 = vmatprep.subr.mxu0 0.0
        %3175 = vmatpush1.msra.mxu0 0.0
        %3176 = vmatprep.subr.mxu0 0.0
        %3177 = vmatpush1.msra.mxu0 0.0
        %3178 = vmatprep.subr.mxu0 0.0
        %3179 = vmatpush1.msra.mxu0 0.0
        %3180 = vmatprep.subr.mxu0 0.0
        %3181 = vmatpush1.msra.mxu0 0.0
        %3182 = vmatprep.mubr.f32.mxu0 0.0
        %3183 = vmatmul.mubr.f32.gmra.mrb[0].mxu0 %v3098
        %v3184 = vpop.f32.mrb[0].mxu0
        %v3185 = vadd.f32 %v3095, %v3184
        %v3186 = vpop.f32.mrb[0].mxu0
        %3187 = vmatprep.mubr.f32.mxu0 0.0
        %3188 = vmatmul.mubr.f32.gmra.mrb[0].mxu0 %v3101
        %v3189 = vpop.f32.mrb[0].mxu0
        %v3190 = vadd.f32 %v3095, %v3189
        %v3191 = vpop.f32.mrb[0].mxu0
        %3192 = vmatprep.mubr.f32.mxu0 0.0
        %3193 = vmatmul.mubr.f32.gmra.mrb[0].mxu0 %v3104
        %v3194 = vpop.f32.mrb[0].mxu0
        %v3195 = vadd.f32 %v3095, %v3194
        %v3196 = vpop.f32.mrb[0].mxu0
        %3197 = vmatprep.mubr.f32.mxu0 0.0
        %3198 = vmatmul.mubr.f32.gmra.mrb[0].mxu0 %v3107
        %v3199 = vpop.f32.mrb[0].mxu0
        %v3200 = vadd.f32 %v3095, %v3199
        %v3201 = vpop.f32.mrb[0].mxu0
        %3202 = vmatprep.mubr.f32.mxu0 0.0
        %3203 = vmatmul.mubr.f32.gmra.mrb[0].mxu0 %v3110
        %v3204 = vpop.f32.mrb[0].mxu0
        %v3205 = vadd.f32 %v3095, %v3204
        %v3206 = vpop.f32.mrb[0].mxu0
        %3207 = vmatprep.mubr.f32.mxu0 0.0
        %3208 = vmatmul.mubr.f32.gmra.mrb[0].mxu0 %v3113
        %v3209 = vpop.f32.mrb[0].mxu0
        %v3210 = vadd.f32 %v3095, %v3209
        %v3211 = vpop.f32.mrb[0].mxu0
        %3212 = vmatprep.mubr.f32.mxu0 0.0
        %3213 = vmatmul.mubr.f32.gmra.mrb[0].mxu0 %v3116
        %v3214 = vpop.f32.mrb[0].mxu0
        %v3215 = vadd.f32 %v3095, %v3214
        %v3216 = vpop.f32.mrb[0].mxu0
        %3217 = vdwg.mxu0
        %v3218 = vmul.f32 %v3185, 0.5
        %v3219 = vmul.f32 %v3190, 0.5
        %v3220 = vmul.f32 %v3195, 0.5
        %v3221 = vmul.f32 %v3200, 0.5
        %v3222 = vmul.f32 %v3205, 0.5
        %v3223 = vmul.f32 %v3210, 0.5
        %v3224 = vmul.f32 %v3215, 0.5
        %v3225 = vtanh.pop %v3218
        %v3226 = vtanh.pop %v3219
        %v3227 = vtanh.pop %v3220
        %v3228 = vtanh.pop %v3221
        %v3229 = vtanh.pop %v3222
        %v3230 = vtanh.pop %v3223
        %v3231 = vtanh.pop %v3224
        %v3232 = vadd.f32 %v3225, 1.0
        %v3233 = vadd.f32 %v3226, 1.0
        %v3234 = vadd.f32 %v3227, 1.0
        %v3235 = vadd.f32 %v3228, 1.0
        %v3236 = vadd.f32 %v3229, 1.0
        %v3237 = vadd.f32 %v3230, 1.0
        %v3238 = vadd.f32 %v3231, 1.0
        %v3239 = vmul.f32 %v3218, %v3232
        %v3240 = vmul.f32 %v3219, %v3233
        %v3241 = vmul.f32 %v3220, %v3234
        %v3242 = vmul.f32 %v3221, %v3235
        %v3243 = vmul.f32 %v3222, %v3236
        %v3244 = vmul.f32 %v3223, %v3237
        %v3245 = vmul.f32 %v3224, %v3238
        %3246 = vmatprep.subr.mxu0 0.0
        %3247 = vmatpush1.msra.mxu0 %v3239
        %3248 = vmatprep.subr.mxu0 0.0
        %3249 = vmatpush1.msra.mxu0 %v3240
        %3250 = vmatprep.subr.mxu0 0.0
        %3251 = vmatpush1.msra.mxu0 %v3241
        %3252 = vmatprep.subr.mxu0 0.0
        %3253 = vmatpush1.msra.mxu0 %v3242
        %3254 = vmatprep.subr.mxu0 0.0
        %3255 = vmatpush1.msra.mxu0 %v3243
        %3256 = vmatprep.subr.mxu0 0.0
        %3257 = vmatpush1.msra.mxu0 %v3244
        %3258 = vmatprep.subr.mxu0 0.0
        %3259 = vmatpush1.msra.mxu0 %v3245
        %3260 = vmatprep.subr.mxu0 0.0
        %3261 = vmatpush1.msra.mxu0 0.0
        %3262 = vmatprep.subr.mxu0 0.0
        %3263 = vmatpush1.msra.mxu0 0.0
        %3264 = vmatprep.subr.mxu0 0.0
        %3265 = vmatpush1.msra.mxu0 0.0
        %3266 = vmatprep.subr.mxu0 0.0
        %3267 = vmatpush1.msra.mxu0 0.0
        %3268 = vmatprep.subr.mxu0 0.0
        %3269 = vmatpush1.msra.mxu0 0.0
        %3270 = vmatprep.subr.mxu0 0.0
        %3271 = vmatpush1.msra.mxu0 0.0
        %3272 = vmatprep.subr.mxu0 0.0
        %3273 = vmatpush1.msra.mxu0 0.0
        %3274 = vmatprep.subr.mxu0 0.0
        %3275 = vmatpush1.msra.mxu0 0.0
        %3276 = vmatprep.subr.mxu0 0.0
        %3277 = vmatpush1.msra.mxu0 0.0
        %3278 = vmatprep.subr.mxu0 0.0
        %3279 = vmatpush1.msra.mxu0 0.0
        %3280 = vmatprep.subr.mxu0 0.0
        %3281 = vmatpush1.msra.mxu0 0.0
        %3282 = vmatprep.subr.mxu0 0.0
        %3283 = vmatpush1.msra.mxu0 0.0
        %3284 = vmatprep.subr.mxu0 0.0
        %3285 = vmatpush1.msra.mxu0 0.0
        %3286 = vmatprep.subr.mxu0 0.0
        %3287 = vmatpush1.msra.mxu0 0.0
        %3288 = vmatprep.subr.mxu0 0.0
        %3289 = vmatpush1.msra.mxu0 0.0
        %3290 = vmatprep.subr.mxu0 0.0
        %3291 = vmatpush1.msra.mxu0 0.0
        %3292 = vmatprep.subr.mxu0 0.0
        %3293 = vmatpush1.msra.mxu0 0.0
        %3294 = vmatprep.subr.mxu0 0.0
        %3295 = vmatpush1.msra.mxu0 0.0
        %3296 = vmatprep.subr.mxu0 0.0
        %3297 = vmatpush1.msra.mxu0 0.0
        %3298 = vmatprep.subr.mxu0 0.0
        %3299 = vmatpush1.msra.mxu0 0.0
        %3300 = vmatprep.subr.mxu0 0.0
        %3301 = vmatpush1.msra.mxu0 0.0
        %3302 = vmatprep.subr.mxu0 0.0
        %3303 = vmatpush1.msra.mxu0 0.0
        %3304 = vmatprep.subr.mxu0 0.0
        %3305 = vmatpush1.msra.mxu0 0.0
        %3306 = vmatprep.subr.mxu0 0.0
        %3307 = vmatpush1.msra.mxu0 0.0
        %3308 = vmatprep.subr.mxu0 0.0
        %3309 = vmatpush1.msra.mxu0 0.0
        %3310 = vmatprep.mubr.f32.mxu0 0.0
        %3311 = vmatmul.mubr.f32.gmra.mrb[0].mxu0 %v1327
        %v3312 = vpop.f32.mrb[0].mxu0
        %v3313 = vadd.f32 0.0, %v3312
        %v3314 = vpop.f32.mrb[0].mxu0
        %3315 = vdwg.mxu0
        %3317 = vrot.lane.b32.xlu0 %v3313, 32
        %v3318 = vpop.permute.xlu0 %3317
        %v3320 = vsel %vm925, %v2858, %v3318
        %s3321 = scalar_lea.vmem %s12, 192
        %v3322 = vld [vmem:[%s3321] sm:$0xff]
        %v3323 = vld [vmem:[%s3321 + $0x8] sm:$0xff]
        %v3324 = vld [vmem:[%s3321 + $0x10] sm:$0xff]
        %v3325 = vld [vmem:[%s3321 + $0x18] sm:$0xff]
        %v3326 = vld [vmem:[%s3321 + $0x20] sm:$0xff]
        %v3327 = vld [vmem:[%s3321 + $0x28] sm:$0xff]
        %v3328 = vld [vmem:[%s3321 + $0x30] sm:$0xff]
        %v3329 = vld [vmem:[%s3321 + $0x38] sm:$0xff]
        %s3330 = scalar_lea.vmem %s13, 3
        %v3331 = vld [vmem:[%s3330] sm:$0x1]
        %v3333 = vlaneseq
        %v3334 = vshrl.u32 %v3333, 7
        %v3335 = vsub.s32 0, %v3334
        %v3336 = vrot.slane %v3331, %v3335
        %v3339 = vsel %vm1419, %v3320, 0
        %3341 = vmatprep.subr.mxu0 0.0
        %3342 = vmatpush1.msra.mxu0 %v3322
        %3343 = vmatprep.subr.mxu0 0.0
        %3344 = vmatpush1.msra.mxu0 %v3323
        %3345 = vmatprep.subr.mxu0 0.0
        %3346 = vmatpush1.msra.mxu0 %v3324
        %3347 = vmatprep.subr.mxu0 0.0
        %3348 = vmatpush1.msra.mxu0 %v3325
        %3349 = vmatprep.subr.mxu0 0.0
        %3350 = vmatpush1.msra.mxu0 %v3326
        %3351 = vmatprep.subr.mxu0 0.0
        %3352 = vmatpush1.msra.mxu0 %v3327
        %3353 = vmatprep.subr.mxu0 0.0
        %3354 = vmatpush1.msra.mxu0 %v3328
        %3355 = vmatprep.subr.mxu0 0.0
        %3356 = vmatpush1.msra.mxu0 %v3329
        %3357 = vmatprep.subr.mxu0 0.0
        %3358 = vmatpush1.msra.mxu0 0.0
        %3359 = vmatprep.subr.mxu0 0.0
        %3360 = vmatpush1.msra.mxu0 0.0
        %3361 = vmatprep.subr.mxu0 0.0
        %3362 = vmatpush1.msra.mxu0 0.0
        %3363 = vmatprep.subr.mxu0 0.0
        %3364 = vmatpush1.msra.mxu0 0.0
        %3365 = vmatprep.subr.mxu0 0.0
        %3366 = vmatpush1.msra.mxu0 0.0
        %3367 = vmatprep.subr.mxu0 0.0
        %3368 = vmatpush1.msra.mxu0 0.0
        %3369 = vmatprep.subr.mxu0 0.0
        %3370 = vmatpush1.msra.mxu0 0.0
        %3371 = vmatprep.subr.mxu0 0.0
        %3372 = vmatpush1.msra.mxu0 0.0
        %3373 = vmatprep.subr.mxu0 0.0
        %3374 = vmatpush1.msra.mxu0 0.0
        %3375 = vmatprep.subr.mxu0 0.0
        %3376 = vmatpush1.msra.mxu0 0.0
        %3377 = vmatprep.subr.mxu0 0.0
        %3378 = vmatpush1.msra.mxu0 0.0
        %3379 = vmatprep.subr.mxu0 0.0
        %3380 = vmatpush1.msra.mxu0 0.0
        %3381 = vmatprep.subr.mxu0 0.0
        %3382 = vmatpush1.msra.mxu0 0.0
        %3383 = vmatprep.subr.mxu0 0.0
        %3384 = vmatpush1.msra.mxu0 0.0
        %3385 = vmatprep.subr.mxu0 0.0
        %3386 = vmatpush1.msra.mxu0 0.0
        %3387 = vmatprep.subr.mxu0 0.0
        %3388 = vmatpush1.msra.mxu0 0.0
        %3389 = vmatprep.subr.mxu0 0.0
        %3390 = vmatpush1.msra.mxu0 0.0
        %3391 = vmatprep.subr.mxu0 0.0
        %3392 = vmatpush1.msra.mxu0 0.0
        %3393 = vmatprep.subr.mxu0 0.0
        %3394 = vmatpush1.msra.mxu0 0.0
        %3395 = vmatprep.subr.mxu0 0.0
        %3396 = vmatpush1.msra.mxu0 0.0
        %3397 = vmatprep.subr.mxu0 0.0
        %3398 = vmatpush1.msra.mxu0 0.0
        %3399 = vmatprep.subr.mxu0 0.0
        %3400 = vmatpush1.msra.mxu0 0.0
        %3401 = vmatprep.subr.mxu0 0.0
        %3402 = vmatpush1.msra.mxu0 0.0
        %3403 = vmatprep.subr.mxu0 0.0
        %3404 = vmatpush1.msra.mxu0 0.0
        %3405 = vmatprep.mubr.f32.mxu0 0.0
        %3406 = vmatmul.mubr.f32.gmra.mrb[0].mxu0 %v3339
        %v3407 = vpop.f32.mrb[0].mxu0
        %v3408 = vadd.f32 %v3336, %v3407
        %v3409 = vpop.f32.mrb[0].mxu0
        %3410 = vdwg.mxu0
        %v3411 = vmul.f32 %v3408, 0.5
        %v3412 = vtanh.pop %v3411
        %v3413 = vadd.f32 %v3412, 1.0
        %v3414 = vmul.f32 %v3411, %v3413
        %s3415 = scalar_lea.vmem %s14, 96
        %v3416 = vld [vmem:[%s3415] sm:$0xff]
        %v3417 = vld [vmem:[%s3415 + $0x8] sm:$0xff]
        %v3418 = vld [vmem:[%s3415 + $0x10] sm:$0xff]
        %v3419 = vld [vmem:[%s3415 + $0x18] sm:$0xff]
        %s3420 = scalar_lea.vmem %s15, 3
        %v3421 = vld [vmem:[%s3420] sm:$0x1]
        %v3423 = vlaneseq
        %v3424 = vshrl.u32 %v3423, 7
        %v3425 = vsub.s32 0, %v3424
        %v3426 = vrot.slane %v3421, %v3425
        %v3429 = vsel %vm925, %v3414, 0
        %3431 = vmatprep.subr.mxu0 0.0
        %3432 = vmatpush1.msra.mxu0 %v3416
        %3433 = vmatprep.subr.mxu0 0.0
        %3434 = vmatpush1.msra.mxu0 %v3417
        %3435 = vmatprep.subr.mxu0 0.0
        %3436 = vmatpush1.msra.mxu0 %v3418
        %3437 = vmatprep.subr.mxu0 0.0
        %3438 = vmatpush1.msra.mxu0 %v3419
        %3439 = vmatprep.subr.mxu0 0.0
        %3440 = vmatpush1.msra.mxu0 0.0
        %3441 = vmatprep.subr.mxu0 0.0
        %3442 = vmatpush1.msra.mxu0 0.0
        %3443 = vmatprep.subr.mxu0 0.0
        %3444 = vmatpush1.msra.mxu0 0.0
        %3445 = vmatprep.subr.mxu0 0.0
        %3446 = vmatpush1.msra.mxu0 0.0
        %3447 = vmatprep.subr.mxu0 0.0
        %3448 = vmatpush1.msra.mxu0 0.0
        %3449 = vmatprep.subr.mxu0 0.0
        %3450 = vmatpush1.msra.mxu0 0.0
        %3451 = vmatprep.subr.mxu0 0.0
        %3452 = vmatpush1.msra.mxu0 0.0
        %3453 = vmatprep.subr.mxu0 0.0
        %3454 = vmatpush1.msra.mxu0 0.0
        %3455 = vmatprep.subr.mxu0 0.0
        %3456 = vmatpush1.msra.mxu0 0.0
        %3457 = vmatprep.subr.mxu0 0.0
        %3458 = vmatpush1.msra.mxu0 0.0
        %3459 = vmatprep.subr.mxu0 0.0
        %3460 = vmatpush1.msra.mxu0 0.0
        %3461 = vmatprep.subr.mxu0 0.0
        %3462 = vmatpush1.msra.mxu0 0.0
        %3463 = vmatprep.subr.mxu0 0.0
        %3464 = vmatpush1.msra.mxu0 0.0
        %3465 = vmatprep.subr.mxu0 0.0
        %3466 = vmatpush1.msra.mxu0 0.0
        %3467 = vmatprep.subr.mxu0 0.0
        %3468 = vmatpush1.msra.mxu0 0.0
        %3469 = vmatprep.subr.mxu0 0.0
        %3470 = vmatpush1.msra.mxu0 0.0
        %3471 = vmatprep.subr.mxu0 0.0
        %3472 = vmatpush1.msra.mxu0 0.0
        %3473 = vmatprep.subr.mxu0 0.0
        %3474 = vmatpush1.msra.mxu0 0.0
        %3475 = vmatprep.subr.mxu0 0.0
        %3476 = vmatpush1.msra.mxu0 0.0
        %3477 = vmatprep.subr.mxu0 0.0
        %3478 = vmatpush1.msra.mxu0 0.0
        %3479 = vmatprep.subr.mxu0 0.0
        %3480 = vmatpush1.msra.mxu0 0.0
        %3481 = vmatprep.subr.mxu0 0.0
        %3482 = vmatpush1.msra.mxu0 0.0
        %3483 = vmatprep.subr.mxu0 0.0
        %3484 = vmatpush1.msra.mxu0 0.0
        %3485 = vmatprep.subr.mxu0 0.0
        %3486 = vmatpush1.msra.mxu0 0.0
        %3487 = vmatprep.subr.mxu0 0.0
        %3488 = vmatpush1.msra.mxu0 0.0
        %3489 = vmatprep.subr.mxu0 0.0
        %3490 = vmatpush1.msra.mxu0 0.0
        %3491 = vmatprep.subr.mxu0 0.0
        %3492 = vmatpush1.msra.mxu0 0.0
        %3493 = vmatprep.subr.mxu0 0.0
        %3494 = vmatpush1.msra.mxu0 0.0
        %3495 = vmatprep.mubr.f32.mxu0 0.0
        %3496 = vmatmul.mubr.f32.gmra.mrb[0].mxu0 %v3429
        %v3497 = vpop.f32.mrb[0].mxu0
        %v3498 = vadd.f32 %v3426, %v3497
        %v3499 = vpop.f32.mrb[0].mxu0
        %3500 = vdwg.mxu0
        %v3501 = vld [vmem:[%s16] sm:$0xff]
        %v3502 = vld [vmem:[%s16 + $0x8] sm:$0xff]
        %v3503 = vld [vmem:[%s16 + $0x10] sm:$0xff]
        %v3504 = vld [vmem:[%s16 + $0x18] sm:$0xff]
        %v3505 = vld [vmem:[%s17] sm:$0x1]
        %v3507 = vlaneseq
        %v3508 = vshrl.u32 %v3507, 7
        %v3509 = vsub.s32 0, %v3508
        %v3510 = vrot.slane %v3505, %v3509
        %v3513 = vsel %vm925, %v3498, 0
        %3515 = vmatprep.subr.mxu0 0.0
        %3516 = vmatpush1.msra.mxu0 %v3501
        %3517 = vmatprep.subr.mxu0 0.0
        %3518 = vmatpush1.msra.mxu0 %v3502
        %3519 = vmatprep.subr.mxu0 0.0
        %3520 = vmatpush1.msra.mxu0 %v3503
        %3521 = vmatprep.subr.mxu0 0.0
        %3522 = vmatpush1.msra.mxu0 %v3504
        %3523 = vmatprep.subr.mxu0 0.0
        %3524 = vmatpush1.msra.mxu0 0.0
        %3525 = vmatprep.subr.mxu0 0.0
        %3526 = vmatpush1.msra.mxu0 0.0
        %3527 = vmatprep.subr.mxu0 0.0
        %3528 = vmatpush1.msra.mxu0 0.0
        %3529 = vmatprep.subr.mxu0 0.0
        %3530 = vmatpush1.msra.mxu0 0.0
        %3531 = vmatprep.subr.mxu0 0.0
        %3532 = vmatpush1.msra.mxu0 0.0
        %3533 = vmatprep.subr.mxu0 0.0
        %3534 = vmatpush1.msra.mxu0 0.0
        %3535 = vmatprep.subr.mxu0 0.0
        %3536 = vmatpush1.msra.mxu0 0.0
        %3537 = vmatprep.subr.mxu0 0.0
        %3538 = vmatpush1.msra.mxu0 0.0
        %3539 = vmatprep.subr.mxu0 0.0
        %3540 = vmatpush1.msra.mxu0 0.0
        %3541 = vmatprep.subr.mxu0 0.0
        %3542 = vmatpush1.msra.mxu0 0.0
        %3543 = vmatprep.subr.mxu0 0.0
        %3544 = vmatpush1.msra.mxu0 0.0
        %3545 = vmatprep.subr.mxu0 0.0
        %3546 = vmatpush1.msra.mxu0 0.0
        %3547 = vmatprep.subr.mxu0 0.0
        %3548 = vmatpush1.msra.mxu0 0.0
        %3549 = vmatprep.subr.mxu0 0.0
        %3550 = vmatpush1.msra.mxu0 0.0
        %3551 = vmatprep.subr.mxu0 0.0
        %3552 = vmatpush1.msra.mxu0 0.0
        %3553 = vmatprep.subr.mxu0 0.0
        %3554 = vmatpush1.msra.mxu0 0.0
        %3555 = vmatprep.subr.mxu0 0.0
        %3556 = vmatpush1.msra.mxu0 0.0
        %3557 = vmatprep.subr.mxu0 0.0
        %3558 = vmatpush1.msra.mxu0 0.0
        %3559 = vmatprep.subr.mxu0 0.0
        %3560 = vmatpush1.msra.mxu0 0.0
        %3561 = vmatprep.subr.mxu0 0.0
        %3562 = vmatpush1.msra.mxu0 0.0
        %3563 = vmatprep.subr.mxu0 0.0
        %3564 = vmatpush1.msra.mxu0 0.0
        %3565 = vmatprep.subr.mxu0 0.0
        %3566 = vmatpush1.msra.mxu0 0.0
        %3567 = vmatprep.subr.mxu0 0.0
        %3568 = vmatpush1.msra.mxu0 0.0
        %3569 = vmatprep.subr.mxu0 0.0
        %3570 = vmatpush1.msra.mxu0 0.0
        %3571 = vmatprep.subr.mxu0 0.0
        %3572 = vmatpush1.msra.mxu0 0.0
        %3573 = vmatprep.subr.mxu0 0.0
        %3574 = vmatpush1.msra.mxu0 0.0
        %3575 = vmatprep.subr.mxu0 0.0
        %3576 = vmatpush1.msra.mxu0 0.0
        %3577 = vmatprep.subr.mxu0 0.0
        %3578 = vmatpush1.msra.mxu0 0.0
        %3579 = vmatprep.mubr.f32.mxu0 0.0
        %3580 = vmatmul.mubr.f32.gmra.mrb[0].mxu0 %v3513
        %v3581 = vpop.f32.mrb[0].mxu0
        %v3582 = vadd.f32 %v3510, %v3581
        %v3583 = vpop.f32.mrb[0].mxu0
        %3584 = vdwg.mxu0
        %v3585 = vmul.f32 %v3582, 0.5
        %v3586 = vtanh.pop %v3585
        %v3587 = vadd.f32 %v3586, 1.0
        %v3588 = vmul.f32 %v3585, %v3587
        %v3589 = vld [vmem:[%s18] sm:$0xff]
        %v3590 = vld [vmem:[%s18 + $0x8] sm:$0xff]
        %v3591 = vld [vmem:[%s18 + $0x10] sm:$0xff]
        %v3592 = vld [vmem:[%s18 + $0x18] sm:$0xff]
        %v3593 = vld [vmem:[%s19] sm:$0x1]
        %v3595 = vlaneseq
        %v3596 = vshrl.u32 %v3595, 7
        %v3597 = vsub.s32 0, %v3596
        %v3598 = vrot.slane %v3593, %v3597
        %v3601 = vsel %vm925, %v3588, 0
        %3603 = vmatprep.subr.mxu0 0.0
        %3604 = vmatpush1.msra.mxu0 %v3589
        %3605 = vmatprep.subr.mxu0 0.0
        %3606 = vmatpush1.msra.mxu0 %v3590
        %3607 = vmatprep.subr.mxu0 0.0
        %3608 = vmatpush1.msra.mxu0 %v3591
        %3609 = vmatprep.subr.mxu0 0.0
        %3610 = vmatpush1.msra.mxu0 %v3592
        %3611 = vmatprep.subr.mxu0 0.0
        %3612 = vmatpush1.msra.mxu0 0.0
        %3613 = vmatprep.subr.mxu0 0.0
        %3614 = vmatpush1.msra.mxu0 0.0
        %3615 = vmatprep.subr.mxu0 0.0
        %3616 = vmatpush1.msra.mxu0 0.0
        %3617 = vmatprep.subr.mxu0 0.0
        %3618 = vmatpush1.msra.mxu0 0.0
        %3619 = vmatprep.subr.mxu0 0.0
        %3620 = vmatpush1.msra.mxu0 0.0
        %3621 = vmatprep.subr.mxu0 0.0
        %3622 = vmatpush1.msra.mxu0 0.0
        %3623 = vmatprep.subr.mxu0 0.0
        %3624 = vmatpush1.msra.mxu0 0.0
        %3625 = vmatprep.subr.mxu0 0.0
        %3626 = vmatpush1.msra.mxu0 0.0
        %3627 = vmatprep.subr.mxu0 0.0
        %3628 = vmatpush1.msra.mxu0 0.0
        %3629 = vmatprep.subr.mxu0 0.0
        %3630 = vmatpush1.msra.mxu0 0.0
        %3631 = vmatprep.subr.mxu0 0.0
        %3632 = vmatpush1.msra.mxu0 0.0
        %3633 = vmatprep.subr.mxu0 0.0
        %3634 = vmatpush1.msra.mxu0 0.0
        %3635 = vmatprep.subr.mxu0 0.0
        %3636 = vmatpush1.msra.mxu0 0.0
        %3637 = vmatprep.subr.mxu0 0.0
        %3638 = vmatpush1.msra.mxu0 0.0
        %3639 = vmatprep.subr.mxu0 0.0
        %3640 = vmatpush1.msra.mxu0 0.0
        %3641 = vmatprep.subr.mxu0 0.0
        %3642 = vmatpush1.msra.mxu0 0.0
        %3643 = vmatprep.subr.mxu0 0.0
        %3644 = vmatpush1.msra.mxu0 0.0
        %3645 = vmatprep.subr.mxu0 0.0
        %3646 = vmatpush1.msra.mxu0 0.0
        %3647 = vmatprep.subr.mxu0 0.0
        %3648 = vmatpush1.msra.mxu0 0.0
        %3649 = vmatprep.subr.mxu0 0.0
        %3650 = vmatpush1.msra.mxu0 0.0
        %3651 = vmatprep.subr.mxu0 0.0
        %3652 = vmatpush1.msra.mxu0 0.0
        %3653 = vmatprep.subr.mxu0 0.0
        %3654 = vmatpush1.msra.mxu0 0.0
        %3655 = vmatprep.subr.mxu0 0.0
        %3656 = vmatpush1.msra.mxu0 0.0
        %3657 = vmatprep.subr.mxu0 0.0
        %3658 = vmatpush1.msra.mxu0 0.0
        %3659 = vmatprep.subr.mxu0 0.0
        %3660 = vmatpush1.msra.mxu0 0.0
        %3661 = vmatprep.subr.mxu0 0.0
        %3662 = vmatpush1.msra.mxu0 0.0
        %3663 = vmatprep.subr.mxu0 0.0
        %3664 = vmatpush1.msra.mxu0 0.0
        %3665 = vmatprep.subr.mxu0 0.0
        %3666 = vmatpush1.msra.mxu0 0.0
        %3667 = vmatprep.mubr.f32.mxu0 0.0
        %3668 = vmatmul.mubr.f32.gmra.mrb[0].mxu0 %v3601
        %v3669 = vpop.f32.mrb[0].mxu0
        %v3670 = vadd.f32 %v3598, %v3669
        %v3671 = vpop.f32.mrb[0].mxu0
        %3672 = vdwg.mxu0
        %3673 = vst [vmem:[%s635] sm:$0xff] %v3670
        %s3674 = sand.u32 %s472, 1
        %s3675 = scalar_lea.sflag [#allocation3], %s3674
        %s3676 = sand.u32 %s472, 1
        %s3677 = smul.addr %s3676, 8
        %s3678 = scalar_lea.vmem [#allocation2], %s3677
        // Predicated region
        $region101: #{tpu_custom_call.1} parent=99 // pred_check
          %p3679 = pneg %p482
        $region102: #{tpu_custom_call.1} parent=99 // pred_check_branch
          %3681 = sbr.rel (%p3679) target = $region104
        $region103: #{tpu_custom_call.1} parent=99 // pred_region
          %s3683 = ssub.s32 128, 128
          %3684 = vsyncadd %s3675, %s3683
          %s3685 = smul.addr %s34, 128
          %s3686 = scalar_lea.hbm %s20, %s3685
          %s3688 = sshll.u32 %s3678, 4
          %s3689 = int_to_ptr.vmem [resolvable:$true] %s3688
          %3691 = dma.vmem_to_hbm [thread:$0]  %s3689, 128, %s3686, %s3675
        $region104: #{tpu_custom_call.1} parent=99 // pred_fallthru
          _
      $region100: #{tpu_custom_call.1} parent=5 // pred_fallthru
        _
      %p3692 = scmp.le.s32.totalorder 2, %s29
      // Predicated region
      $region105: #{tpu_custom_call.1} parent=5 // pred_check
        %p3693 = pneg %p3692
      $region106: #{tpu_custom_call.1} parent=5 // pred_check_branch
        %3695 = sbr.rel (%p3693) target = $region108
      $region107: #{tpu_custom_call.1} parent=5 // pred_region
        %s3696 = ssub.s32 %s29, 2
        // Predicated region
        $region109: #{tpu_custom_call.1} parent=107 // pred_check
          %p3697 = pneg %p488
        $region110: #{tpu_custom_call.1} parent=107 // pred_check_branch
          %3699 = sbr.rel (%p3697) target = $region112
        $region111: #{tpu_custom_call.1} parent=107 // pred_region
          %s3700 = sand.u32 %s473, 1
          %s3701 = scalar_lea.sflag [#allocation3], %s3700
          %s3702 = sand.u32 %s473, 1
          %s3703 = smul.addr %s3702, 8
          %s3704 = scalar_lea.vmem [#allocation2], %s3703
          %3705 = dma.done %s3701, 128
        $region112: #{tpu_custom_call.1} parent=107 // pred_fallthru
          _
      $region108: #{tpu_custom_call.1} parent=5 // pred_fallthru
        _
    $region6: #{tpu_custom_call.1} parent=1 // loop_footer
      %s33 = sadd.s32 1, %s29
    $region7: #{tpu_custom_call.1} parent=1 // loop_footer_branch
      %28 = sbr.rel target = $region3
    $region8: #{tpu_custom_call.1} parent=1 // loop_exit
      _
    %3706 = vsyncpa [#allocation3], 1
    %s3707 = scalar_lea.sflag [#allocation3], 1
    %3708 = vsyncpa %s3707, 1

</llo_original>
